<compile_context>
chip_gen: v6e
topology: v6e:2x2x1
jax: 0.10.0
libtpu: 0.0.40
codegen_flags: <defaults>
</compile_context>

<pallas_src>
import functools

import jax
import jax.numpy as jnp
from jax import lax
from jax.experimental import pallas as pl
from jax.experimental.pallas import tpu as pltpu


def stacked_attention_kernel(x_ref,
                             w1t_ref, s1_ref, b1_ref,
                             w2t_ref, s2_ref, b2_ref,
                             wqkv_ref, bqv_ref,
                             wt_ref, bt_ref, bns_ref, bnb_ref,
                             o_ref, *, cqp, exp_dtype):
    bf16, f32 = jnp.bfloat16, jnp.float32
    xb0 = x_ref[0]                                  # (N, Cp) bf16, current batch
    cp = xb0.shape[-1]

    # conv1 -> bn1 (folded affine) -> relu
    h = jnp.dot(xb0, w1t_ref[...], preferred_element_type=f32)
    x = jnp.maximum(h * s1_ref[...] + b1_ref[...], 0.0)
    # conv2 -> bn2 -> relu
    h = jnp.dot(x.astype(bf16), w2t_ref[...], preferred_element_type=f32)
    x = jnp.maximum(h * s2_ref[...] + b2_ref[...], 0.0)

    for i in range(4):                              # 4 SA layers (unrolled)
        xb = x.astype(bf16)

        # Fused q/k + v projection: one lane-dense MXU matmul per layer.
        hqv = jnp.dot(xb, wqkv_ref[i], preferred_element_type=f32) + bqv_ref[i]
        xq = hqv[:, :cqp].astype(bf16)              # shared q/k proj (bias-free)
        xv = hqv[:, cqp:].astype(bf16)              # v proj (bias already added)

        # energy = xq @ xq^T (symmetric: q/k share bias-free weights).
        energy = lax.dot_general(xq, xq, (((1,), (1,)), ((), ())),
                                 preferred_element_type=f32)        # (N, N) f32

        # A^T = softmax(energy, axis=0) == softmax(energy, -1)^T (symmetry).
        m = jnp.max(energy, axis=0, keepdims=True)                  # (1, N) f32
        e = jnp.exp((energy - m).astype(exp_dtype))                 # (N, N)
        cs = jnp.sum(e.astype(f32), axis=0, keepdims=True)          # (1, N) f32
        cinv = pl.reciprocal(cs, approx=True)                       # (1, N) f32
        aT = e * cinv.astype(e.dtype)                               # A^T
        # PyTorch renorm  attn = A / (1e-9 + colsum(A)):  its reciprocal is a
        # per-row scale of A^T, folded into the (N, Cp) matmul result instead
        # of rescaling the whole N x N matrix.
        rs = jnp.sum(aT.astype(f32), axis=-1, keepdims=True)        # (N, 1) f32
        rinv = pl.reciprocal(1e-9 + rs, approx=True)                # (N, 1) f32

        # x_r = x_v @ attention (channel-first)  ==  attn^T @ x_v (channel-last)
        x_r = rinv * jnp.dot(aT.astype(bf16), xv,
                             preferred_element_type=f32)            # (N, Cp) f32

        # trans_conv(x - x_r) -> after_norm (folded) -> relu ; residual add
        d = (x - x_r).astype(bf16)
        t = jnp.dot(d, wt_ref[i], preferred_element_type=f32) + bt_ref[i]
        x = x + jnp.maximum(t * bns_ref[i] + bnb_ref[i], 0.0)

        # Lane-dense per-layer store (cp is always a multiple of 128).
        o_ref[0, :, i * cp:(i + 1) * cp] = x


def _round_up(v, m):
    return ((v + m - 1) // m) * m


def _pad_last(a, *targets):
    """Zero-pad the trailing len(targets) axes of `a` up to `targets`."""
    k = len(targets)
    pads = [(0, 0)] * (a.ndim - k) + [
        (0, t - s) for s, t in zip(a.shape[-k:], targets)]
    return jnp.pad(a, pads)


def _softmax_exp_dtype():
    """bf16 EUP/VPU path exists on v6e/v7x; keep f32 on v5e and older."""
    try:
        kind = jax.devices()[0].device_kind.lower()
    except Exception:
        kind = ""
    if ("v6" in kind) or ("v7" in kind) or ("7x" in kind):
        return jnp.bfloat16
    return jnp.float32


def _vmem_limit_bytes():
    # Explicit scoped-VMEM budget (defaults are only 16 MiB v5e / 32 MiB v6e/v7x).
    try:
        cap = pltpu.get_tpu_info().vmem_capacity_bytes
    except Exception:
        cap = 128 * 1024 * 1024
    return int(min(cap * 3 // 4, 100 * 1024 * 1024))


def stacked_attention(x_bcn, p):
    """x_bcn: (B, C, N) float32  ->  (B, 4*C, N) float32."""
    B, C, N = x_bcn.shape
    assert C % 4 == 0
    bf16, f32 = jnp.bfloat16, jnp.float32
    Cq = C // 4
    Cp = _round_up(C, 128)        # lane-dense channel width
    Cqp = _round_up(Cq, 128)      # lane-dense q/k width
    exp_dtype = _softmax_exp_dtype()

    # Channel-last + zero-pad channels so all matmul operands and stores are
    # lane-dense.  Input already goes to the MXU in bf16, so cast here too
    # (halves input HBM/DMA traffic; numerics identical to an in-kernel cast).
    x = _pad_last(jnp.transpose(x_bcn, (0, 2, 1)).astype(bf16), Cp)   # (B,N,Cp)

    # MXU weights in bf16; BN affines / biases stay f32 (elementwise path).
    w1t = _pad_last(p["w1t"], Cp, Cp).astype(bf16)
    w2t = _pad_last(p["w2t"], Cp, Cp).astype(bf16)
    s1, b1 = _pad_last(p["s1"], Cp), _pad_last(p["b1"], Cp)
    s2, b2 = _pad_last(p["s2"], Cp), _pad_last(p["b2"], Cp)

    # Fused q/k + v projection weight: one (Cp, Cqp+Cp) matmul per SA layer.
    wqk = _pad_last(p["wqk"], Cp, Cqp)                                # (4,Cp,Cqp)
    wv = _pad_last(p["wv"], Cp, Cp)                                   # (4,Cp,Cp)
    wqkv = jnp.concatenate([wqk, wv], axis=-1).astype(bf16)           # (4,Cp,Cqp+Cp)
    bqv = jnp.concatenate([jnp.zeros((4, 1, Cqp), f32),
                           _pad_last(p["bv"], Cp)], axis=-1)          # (4,1,Cqp+Cp)

    wt = _pad_last(p["wt"], Cp, Cp).astype(bf16)
    bt = _pad_last(p["bt"], Cp)
    bns = _pad_last(p["bns"], Cp)
    bnb = _pad_last(p["bnb"], Cp)

    ins = (x, w1t, s1, b1, w2t, s2, b2, wqkv, bqv, wt, bt, bns, bnb)

    def full_spec(a):
        nd = a.ndim
        return pl.BlockSpec(a.shape, lambda b, nd=nd: (0,) * nd)

    kernel = functools.partial(stacked_attention_kernel,
                               cqp=Cqp, exp_dtype=exp_dtype)

    out = pl.pallas_call(
        kernel,
        out_shape=jax.ShapeDtypeStruct((B, N, 4 * Cp), f32),
        grid_spec=pltpu.PrefetchScalarGridSpec(
            num_scalar_prefetch=0,
            grid=(B,),
            in_specs=[pl.BlockSpec((1, N, Cp), lambda b: (b, 0, 0))]
                     + [full_spec(a) for a in ins[1:]],
            out_specs=pl.BlockSpec((1, N, 4 * Cp), lambda b: (b, 0, 0)),
        ),
        compiler_params=pltpu.CompilerParams(
            dimension_semantics=("parallel",),       # B-grid -> megacore on v7x
            vmem_limit_bytes=_vmem_limit_bytes()),
    )(*ins)

    # Drop the channel padding per layer, then back to PyTorch NCW layout.
    out = out.reshape(B, N, 4, Cp)[..., :C].reshape(B, N, 4 * C)
    return jnp.transpose(out, (0, 2, 1))                              # (B, 4C, N)


def stacked_attention_ref(x_bcn, p):
    """Pure-JAX f32 reference mirroring the PyTorch forward exactly."""
    x = jnp.transpose(x_bcn, (0, 2, 1)).astype(jnp.float32)           # (B, N, C)
    x = jnp.maximum((x @ p["w1t"]) * p["s1"] + p["b1"], 0.0)
    x = jnp.maximum((x @ p["w2t"]) * p["s2"] + p["b2"], 0.0)
    outs = []
    for i in range(4):
        xq = x @ p["wqk"][i]                                          # (B, N, C//4)
        energy = jnp.einsum("bnc,bmc->bnm", xq, xq)                   # (B, N, N)
        attn = jax.nn.softmax(energy, axis=-1)
        attn = attn / (1e-9 + jnp.sum(attn, axis=1, keepdims=True))
        xv = x @ p["wv"][i] + p["bv"][i]
        x_r = jnp.einsum("bnm,bnc->bmc", attn, xv)                    # attn^T @ xv
        t = (x - x_r) @ p["wt"][i] + p["bt"][i]
        x = x + jnp.maximum(t * p["bns"][i] + p["bnb"][i], 0.0)
        outs.append(x)
    out = jnp.concatenate(outs, axis=-1)                              # (B, N, 4C)
    return jnp.transpose(out, (0, 2, 1))                              # (B, 4C, N)


def _fold_bn(gamma, beta, mean, var, eps=1e-5):
    scale = gamma / jnp.sqrt(var + eps)
    shift = beta - mean * scale
    return scale, shift


def init_params(key, C):
    """Deterministic synthetic parameters (no checkpoint load), stored in f32."""
    Cq = C // 4
    keys = jax.random.split(key, 32)
    it = iter(keys)

    def rnd(shape, scale=0.1):
        return jax.random.normal(next(it), shape, dtype=jnp.float32) * scale

    def bn_affine(shape):
        gamma = 1.0 + rnd(shape, 0.05)
        beta = rnd(shape, 0.05)
        mean = rnd(shape, 0.05)
        var = 1.0 + jnp.abs(rnd(shape, 0.05))
        return _fold_bn(gamma, beta, mean, var)

    p = {}
    # conv1/conv2 (bias=False) stored transposed: (C_in, C_out)
    p["w1t"] = rnd((C, C))
    p["w2t"] = rnd((C, C))
    p["s1"], p["b1"] = bn_affine((1, C))
    p["s2"], p["b2"] = bn_affine((1, C))

    # 4 SA layers, stacked along leading axis 4
    p["wqk"] = rnd((4, C, Cq))            # shared q/k weight, transposed
    p["wv"] = rnd((4, C, C))              # v_conv weight, transposed
    p["bv"] = rnd((4, 1, C))              # v_conv bias
    p["wt"] = rnd((4, C, C))              # trans_conv weight, transposed
    p["bt"] = rnd((4, 1, C))              # trans_conv bias
    s_list, b_list = [], []
    for _ in range(4):
        s, b = bn_affine((1, C))
        s_list.append(s)
        b_list.append(b)
    p["bns"] = jnp.stack(s_list)          # (4, 1, C)
    p["bnb"] = jnp.stack(b_list)          # (4, 1, C)
    return p


if __name__ == "__main__":
    B, C, N = 2, 32, 128                  # small shapes; C must be divisible by 4
    key = jax.random.PRNGKey(0)
    kx, kp = jax.random.split(key)
    x = jax.random.normal(kx, (B, C, N), dtype=jnp.float32)   # PyTorch NCW layout
    params = init_params(kp, C)

    out = stacked_attention(x, params)
    jax.block_until_ready(out)
    assert out.shape == (B, 4 * C, N), out.shape
    assert bool(jnp.all(jnp.isfinite(out)))

    # Correctness check against the f32 pure-JAX reference (bf16 MXU operands,
    # bf16 softmax path on v6e/v7x, and approximate EUP reciprocals introduce
    # only small error).
    ref = stacked_attention_ref(x, params)
    max_err = float(jnp.max(jnp.abs(out - ref)))
    assert max_err < 5e-2, f"max abs err vs reference: {max_err}"

    print("KERNEL_OK")
</pallas_src>

<mosaic_0001>
module attributes {stable_mosaic.version = 11 : i64} {
  func.func @stacked_attention_kernel(%arg0: i32, %arg1: memref<1x128x128xbf16, #tpu.memory_space<vmem>>, %arg2: memref<128x128xbf16, #tpu.memory_space<vmem>>, %arg3: memref<1x128xf32, #tpu.memory_space<vmem>>, %arg4: memref<1x128xf32, #tpu.memory_space<vmem>>, %arg5: memref<128x128xbf16, #tpu.memory_space<vmem>>, %arg6: memref<1x128xf32, #tpu.memory_space<vmem>>, %arg7: memref<1x128xf32, #tpu.memory_space<vmem>>, %arg8: memref<4x128x256xbf16, #tpu.memory_space<vmem>>, %arg9: memref<4x1x256xf32, #tpu.memory_space<vmem>>, %arg10: memref<4x128x128xbf16, #tpu.memory_space<vmem>>, %arg11: memref<4x1x128xf32, #tpu.memory_space<vmem>>, %arg12: memref<4x1x128xf32, #tpu.memory_space<vmem>>, %arg13: memref<4x1x128xf32, #tpu.memory_space<vmem>>, %arg14: memref<1x128x512xf32, #tpu.memory_space<vmem>>) attributes {dimension_semantics = [#tpu.dimension_semantics<parallel>], iteration_bounds = array<i64: 2>, scalar_prefetch = 0 : i64, scratch_operands = 0 : i64, tpu.core_type = #tpu.core_type<tc>, window_params = [{transform_indices = @transform_0, window_bounds = array<i64: 1, 128, 128>}, {pipeline_mode = #tpu.pipeline_mode<synchronous>, transform_indices = @transform_1, window_bounds = array<i64: 128, 128>}, {pipeline_mode = #tpu.pipeline_mode<synchronous>, transform_indices = @transform_2, window_bounds = array<i64: 1, 128>}, {pipeline_mode = #tpu.pipeline_mode<synchronous>, transform_indices = @transform_3, window_bounds = array<i64: 1, 128>}, {pipeline_mode = #tpu.pipeline_mode<synchronous>, transform_indices = @transform_4, window_bounds = array<i64: 128, 128>}, {pipeline_mode = #tpu.pipeline_mode<synchronous>, transform_indices = @transform_5, window_bounds = array<i64: 1, 128>}, {pipeline_mode = #tpu.pipeline_mode<synchronous>, transform_indices = @transform_6, window_bounds = array<i64: 1, 128>}, {pipeline_mode = #tpu.pipeline_mode<synchronous>, transform_indices = @transform_7, window_bounds = array<i64: 4, 128, 256>}, {pipeline_mode = #tpu.pipeline_mode<synchronous>, transform_indices = @transform_8, window_bounds = array<i64: 4, 1, 256>}, {pipeline_mode = #tpu.pipeline_mode<synchronous>, transform_indices = @transform_9, window_bounds = array<i64: 4, 128, 128>}, {pipeline_mode = #tpu.pipeline_mode<synchronous>, transform_indices = @transform_10, window_bounds = array<i64: 4, 1, 128>}, {pipeline_mode = #tpu.pipeline_mode<synchronous>, transform_indices = @transform_11, window_bounds = array<i64: 4, 1, 128>}, {pipeline_mode = #tpu.pipeline_mode<synchronous>, transform_indices = @transform_12, window_bounds = array<i64: 4, 1, 128>}, {transform_indices = @transform_13, window_bounds = array<i64: 1, 128, 512>}]} {
    %c0 = arith.constant 0 : index
    %c0_0 = arith.constant 0 : index
    %c0_1 = arith.constant 0 : index
    %0 = vector.load %arg1[%c0, %c0_0, %c0_1] : memref<1x128x128xbf16, #tpu.memory_space<vmem>>, vector<1x128x128xbf16>
    %1 = vector.shape_cast %0 : vector<1x128x128xbf16> to vector<128x128xbf16>
    %c0_2 = arith.constant 0 : index
    %c0_3 = arith.constant 0 : index
    %2 = vector.load %arg2[%c0_2, %c0_3] : memref<128x128xbf16, #tpu.memory_space<vmem>>, vector<128x128xbf16>
    %cst = arith.constant dense<0.000000e+00> : vector<128x128xf32>
    %3 = tpu.matmul %1, %2, %cst {dimension_numbers = #tpu.dot_dimension_numbers<[1], [0], [0], [1], [0, 0, 1, 1], [], []>} : vector<128x128xbf16>, vector<128x128xbf16>, vector<128x128xf32> -> vector<128x128xf32>
    %c0_4 = arith.constant 0 : index
    %c0_5 = arith.constant 0 : index
    %4 = vector.load %arg3[%c0_4, %c0_5] : memref<1x128xf32, #tpu.memory_space<vmem>>, vector<1x128xf32>
    %5 = vector.broadcast %4 : vector<1x128xf32> to vector<128x128xf32>
    %6 = arith.mulf %3, %5 : vector<128x128xf32>
    %c0_6 = arith.constant 0 : index
    %c0_7 = arith.constant 0 : index
    %7 = vector.load %arg4[%c0_6, %c0_7] : memref<1x128xf32, #tpu.memory_space<vmem>>, vector<1x128xf32>
    %8 = vector.broadcast %7 : vector<1x128xf32> to vector<128x128xf32>
    %9 = arith.addf %6, %8 : vector<128x128xf32>
    %cst_8 = arith.constant 0.000000e+00 : f32
    %10 = vector.broadcast %cst_8 : f32 to vector<128x128xf32>
    %11 = arith.maximumf %9, %10 : vector<128x128xf32>
    %12 = arith.truncf %11 : vector<128x128xf32> to vector<128x128xbf16>
    %c0_9 = arith.constant 0 : index
    %c0_10 = arith.constant 0 : index
    %13 = vector.load %arg5[%c0_9, %c0_10] : memref<128x128xbf16, #tpu.memory_space<vmem>>, vector<128x128xbf16>
    %cst_11 = arith.constant dense<0.000000e+00> : vector<128x128xf32>
    %14 = tpu.matmul %12, %13, %cst_11 {dimension_numbers = #tpu.dot_dimension_numbers<[1], [0], [0], [1], [0, 0, 1, 1], [], []>} : vector<128x128xbf16>, vector<128x128xbf16>, vector<128x128xf32> -> vector<128x128xf32>
    %c0_12 = arith.constant 0 : index
    %c0_13 = arith.constant 0 : index
    %15 = vector.load %arg6[%c0_12, %c0_13] : memref<1x128xf32, #tpu.memory_space<vmem>>, vector<1x128xf32>
    %16 = vector.broadcast %15 : vector<1x128xf32> to vector<128x128xf32>
    %17 = arith.mulf %14, %16 : vector<128x128xf32>
    %c0_14 = arith.constant 0 : index
    %c0_15 = arith.constant 0 : index
    %18 = vector.load %arg7[%c0_14, %c0_15] : memref<1x128xf32, #tpu.memory_space<vmem>>, vector<1x128xf32>
    %19 = vector.broadcast %18 : vector<1x128xf32> to vector<128x128xf32>
    %20 = arith.addf %17, %19 : vector<128x128xf32>
    %cst_16 = arith.constant 0.000000e+00 : f32
    %21 = vector.broadcast %cst_16 : f32 to vector<128x128xf32>
    %22 = arith.maximumf %20, %21 : vector<128x128xf32>
    %23 = arith.truncf %22 : vector<128x128xf32> to vector<128x128xbf16>
    %c0_17 = arith.constant 0 : index
    %c0_18 = arith.constant 0 : index
    %c0_19 = arith.constant 0 : index
    %24 = vector.load %arg8[%c0_17, %c0_18, %c0_19] : memref<4x128x256xbf16, #tpu.memory_space<vmem>>, vector<1x128x256xbf16>
    %25 = vector.shape_cast %24 : vector<1x128x256xbf16> to vector<128x256xbf16>
    %cst_20 = arith.constant dense<0.000000e+00> : vector<128x256xf32>
    %26 = tpu.matmul %23, %25, %cst_20 {dimension_numbers = #tpu.dot_dimension_numbers<[1], [0], [0], [1], [0, 0, 1, 1], [], []>} : vector<128x128xbf16>, vector<128x256xbf16>, vector<128x256xf32> -> vector<128x256xf32>
    %c0_21 = arith.constant 0 : index
    %c0_22 = arith.constant 0 : index
    %c0_23 = arith.constant 0 : index
    %27 = vector.load %arg9[%c0_21, %c0_22, %c0_23] : memref<4x1x256xf32, #tpu.memory_space<vmem>>, vector<1x1x256xf32>
    %28 = vector.shape_cast %27 : vector<1x1x256xf32> to vector<1x256xf32>
    %29 = vector.broadcast %28 : vector<1x256xf32> to vector<128x256xf32>
    %30 = arith.addf %26, %29 : vector<128x256xf32>
    %31 = vector.extract_strided_slice %30 {offsets = [0, 0], sizes = [128, 128], strides = [1, 1]} : vector<128x256xf32> to vector<128x128xf32>
    %32 = arith.truncf %31 : vector<128x128xf32> to vector<128x128xbf16>
    %33 = vector.extract_strided_slice %30 {offsets = [0, 128], sizes = [128, 128], strides = [1, 1]} : vector<128x256xf32> to vector<128x128xf32>
    %34 = arith.truncf %33 : vector<128x128xf32> to vector<128x128xbf16>
    %cst_24 = arith.constant dense<0.000000e+00> : vector<128x128xf32>
    %35 = tpu.matmul %32, %32, %cst_24 {dimension_numbers = #tpu.dot_dimension_numbers<[1], [1], [0], [0], [0, 0, 1, 0], [], []>} : vector<128x128xbf16>, vector<128x128xbf16>, vector<128x128xf32> -> vector<128x128xf32>
    %cst_25 = arith.constant dense<0xFF800000> : vector<128xf32>
    %36 = vector.multi_reduction <maximumf>, %35, %cst_25 [0] : vector<128x128xf32> to vector<128xf32>
    %37 = vector.shape_cast %36 : vector<128xf32> to vector<1x128xf32>
    %38 = vector.broadcast %37 : vector<1x128xf32> to vector<128x128xf32>
    %39 = arith.subf %35, %38 : vector<128x128xf32>
    %40 = math.exp %39 : vector<128x128xf32>
    %cst_26 = arith.constant dense<0.000000e+00> : vector<128xf32>
    %41 = vector.multi_reduction <add>, %40, %cst_26 [0] : vector<128x128xf32> to vector<128xf32>
    %42 = vector.shape_cast %41 : vector<128xf32> to vector<1x128xf32>
    %43 = tpu.reciprocal %42 {approx = true} : vector<1x128xf32> -> vector<1x128xf32>
    %44 = vector.broadcast %43 : vector<1x128xf32> to vector<128x128xf32>
    %45 = arith.mulf %40, %44 : vector<128x128xf32>
    %cst_27 = arith.constant dense<0.000000e+00> : vector<128xf32>
    %46 = vector.multi_reduction <add>, %45, %cst_27 [1] : vector<128x128xf32> to vector<128xf32>
    %47 = vector.shape_cast %46 : vector<128xf32> to vector<128x1xf32>
    %cst_28 = arith.constant 9.99999971E-10 : f32
    %48 = vector.broadcast %cst_28 : f32 to vector<128x1xf32>
    %49 = arith.addf %48, %47 : vector<128x1xf32>
    %50 = tpu.reciprocal %49 {approx = true} : vector<128x1xf32> -> vector<128x1xf32>
    %51 = arith.truncf %45 : vector<128x128xf32> to vector<128x128xbf16>
    %cst_29 = arith.constant dense<0.000000e+00> : vector<128x128xf32>
    %52 = tpu.matmul %51, %34, %cst_29 {dimension_numbers = #tpu.dot_dimension_numbers<[1], [0], [0], [1], [0, 0, 1, 1], [], []>} : vector<128x128xbf16>, vector<128x128xbf16>, vector<128x128xf32> -> vector<128x128xf32>
    %53 = vector.broadcast %50 : vector<128x1xf32> to vector<128x128xf32>
    %54 = arith.mulf %53, %52 : vector<128x128xf32>
    %55 = arith.subf %22, %54 : vector<128x128xf32>
    %56 = arith.truncf %55 : vector<128x128xf32> to vector<128x128xbf16>
    %c0_30 = arith.constant 0 : index
    %c0_31 = arith.constant 0 : index
    %c0_32 = arith.constant 0 : index
    %57 = vector.load %arg10[%c0_30, %c0_31, %c0_32] : memref<4x128x128xbf16, #tpu.memory_space<vmem>>, vector<1x128x128xbf16>
    %58 = vector.shape_cast %57 : vector<1x128x128xbf16> to vector<128x128xbf16>
    %cst_33 = arith.constant dense<0.000000e+00> : vector<128x128xf32>
    %59 = tpu.matmul %56, %58, %cst_33 {dimension_numbers = #tpu.dot_dimension_numbers<[1], [0], [0], [1], [0, 0, 1, 1], [], []>} : vector<128x128xbf16>, vector<128x128xbf16>, vector<128x128xf32> -> vector<128x128xf32>
    %c0_34 = arith.constant 0 : index
    %c0_35 = arith.constant 0 : index
    %c0_36 = arith.constant 0 : index
    %60 = vector.load %arg11[%c0_34, %c0_35, %c0_36] : memref<4x1x128xf32, #tpu.memory_space<vmem>>, vector<1x1x128xf32>
    %61 = vector.shape_cast %60 : vector<1x1x128xf32> to vector<1x128xf32>
    %62 = vector.broadcast %61 : vector<1x128xf32> to vector<128x128xf32>
    %63 = arith.addf %59, %62 : vector<128x128xf32>
    %c0_37 = arith.constant 0 : index
    %c0_38 = arith.constant 0 : index
    %c0_39 = arith.constant 0 : index
    %64 = vector.load %arg12[%c0_37, %c0_38, %c0_39] : memref<4x1x128xf32, #tpu.memory_space<vmem>>, vector<1x1x128xf32>
    %65 = vector.shape_cast %64 : vector<1x1x128xf32> to vector<1x128xf32>
    %66 = vector.broadcast %65 : vector<1x128xf32> to vector<128x128xf32>
    %67 = arith.mulf %63, %66 : vector<128x128xf32>
    %c0_40 = arith.constant 0 : index
    %c0_41 = arith.constant 0 : index
    %c0_42 = arith.constant 0 : index
    %68 = vector.load %arg13[%c0_40, %c0_41, %c0_42] : memref<4x1x128xf32, #tpu.memory_space<vmem>>, vector<1x1x128xf32>
    %69 = vector.shape_cast %68 : vector<1x1x128xf32> to vector<1x128xf32>
    %70 = vector.broadcast %69 : vector<1x128xf32> to vector<128x128xf32>
    %71 = arith.addf %67, %70 : vector<128x128xf32>
    %cst_43 = arith.constant 0.000000e+00 : f32
    %72 = vector.broadcast %cst_43 : f32 to vector<128x128xf32>
    %73 = arith.maximumf %71, %72 : vector<128x128xf32>
    %74 = arith.addf %22, %73 : vector<128x128xf32>
    %c0_44 = arith.constant 0 : index
    %c0_45 = arith.constant 0 : index
    %c0_46 = arith.constant 0 : index
    %75 = vector.load %arg14[%c0_44, %c0_45, %c0_46] : memref<1x128x512xf32, #tpu.memory_space<vmem>>, vector<1x128x128xf32>
    %76 = vector.shape_cast %75 : vector<1x128x128xf32> to vector<128x128xf32>
    %77 = vector.shape_cast %74 : vector<128x128xf32> to vector<1x128x128xf32>
    tpu.vector_store %arg14[%c0_44, %c0_45, %c0_46], %77 {strides = array<i32>} : memref<1x128x512xf32, #tpu.memory_space<vmem>>, vector<1x128x128xf32>,
    %78 = arith.truncf %74 : vector<128x128xf32> to vector<128x128xbf16>
    %c1 = arith.constant 1 : index
    %c0_47 = arith.constant 0 : index
    %c0_48 = arith.constant 0 : index
    %79 = vector.load %arg8[%c1, %c0_47, %c0_48] : memref<4x128x256xbf16, #tpu.memory_space<vmem>>, vector<1x128x256xbf16>
    %80 = vector.shape_cast %79 : vector<1x128x256xbf16> to vector<128x256xbf16>
    %cst_49 = arith.constant dense<0.000000e+00> : vector<128x256xf32>
    %81 = tpu.matmul %78, %80, %cst_49 {dimension_numbers = #tpu.dot_dimension_numbers<[1], [0], [0], [1], [0, 0, 1, 1], [], []>} : vector<128x128xbf16>, vector<128x256xbf16>, vector<128x256xf32> -> vector<128x256xf32>
    %c1_50 = arith.constant 1 : index
    %c0_51 = arith.constant 0 : index
    %c0_52 = arith.constant 0 : index
    %82 = vector.load %arg9[%c1_50, %c0_51, %c0_52] : memref<4x1x256xf32, #tpu.memory_space<vmem>>, vector<1x1x256xf32>
    %83 = vector.shape_cast %82 : vector<1x1x256xf32> to vector<1x256xf32>
    %84 = vector.broadcast %83 : vector<1x256xf32> to vector<128x256xf32>
    %85 = arith.addf %81, %84 : vector<128x256xf32>
    %86 = vector.extract_strided_slice %85 {offsets = [0, 0], sizes = [128, 128], strides = [1, 1]} : vector<128x256xf32> to vector<128x128xf32>
    %87 = arith.truncf %86 : vector<128x128xf32> to vector<128x128xbf16>
    %88 = vector.extract_strided_slice %85 {offsets = [0, 128], sizes = [128, 128], strides = [1, 1]} : vector<128x256xf32> to vector<128x128xf32>
    %89 = arith.truncf %88 : vector<128x128xf32> to vector<128x128xbf16>
    %cst_53 = arith.constant dense<0.000000e+00> : vector<128x128xf32>
    %90 = tpu.matmul %87, %87, %cst_53 {dimension_numbers = #tpu.dot_dimension_numbers<[1], [1], [0], [0], [0, 0, 1, 0], [], []>} : vector<128x128xbf16>, vector<128x128xbf16>, vector<128x128xf32> -> vector<128x128xf32>
    %cst_54 = arith.constant dense<0xFF800000> : vector<128xf32>
    %91 = vector.multi_reduction <maximumf>, %90, %cst_54 [0] : vector<128x128xf32> to vector<128xf32>
    %92 = vector.shape_cast %91 : vector<128xf32> to vector<1x128xf32>
    %93 = vector.broadcast %92 : vector<1x128xf32> to vector<128x128xf32>
    %94 = arith.subf %90, %93 : vector<128x128xf32>
    %95 = math.exp %94 : vector<128x128xf32>
    %cst_55 = arith.constant dense<0.000000e+00> : vector<128xf32>
    %96 = vector.multi_reduction <add>, %95, %cst_55 [0] : vector<128x128xf32> to vector<128xf32>
    %97 = vector.shape_cast %96 : vector<128xf32> to vector<1x128xf32>
    %98 = tpu.reciprocal %97 {approx = true} : vector<1x128xf32> -> vector<1x128xf32>
    %99 = vector.broadcast %98 : vector<1x128xf32> to vector<128x128xf32>
    %100 = arith.mulf %95, %99 : vector<128x128xf32>
    %cst_56 = arith.constant dense<0.000000e+00> : vector<128xf32>
    %101 = vector.multi_reduction <add>, %100, %cst_56 [1] : vector<128x128xf32> to vector<128xf32>
    %102 = vector.shape_cast %101 : vector<128xf32> to vector<128x1xf32>
    %cst_57 = arith.constant 9.99999971E-10 : f32
    %103 = vector.broadcast %cst_57 : f32 to vector<128x1xf32>
    %104 = arith.addf %103, %102 : vector<128x1xf32>
    %105 = tpu.reciprocal %104 {approx = true} : vector<128x1xf32> -> vector<128x1xf32>
    %106 = arith.truncf %100 : vector<128x128xf32> to vector<128x128xbf16>
    %cst_58 = arith.constant dense<0.000000e+00> : vector<128x128xf32>
    %107 = tpu.matmul %106, %89, %cst_58 {dimension_numbers = #tpu.dot_dimension_numbers<[1], [0], [0], [1], [0, 0, 1, 1], [], []>} : vector<128x128xbf16>, vector<128x128xbf16>, vector<128x128xf32> -> vector<128x128xf32>
    %108 = vector.broadcast %105 : vector<128x1xf32> to vector<128x128xf32>
    %109 = arith.mulf %108, %107 : vector<128x128xf32>
    %110 = arith.subf %74, %109 : vector<128x128xf32>
    %111 = arith.truncf %110 : vector<128x128xf32> to vector<128x128xbf16>
    %c1_59 = arith.constant 1 : index
    %c0_60 = arith.constant 0 : index
    %c0_61 = arith.constant 0 : index
    %112 = vector.load %arg10[%c1_59, %c0_60, %c0_61] : memref<4x128x128xbf16, #tpu.memory_space<vmem>>, vector<1x128x128xbf16>
    %113 = vector.shape_cast %112 : vector<1x128x128xbf16> to vector<128x128xbf16>
    %cst_62 = arith.constant dense<0.000000e+00> : vector<128x128xf32>
    %114 = tpu.matmul %111, %113, %cst_62 {dimension_numbers = #tpu.dot_dimension_numbers<[1], [0], [0], [1], [0, 0, 1, 1], [], []>} : vector<128x128xbf16>, vector<128x128xbf16>, vector<128x128xf32> -> vector<128x128xf32>
    %c1_63 = arith.constant 1 : index
    %c0_64 = arith.constant 0 : index
    %c0_65 = arith.constant 0 : index
    %115 = vector.load %arg11[%c1_63, %c0_64, %c0_65] : memref<4x1x128xf32, #tpu.memory_space<vmem>>, vector<1x1x128xf32>
    %116 = vector.shape_cast %115 : vector<1x1x128xf32> to vector<1x128xf32>
    %117 = vector.broadcast %116 : vector<1x128xf32> to vector<128x128xf32>
    %118 = arith.addf %114, %117 : vector<128x128xf32>
    %c1_66 = arith.constant 1 : index
    %c0_67 = arith.constant 0 : index
    %c0_68 = arith.constant 0 : index
    %119 = vector.load %arg12[%c1_66, %c0_67, %c0_68] : memref<4x1x128xf32, #tpu.memory_space<vmem>>, vector<1x1x128xf32>
    %120 = vector.shape_cast %119 : vector<1x1x128xf32> to vector<1x128xf32>
    %121 = vector.broadcast %120 : vector<1x128xf32> to vector<128x128xf32>
    %122 = arith.mulf %118, %121 : vector<128x128xf32>
    %c1_69 = arith.constant 1 : index
    %c0_70 = arith.constant 0 : index
    %c0_71 = arith.constant 0 : index
    %123 = vector.load %arg13[%c1_69, %c0_70, %c0_71] : memref<4x1x128xf32, #tpu.memory_space<vmem>>, vector<1x1x128xf32>
    %124 = vector.shape_cast %123 : vector<1x1x128xf32> to vector<1x128xf32>
    %125 = vector.broadcast %124 : vector<1x128xf32> to vector<128x128xf32>
    %126 = arith.addf %122, %125 : vector<128x128xf32>
    %cst_72 = arith.constant 0.000000e+00 : f32
    %127 = vector.broadcast %cst_72 : f32 to vector<128x128xf32>
    %128 = arith.maximumf %126, %127 : vector<128x128xf32>
    %129 = arith.addf %74, %128 : vector<128x128xf32>
    %c0_73 = arith.constant 0 : index
    %c0_74 = arith.constant 0 : index
    %c128 = arith.constant 128 : index
    %130 = vector.load %arg14[%c0_73, %c0_74, %c128] : memref<1x128x512xf32, #tpu.memory_space<vmem>>, vector<1x128x128xf32>
    %131 = vector.shape_cast %130 : vector<1x128x128xf32> to vector<128x128xf32>
    %132 = vector.shape_cast %129 : vector<128x128xf32> to vector<1x128x128xf32>
    tpu.vector_store %arg14[%c0_73, %c0_74, %c128], %132 {strides = array<i32>} : memref<1x128x512xf32, #tpu.memory_space<vmem>>, vector<1x128x128xf32>,
    %133 = arith.truncf %129 : vector<128x128xf32> to vector<128x128xbf16>
    %c2 = arith.constant 2 : index
    %c0_75 = arith.constant 0 : index
    %c0_76 = arith.constant 0 : index
    %134 = vector.load %arg8[%c2, %c0_75, %c0_76] : memref<4x128x256xbf16, #tpu.memory_space<vmem>>, vector<1x128x256xbf16>
    %135 = vector.shape_cast %134 : vector<1x128x256xbf16> to vector<128x256xbf16>
    %cst_77 = arith.constant dense<0.000000e+00> : vector<128x256xf32>
    %136 = tpu.matmul %133, %135, %cst_77 {dimension_numbers = #tpu.dot_dimension_numbers<[1], [0], [0], [1], [0, 0, 1, 1], [], []>} : vector<128x128xbf16>, vector<128x256xbf16>, vector<128x256xf32> -> vector<128x256xf32>
    %c2_78 = arith.constant 2 : index
    %c0_79 = arith.constant 0 : index
    %c0_80 = arith.constant 0 : index
    %137 = vector.load %arg9[%c2_78, %c0_79, %c0_80] : memref<4x1x256xf32, #tpu.memory_space<vmem>>, vector<1x1x256xf32>
    %138 = vector.shape_cast %137 : vector<1x1x256xf32> to vector<1x256xf32>
    %139 = vector.broadcast %138 : vector<1x256xf32> to vector<128x256xf32>
    %140 = arith.addf %136, %139 : vector<128x256xf32>
    %141 = vector.extract_strided_slice %140 {offsets = [0, 0], sizes = [128, 128], strides = [1, 1]} : vector<128x256xf32> to vector<128x128xf32>
    %142 = arith.truncf %141 : vector<128x128xf32> to vector<128x128xbf16>
    %143 = vector.extract_strided_slice %140 {offsets = [0, 128], sizes = [128, 128], strides = [1, 1]} : vector<128x256xf32> to vector<128x128xf32>
    %144 = arith.truncf %143 : vector<128x128xf32> to vector<128x128xbf16>
    %cst_81 = arith.constant dense<0.000000e+00> : vector<128x128xf32>
    %145 = tpu.matmul %142, %142, %cst_81 {dimension_numbers = #tpu.dot_dimension_numbers<[1], [1], [0], [0], [0, 0, 1, 0], [], []>} : vector<128x128xbf16>, vector<128x128xbf16>, vector<128x128xf32> -> vector<128x128xf32>
    %cst_82 = arith.constant dense<0xFF800000> : vector<128xf32>
    %146 = vector.multi_reduction <maximumf>, %145, %cst_82 [0] : vector<128x128xf32> to vector<128xf32>
    %147 = vector.shape_cast %146 : vector<128xf32> to vector<1x128xf32>
    %148 = vector.broadcast %147 : vector<1x128xf32> to vector<128x128xf32>
    %149 = arith.subf %145, %148 : vector<128x128xf32>
    %150 = math.exp %149 : vector<128x128xf32>
    %cst_83 = arith.constant dense<0.000000e+00> : vector<128xf32>
    %151 = vector.multi_reduction <add>, %150, %cst_83 [0] : vector<128x128xf32> to vector<128xf32>
    %152 = vector.shape_cast %151 : vector<128xf32> to vector<1x128xf32>
    %153 = tpu.reciprocal %152 {approx = true} : vector<1x128xf32> -> vector<1x128xf32>
    %154 = vector.broadcast %153 : vector<1x128xf32> to vector<128x128xf32>
    %155 = arith.mulf %150, %154 : vector<128x128xf32>
    %cst_84 = arith.constant dense<0.000000e+00> : vector<128xf32>
    %156 = vector.multi_reduction <add>, %155, %cst_84 [1] : vector<128x128xf32> to vector<128xf32>
    %157 = vector.shape_cast %156 : vector<128xf32> to vector<128x1xf32>
    %cst_85 = arith.constant 9.99999971E-10 : f32
    %158 = vector.broadcast %cst_85 : f32 to vector<128x1xf32>
    %159 = arith.addf %158, %157 : vector<128x1xf32>
    %160 = tpu.reciprocal %159 {approx = true} : vector<128x1xf32> -> vector<128x1xf32>
    %161 = arith.truncf %155 : vector<128x128xf32> to vector<128x128xbf16>
    %cst_86 = arith.constant dense<0.000000e+00> : vector<128x128xf32>
    %162 = tpu.matmul %161, %144, %cst_86 {dimension_numbers = #tpu.dot_dimension_numbers<[1], [0], [0], [1], [0, 0, 1, 1], [], []>} : vector<128x128xbf16>, vector<128x128xbf16>, vector<128x128xf32> -> vector<128x128xf32>
    %163 = vector.broadcast %160 : vector<128x1xf32> to vector<128x128xf32>
    %164 = arith.mulf %163, %162 : vector<128x128xf32>
    %165 = arith.subf %129, %164 : vector<128x128xf32>
    %166 = arith.truncf %165 : vector<128x128xf32> to vector<128x128xbf16>
    %c2_87 = arith.constant 2 : index
    %c0_88 = arith.constant 0 : index
    %c0_89 = arith.constant 0 : index
    %167 = vector.load %arg10[%c2_87, %c0_88, %c0_89] : memref<4x128x128xbf16, #tpu.memory_space<vmem>>, vector<1x128x128xbf16>
    %168 = vector.shape_cast %167 : vector<1x128x128xbf16> to vector<128x128xbf16>
    %cst_90 = arith.constant dense<0.000000e+00> : vector<128x128xf32>
    %169 = tpu.matmul %166, %168, %cst_90 {dimension_numbers = #tpu.dot_dimension_numbers<[1], [0], [0], [1], [0, 0, 1, 1], [], []>} : vector<128x128xbf16>, vector<128x128xbf16>, vector<128x128xf32> -> vector<128x128xf32>
    %c2_91 = arith.constant 2 : index
    %c0_92 = arith.constant 0 : index
    %c0_93 = arith.constant 0 : index
    %170 = vector.load %arg11[%c2_91, %c0_92, %c0_93] : memref<4x1x128xf32, #tpu.memory_space<vmem>>, vector<1x1x128xf32>
    %171 = vector.shape_cast %170 : vector<1x1x128xf32> to vector<1x128xf32>
    %172 = vector.broadcast %171 : vector<1x128xf32> to vector<128x128xf32>
    %173 = arith.addf %169, %172 : vector<128x128xf32>
    %c2_94 = arith.constant 2 : index
    %c0_95 = arith.constant 0 : index
    %c0_96 = arith.constant 0 : index
    %174 = vector.load %arg12[%c2_94, %c0_95, %c0_96] : memref<4x1x128xf32, #tpu.memory_space<vmem>>, vector<1x1x128xf32>
    %175 = vector.shape_cast %174 : vector<1x1x128xf32> to vector<1x128xf32>
    %176 = vector.broadcast %175 : vector<1x128xf32> to vector<128x128xf32>
    %177 = arith.mulf %173, %176 : vector<128x128xf32>
    %c2_97 = arith.constant 2 : index
    %c0_98 = arith.constant 0 : index
    %c0_99 = arith.constant 0 : index
    %178 = vector.load %arg13[%c2_97, %c0_98, %c0_99] : memref<4x1x128xf32, #tpu.memory_space<vmem>>, vector<1x1x128xf32>
    %179 = vector.shape_cast %178 : vector<1x1x128xf32> to vector<1x128xf32>
    %180 = vector.broadcast %179 : vector<1x128xf32> to vector<128x128xf32>
    %181 = arith.addf %177, %180 : vector<128x128xf32>
    %cst_100 = arith.constant 0.000000e+00 : f32
    %182 = vector.broadcast %cst_100 : f32 to vector<128x128xf32>
    %183 = arith.maximumf %181, %182 : vector<128x128xf32>
    %184 = arith.addf %129, %183 : vector<128x128xf32>
    %c0_101 = arith.constant 0 : index
    %c0_102 = arith.constant 0 : index
    %c256 = arith.constant 256 : index
    %185 = vector.load %arg14[%c0_101, %c0_102, %c256] : memref<1x128x512xf32, #tpu.memory_space<vmem>>, vector<1x128x128xf32>
    %186 = vector.shape_cast %185 : vector<1x128x128xf32> to vector<128x128xf32>
    %187 = vector.shape_cast %184 : vector<128x128xf32> to vector<1x128x128xf32>
    tpu.vector_store %arg14[%c0_101, %c0_102, %c256], %187 {strides = array<i32>} : memref<1x128x512xf32, #tpu.memory_space<vmem>>, vector<1x128x128xf32>,
    %188 = arith.truncf %184 : vector<128x128xf32> to vector<128x128xbf16>
    %c3 = arith.constant 3 : index
    %c0_103 = arith.constant 0 : index
    %c0_104 = arith.constant 0 : index
    %189 = vector.load %arg8[%c3, %c0_103, %c0_104] : memref<4x128x256xbf16, #tpu.memory_space<vmem>>, vector<1x128x256xbf16>
    %190 = vector.shape_cast %189 : vector<1x128x256xbf16> to vector<128x256xbf16>
    %cst_105 = arith.constant dense<0.000000e+00> : vector<128x256xf32>
    %191 = tpu.matmul %188, %190, %cst_105 {dimension_numbers = #tpu.dot_dimension_numbers<[1], [0], [0], [1], [0, 0, 1, 1], [], []>} : vector<128x128xbf16>, vector<128x256xbf16>, vector<128x256xf32> -> vector<128x256xf32>
    %c3_106 = arith.constant 3 : index
    %c0_107 = arith.constant 0 : index
    %c0_108 = arith.constant 0 : index
    %192 = vector.load %arg9[%c3_106, %c0_107, %c0_108] : memref<4x1x256xf32, #tpu.memory_space<vmem>>, vector<1x1x256xf32>
    %193 = vector.shape_cast %192 : vector<1x1x256xf32> to vector<1x256xf32>
    %194 = vector.broadcast %193 : vector<1x256xf32> to vector<128x256xf32>
    %195 = arith.addf %191, %194 : vector<128x256xf32>
    %196 = vector.extract_strided_slice %195 {offsets = [0, 0], sizes = [128, 128], strides = [1, 1]} : vector<128x256xf32> to vector<128x128xf32>
    %197 = arith.truncf %196 : vector<128x128xf32> to vector<128x128xbf16>
    %198 = vector.extract_strided_slice %195 {offsets = [0, 128], sizes = [128, 128], strides = [1, 1]} : vector<128x256xf32> to vector<128x128xf32>
    %199 = arith.truncf %198 : vector<128x128xf32> to vector<128x128xbf16>
    %cst_109 = arith.constant dense<0.000000e+00> : vector<128x128xf32>
    %200 = tpu.matmul %197, %197, %cst_109 {dimension_numbers = #tpu.dot_dimension_numbers<[1], [1], [0], [0], [0, 0, 1, 0], [], []>} : vector<128x128xbf16>, vector<128x128xbf16>, vector<128x128xf32> -> vector<128x128xf32>
    %cst_110 = arith.constant dense<0xFF800000> : vector<128xf32>
    %201 = vector.multi_reduction <maximumf>, %200, %cst_110 [0] : vector<128x128xf32> to vector<128xf32>
    %202 = vector.shape_cast %201 : vector<128xf32> to vector<1x128xf32>
    %203 = vector.broadcast %202 : vector<1x128xf32> to vector<128x128xf32>
    %204 = arith.subf %200, %203 : vector<128x128xf32>
    %205 = math.exp %204 : vector<128x128xf32>
    %cst_111 = arith.constant dense<0.000000e+00> : vector<128xf32>
    %206 = vector.multi_reduction <add>, %205, %cst_111 [0] : vector<128x128xf32> to vector<128xf32>
    %207 = vector.shape_cast %206 : vector<128xf32> to vector<1x128xf32>
    %208 = tpu.reciprocal %207 {approx = true} : vector<1x128xf32> -> vector<1x128xf32>
    %209 = vector.broadcast %208 : vector<1x128xf32> to vector<128x128xf32>
    %210 = arith.mulf %205, %209 : vector<128x128xf32>
    %cst_112 = arith.constant dense<0.000000e+00> : vector<128xf32>
    %211 = vector.multi_reduction <add>, %210, %cst_112 [1] : vector<128x128xf32> to vector<128xf32>
    %212 = vector.shape_cast %211 : vector<128xf32> to vector<128x1xf32>
    %cst_113 = arith.constant 9.99999971E-10 : f32
    %213 = vector.broadcast %cst_113 : f32 to vector<128x1xf32>
    %214 = arith.addf %213, %212 : vector<128x1xf32>
    %215 = tpu.reciprocal %214 {approx = true} : vector<128x1xf32> -> vector<128x1xf32>
    %216 = arith.truncf %210 : vector<128x128xf32> to vector<128x128xbf16>
    %cst_114 = arith.constant dense<0.000000e+00> : vector<128x128xf32>
    %217 = tpu.matmul %216, %199, %cst_114 {dimension_numbers = #tpu.dot_dimension_numbers<[1], [0], [0], [1], [0, 0, 1, 1], [], []>} : vector<128x128xbf16>, vector<128x128xbf16>, vector<128x128xf32> -> vector<128x128xf32>
    %218 = vector.broadcast %215 : vector<128x1xf32> to vector<128x128xf32>
    %219 = arith.mulf %218, %217 : vector<128x128xf32>
    %220 = arith.subf %184, %219 : vector<128x128xf32>
    %221 = arith.truncf %220 : vector<128x128xf32> to vector<128x128xbf16>
    %c3_115 = arith.constant 3 : index
    %c0_116 = arith.constant 0 : index
    %c0_117 = arith.constant 0 : index
    %222 = vector.load %arg10[%c3_115, %c0_116, %c0_117] : memref<4x128x128xbf16, #tpu.memory_space<vmem>>, vector<1x128x128xbf16>
    %223 = vector.shape_cast %222 : vector<1x128x128xbf16> to vector<128x128xbf16>
    %cst_118 = arith.constant dense<0.000000e+00> : vector<128x128xf32>
    %224 = tpu.matmul %221, %223, %cst_118 {dimension_numbers = #tpu.dot_dimension_numbers<[1], [0], [0], [1], [0, 0, 1, 1], [], []>} : vector<128x128xbf16>, vector<128x128xbf16>, vector<128x128xf32> -> vector<128x128xf32>
    %c3_119 = arith.constant 3 : index
    %c0_120 = arith.constant 0 : index
    %c0_121 = arith.constant 0 : index
    %225 = vector.load %arg11[%c3_119, %c0_120, %c0_121] : memref<4x1x128xf32, #tpu.memory_space<vmem>>, vector<1x1x128xf32>
    %226 = vector.shape_cast %225 : vector<1x1x128xf32> to vector<1x128xf32>
    %227 = vector.broadcast %226 : vector<1x128xf32> to vector<128x128xf32>
    %228 = arith.addf %224, %227 : vector<128x128xf32>
    %c3_122 = arith.constant 3 : index
    %c0_123 = arith.constant 0 : index
    %c0_124 = arith.constant 0 : index
    %229 = vector.load %arg12[%c3_122, %c0_123, %c0_124] : memref<4x1x128xf32, #tpu.memory_space<vmem>>, vector<1x1x128xf32>
    %230 = vector.shape_cast %229 : vector<1x1x128xf32> to vector<1x128xf32>
    %231 = vector.broadcast %230 : vector<1x128xf32> to vector<128x128xf32>
    %232 = arith.mulf %228, %231 : vector<128x128xf32>
    %c3_125 = arith.constant 3 : index
    %c0_126 = arith.constant 0 : index
    %c0_127 = arith.constant 0 : index
    %233 = vector.load %arg13[%c3_125, %c0_126, %c0_127] : memref<4x1x128xf32, #tpu.memory_space<vmem>>, vector<1x1x128xf32>
    %234 = vector.shape_cast %233 : vector<1x1x128xf32> to vector<1x128xf32>
    %235 = vector.broadcast %234 : vector<1x128xf32> to vector<128x128xf32>
    %236 = arith.addf %232, %235 : vector<128x128xf32>
    %cst_128 = arith.constant 0.000000e+00 : f32
    %237 = vector.broadcast %cst_128 : f32 to vector<128x128xf32>
    %238 = arith.maximumf %236, %237 : vector<128x128xf32>
    %239 = arith.addf %184, %238 : vector<128x128xf32>
    %c0_129 = arith.constant 0 : index
    %c0_130 = arith.constant 0 : index
    %c384 = arith.constant 384 : index
    %240 = vector.load %arg14[%c0_129, %c0_130, %c384] : memref<1x128x512xf32, #tpu.memory_space<vmem>>, vector<1x128x128xf32>
    %241 = vector.shape_cast %240 : vector<1x128x128xf32> to vector<128x128xf32>
    %242 = vector.shape_cast %239 : vector<128x128xf32> to vector<1x128x128xf32>
    tpu.vector_store %arg14[%c0_129, %c0_130, %c384], %242 {strides = array<i32>} : memref<1x128x512xf32, #tpu.memory_space<vmem>>, vector<1x128x128xf32>,
    return
  }
  func.func @transform_0(%arg0: i32) -> (i32, i32, i32) {
    %c0_i32 = arith.constant 0 : i32
    %c0_i32_0 = arith.constant 0 : i32
    %c0_i32_1 = arith.constant 0 : i32
    return %arg0, %c0_i32, %c0_i32_0 : i32, i32, i32
  }
  func.func @transform_1(%arg0: i32) -> (i32, i32) {
    %c0_i32 = arith.constant 0 : i32
    %c0_i32_0 = arith.constant 0 : i32
    %c0_i32_1 = arith.constant 0 : i32
    return %c0_i32, %c0_i32_0 : i32, i32
  }
  func.func @transform_2(%arg0: i32) -> (i32, i32) {
    %c0_i32 = arith.constant 0 : i32
    %c0_i32_0 = arith.constant 0 : i32
    %c0_i32_1 = arith.constant 0 : i32
    return %c0_i32, %c0_i32_0 : i32, i32
  }
  func.func @transform_3(%arg0: i32) -> (i32, i32) {
    %c0_i32 = arith.constant 0 : i32
    %c0_i32_0 = arith.constant 0 : i32
    %c0_i32_1 = arith.constant 0 : i32
    return %c0_i32, %c0_i32_0 : i32, i32
  }
  func.func @transform_4(%arg0: i32) -> (i32, i32) {
    %c0_i32 = arith.constant 0 : i32
    %c0_i32_0 = arith.constant 0 : i32
    %c0_i32_1 = arith.constant 0 : i32
    return %c0_i32, %c0_i32_0 : i32, i32
  }
  func.func @transform_5(%arg0: i32) -> (i32, i32) {
    %c0_i32 = arith.constant 0 : i32
    %c0_i32_0 = arith.constant 0 : i32
    %c0_i32_1 = arith.constant 0 : i32
    return %c0_i32, %c0_i32_0 : i32, i32
  }
  func.func @transform_6(%arg0: i32) -> (i32, i32) {
    %c0_i32 = arith.constant 0 : i32
    %c0_i32_0 = arith.constant 0 : i32
    %c0_i32_1 = arith.constant 0 : i32
    return %c0_i32, %c0_i32_0 : i32, i32
  }
  func.func @transform_7(%arg0: i32) -> (i32, i32, i32) {
    %c0_i32 = arith.constant 0 : i32
    %c0_i32_0 = arith.constant 0 : i32
    %c0_i32_1 = arith.constant 0 : i32
    %c0_i32_2 = arith.constant 0 : i32
    return %c0_i32, %c0_i32_0, %c0_i32_1 : i32, i32, i32
  }
  func.func @transform_8(%arg0: i32) -> (i32, i32, i32) {
    %c0_i32 = arith.constant 0 : i32
    %c0_i32_0 = arith.constant 0 : i32
    %c0_i32_1 = arith.constant 0 : i32
    %c0_i32_2 = arith.constant 0 : i32
    return %c0_i32, %c0_i32_0, %c0_i32_1 : i32, i32, i32
  }
  func.func @transform_9(%arg0: i32) -> (i32, i32, i32) {
    %c0_i32 = arith.constant 0 : i32
    %c0_i32_0 = arith.constant 0 : i32
    %c0_i32_1 = arith.constant 0 : i32
    %c0_i32_2 = arith.constant 0 : i32
    return %c0_i32, %c0_i32_0, %c0_i32_1 : i32, i32, i32
  }
  func.func @transform_10(%arg0: i32) -> (i32, i32, i32) {
    %c0_i32 = arith.constant 0 : i32
    %c0_i32_0 = arith.constant 0 : i32
    %c0_i32_1 = arith.constant 0 : i32
    %c0_i32_2 = arith.constant 0 : i32
    return %c0_i32, %c0_i32_0, %c0_i32_1 : i32, i32, i32
  }
  func.func @transform_11(%arg0: i32) -> (i32, i32, i32) {
    %c0_i32 = arith.constant 0 : i32
    %c0_i32_0 = arith.constant 0 : i32
    %c0_i32_1 = arith.constant 0 : i32
    %c0_i32_2 = arith.constant 0 : i32
    return %c0_i32, %c0_i32_0, %c0_i32_1 : i32, i32, i32
  }
  func.func @transform_12(%arg0: i32) -> (i32, i32, i32) {
    %c0_i32 = arith.constant 0 : i32
    %c0_i32_0 = arith.constant 0 : i32
    %c0_i32_1 = arith.constant 0 : i32
    %c0_i32_2 = arith.constant 0 : i32
    return %c0_i32, %c0_i32_0, %c0_i32_1 : i32, i32, i32
  }
  func.func @transform_13(%arg0: i32) -> (i32, i32, i32) {
    %c0_i32 = arith.constant 0 : i32
    %c0_i32_0 = arith.constant 0 : i32
    %c0_i32_1 = arith.constant 0 : i32
    return %arg0, %c0_i32, %c0_i32_0 : i32, i32, i32
  }
}

</mosaic_0001>

<llo_original>
// kernel: tpu_custom_call.1
$region0: #{tpu_custom_call.1}
  #allocation0 [shape = 'u32[]', space=smem, size = 0x4, offset = 0x4, fixed_abs, tag = 'smem constant byte address 0x4 - core index']
  #allocation1 [shape = 'u32[144,128]{1,0:T(1,128)}', space=vmem, size = 0x12000, scoped, tag = 'internal scratch']
  %s0 = inlined_call_operand.hbm [shape: bf16[2,128,128], index: 0, kind: input, shape index: {}]
  %s1 = inlined_call_operand.hbm [shape: bf16[128,128], index: 1, kind: input, shape index: {}]
  %s2 = inlined_call_operand.hbm [shape: f32[1,128], index: 2, kind: input, shape index: {}]
  %s3 = inlined_call_operand.hbm [shape: f32[1,128], index: 3, kind: input, shape index: {}]
  %s4 = inlined_call_operand.hbm [shape: bf16[128,128], index: 4, kind: input, shape index: {}]
  %s5 = inlined_call_operand.hbm [shape: f32[1,128], index: 5, kind: input, shape index: {}]
  %s6 = inlined_call_operand.hbm [shape: f32[1,128], index: 6, kind: input, shape index: {}]
  %s7 = inlined_call_operand.hbm [shape: bf16[4,128,256], index: 7, kind: input, shape index: {}]
  %s8 = inlined_call_operand.vmem [shape: f32[4,1,256], index: 8, kind: input, shape index: {}]
  %s9 = inlined_call_operand.hbm [shape: bf16[4,128,128], index: 9, kind: input, shape index: {}]
  %s10 = inlined_call_operand.vmem [shape: f32[4,1,128], index: 10, kind: input, shape index: {}]
  %s11 = inlined_call_operand.vmem [shape: f32[4,1,128], index: 11, kind: input, shape index: {}]
  %s12 = inlined_call_operand.vmem [shape: f32[4,1,128], index: 12, kind: input, shape index: {}]
  %s13 = inlined_call_operand.hbm [shape: f32[2,128,512], index: 13, kind: output, shape index: {}]
  %s14 = sld [smem:[#allocation0]]
  $region121: #{tpu_custom_call.1} parent=0
    _
  %s16 = ssub.s32 1, %s14
  %s17 = scalar_select 0, %s16, %s14
  $region1: #{tpu_custom_call.1} parent=0
    #allocation2 [shape = 'u8[65536]{0}', space=vmem, size = 0x10000, scoped, tag = 'input window, operand 0']
    #allocation3 [shape = 's32[2]{0}', space=sflag, size = 0x8, scoped, tag = 'scoped memory for tpu_custom_call.1']
    #allocation4 [shape = 's32[2]{0}', space=sflag, size = 0x8, scoped, tag = 'scoped memory for tpu_custom_call.1']
    #allocation5 [shape = 'u8[32768]{0}', space=vmem, size = 0x8000, scoped, tag = 'input window, operand 1, single buffered']
    #allocation6 [shape = 's32[1]{0}', space=sflag, size = 0x4, scoped, tag = 'scoped memory for tpu_custom_call.1']
    #allocation7 [shape = 'u8[512]{0}', space=vmem, size = 0x400, scoped, tag = 'input window, operand 2, single buffered']
    #allocation8 [shape = 'u8[512]{0}', space=vmem, size = 0x400, scoped, tag = 'input window, operand 3, single buffered']
    #allocation9 [shape = 's32[1]{0}', space=sflag, size = 0x4, scoped, tag = 'scoped memory for tpu_custom_call.1']
    #allocation10 [shape = 'u8[32768]{0}', space=vmem, size = 0x8000, scoped, tag = 'input window, operand 4, single buffered']
    #allocation11 [shape = 'u8[512]{0}', space=vmem, size = 0x400, scoped, tag = 'input window, operand 5, single buffered']
    #allocation12 [shape = 's32[1]{0}', space=sflag, size = 0x4, scoped, tag = 'scoped memory for tpu_custom_call.1']
    #allocation13 [shape = 'u8[512]{0}', space=vmem, size = 0x400, scoped, tag = 'input window, operand 6, single buffered']
    #allocation14 [shape = 'u8[262144]{0}', space=vmem, size = 0x40000, scoped, tag = 'input window, operand 7, single buffered']
    #allocation15 [shape = 's32[1]{0}', space=sflag, size = 0x4, scoped, tag = 'scoped memory for tpu_custom_call.1']
    #allocation16 [shape = 'u8[131072]{0}', space=vmem, size = 0x20000, scoped, tag = 'input window, operand 9, single buffered']
    #allocation17 [shape = 'u8[524288]{0}', space=vmem, size = 0x80000, scoped, tag = 'output window, operand 0']
    %18 = vsyncpa [#allocation3], 0
    %s19 = scalar_lea.sflag [#allocation3], 1
    %20 = vsyncpa %s19, 0
    %21 = vsyncpa [#allocation6], 0
    %22 = vsyncpa [#allocation9], 0
    %23 = vsyncpa [#allocation12], 0
    %24 = vsyncpa [#allocation15], 0
    %25 = vsyncpa [#allocation4], 0
    %s26 = scalar_lea.sflag [#allocation4], 1
    %27 = vsyncpa %s26, 0
    loop: start=0, step=1, limit=4
    $region2: #{tpu_custom_call.1} parent=1 // loop_pre_header
      _
    $region3: #{tpu_custom_call.1} parent=1 // loop_header
      %s29 = sphi 0, %s33
      %p30 = scmp.ge.s32.totalorder %s29, 4
      %s39 = sphi 0, %s41
      %s42 = sphi 0, %s39
      %s43 = sphi 0, %s42
      %s59 = sphi 0, %s43
      %s63 = sphi 0, %s63
      %s65 = sphi 0, %s63
      %s66 = sphi 0, %s65
      %s80 = sphi 0, %s66
      %s84 = sphi 0, %s84
      %s86 = sphi 0, %s84
      %s87 = sphi 0, %s86
      %s101 = sphi 0, %s87
      %s105 = sphi 0, %s105
      %s107 = sphi 0, %s105
      %s108 = sphi 0, %s107
      %s122 = sphi 0, %s108
      %s126 = sphi 0, %s126
      %s128 = sphi 0, %s126
      %s129 = sphi 0, %s128
      %s143 = sphi 0, %s129
      %s147 = sphi 0, %s147
      %s149 = sphi 0, %s147
      %s150 = sphi 0, %s149
      %s164 = sphi 0, %s150
      %s168 = sphi 0, %s168
      %s170 = sphi 0, %s168
      %s171 = sphi 0, %s170
      %s185 = sphi 0, %s171
      %s189 = sphi 0, %s189
      %s191 = sphi 0, %s189
      %s192 = sphi 0, %s191
      %s206 = sphi 0, %s192
      %s210 = sphi 0, %s210
      %s212 = sphi 0, %s210
      %s213 = sphi 0, %s212
      %s227 = sphi 0, %s213
      %s231 = sphi 0, %s231
      %s233 = sphi 0, %s231
      %s234 = sphi 0, %s233
      %s248 = sphi 0, %s234
      %s252 = sphi 0, %s252
      %s254 = sphi 0, %s252
      %s255 = sphi 0, %s254
      %s269 = sphi 0, %s255
      %s273 = sphi 0, %s273
      %s275 = sphi 0, %s273
      %s276 = sphi 0, %s275
      %s290 = sphi 0, %s276
      %s294 = sphi 0, %s294
      %s296 = sphi 0, %s294
      %s297 = sphi 0, %s296
      %s311 = sphi 0, %s297
      %s317 = sphi 0, %s319
      %s320 = sphi 0, %s317
      %s321 = sphi 0, %s320
      %s337 = sphi 0, %s321
    $region4: #{tpu_custom_call.1} parent=1 // loop_header_branch
      %32 = sbr.rel (%p30) target = $region8
    $region5: #{tpu_custom_call.1} parent=1 // loop_body
      %s34 = ssub.s32 %s29, 1
      %s35 = ssub.s32 %s29, 2
      %s36 = sadd.s32 %s29, 1
      %s37 = ssub.s32 %s29, %s36
      %p38 = scmp.eq.s32.totalorder %s37, 0
      %s40 = sadd.s32 %s39, 1
      %s41 = scalar_select %p38, %s39, %s40
      %p44 = pneg %p38
      %p45 = scmp.eq.s32.totalorder %s29, 1
      %p46 = por %p44, %p45
      %p47 = scmp.ne.s32.totalorder %s39, %s42
      %p48 = scmp.eq.s32.totalorder %s29, 0
      %p49 = por %p47, %p48
      %p50 = scmp.ne.s32.totalorder %s39, %s42
      %p51 = scmp.eq.s32.totalorder %s34, 1
      %p52 = por %p50, %p51
      %p53 = scmp.ne.s32.totalorder %s42, %s43
      %p54 = scmp.eq.s32.totalorder %s34, 0
      %p55 = por %p53, %p54
      %p56 = scmp.ne.s32.totalorder %s42, %s43
      %p57 = scmp.eq.s32.totalorder %s35, 1
      %p58 = por %p56, %p57
      %p60 = scmp.ne.s32.totalorder %s43, %s59
      %p61 = scmp.eq.s32.totalorder %s35, 0
      %p62 = por %p60, %p61
      %s64 = sadd.s32 %s63, 1
      %p67 = scmp.eq.s32.totalorder %s29, 1
      %p68 = scmp.ne.s32.totalorder %s63, %s65
      %p69 = scmp.eq.s32.totalorder %s29, 0
      %p70 = por %p68, %p69
      %p71 = scmp.ne.s32.totalorder %s63, %s65
      %p72 = scmp.eq.s32.totalorder %s34, 1
      %p73 = por %p71, %p72
      %p74 = scmp.ne.s32.totalorder %s65, %s66
      %p75 = scmp.eq.s32.totalorder %s34, 0
      %p76 = por %p74, %p75
      %p77 = scmp.ne.s32.totalorder %s65, %s66
      %p78 = scmp.eq.s32.totalorder %s35, 1
      %p79 = por %p77, %p78
      %p81 = scmp.ne.s32.totalorder %s66, %s80
      %p82 = scmp.eq.s32.totalorder %s35, 0
      %p83 = por %p81, %p82
      %s85 = sadd.s32 %s84, 1
      %p88 = scmp.eq.s32.totalorder %s29, 1
      %p89 = scmp.ne.s32.totalorder %s84, %s86
      %p90 = scmp.eq.s32.totalorder %s29, 0
      %p91 = por %p89, %p90
      %p92 = scmp.ne.s32.totalorder %s84, %s86
      %p93 = scmp.eq.s32.totalorder %s34, 1
      %p94 = por %p92, %p93
      %p95 = scmp.ne.s32.totalorder %s86, %s87
      %p96 = scmp.eq.s32.totalorder %s34, 0
      %p97 = por %p95, %p96
      %p98 = scmp.ne.s32.totalorder %s86, %s87
      %p99 = scmp.eq.s32.totalorder %s35, 1
      %p100 = por %p98, %p99
      %p102 = scmp.ne.s32.totalorder %s87, %s101
      %p103 = scmp.eq.s32.totalorder %s35, 0
      %p104 = por %p102, %p103
      %s106 = sadd.s32 %s105, 1
      %p109 = scmp.eq.s32.totalorder %s29, 1
      %p110 = scmp.ne.s32.totalorder %s105, %s107
      %p111 = scmp.eq.s32.totalorder %s29, 0
      %p112 = por %p110, %p111
      %p113 = scmp.ne.s32.totalorder %s105, %s107
      %p114 = scmp.eq.s32.totalorder %s34, 1
      %p115 = por %p113, %p114
      %p116 = scmp.ne.s32.totalorder %s107, %s108
      %p117 = scmp.eq.s32.totalorder %s34, 0
      %p118 = por %p116, %p117
      %p119 = scmp.ne.s32.totalorder %s107, %s108
      %p120 = scmp.eq.s32.totalorder %s35, 1
      %p121 = por %p119, %p120
      %p123 = scmp.ne.s32.totalorder %s108, %s122
      %p124 = scmp.eq.s32.totalorder %s35, 0
      %p125 = por %p123, %p124
      %s127 = sadd.s32 %s126, 1
      %p130 = scmp.eq.s32.totalorder %s29, 1
      %p131 = scmp.ne.s32.totalorder %s126, %s128
      %p132 = scmp.eq.s32.totalorder %s29, 0
      %p133 = por %p131, %p132
      %p134 = scmp.ne.s32.totalorder %s126, %s128
      %p135 = scmp.eq.s32.totalorder %s34, 1
      %p136 = por %p134, %p135
      %p137 = scmp.ne.s32.totalorder %s128, %s129
      %p138 = scmp.eq.s32.totalorder %s34, 0
      %p139 = por %p137, %p138
      %p140 = scmp.ne.s32.totalorder %s128, %s129
      %p141 = scmp.eq.s32.totalorder %s35, 1
      %p142 = por %p140, %p141
      %p144 = scmp.ne.s32.totalorder %s129, %s143
      %p145 = scmp.eq.s32.totalorder %s35, 0
      %p146 = por %p144, %p145
      %s148 = sadd.s32 %s147, 1
      %p151 = scmp.eq.s32.totalorder %s29, 1
      %p152 = scmp.ne.s32.totalorder %s147, %s149
      %p153 = scmp.eq.s32.totalorder %s29, 0
      %p154 = por %p152, %p153
      %p155 = scmp.ne.s32.totalorder %s147, %s149
      %p156 = scmp.eq.s32.totalorder %s34, 1
      %p157 = por %p155, %p156
      %p158 = scmp.ne.s32.totalorder %s149, %s150
      %p159 = scmp.eq.s32.totalorder %s34, 0
      %p160 = por %p158, %p159
      %p161 = scmp.ne.s32.totalorder %s149, %s150
      %p162 = scmp.eq.s32.totalorder %s35, 1
      %p163 = por %p161, %p162
      %p165 = scmp.ne.s32.totalorder %s150, %s164
      %p166 = scmp.eq.s32.totalorder %s35, 0
      %p167 = por %p165, %p166
      %s169 = sadd.s32 %s168, 1
      %p172 = scmp.eq.s32.totalorder %s29, 1
      %p173 = scmp.ne.s32.totalorder %s168, %s170
      %p174 = scmp.eq.s32.totalorder %s29, 0
      %p175 = por %p173, %p174
      %p176 = scmp.ne.s32.totalorder %s168, %s170
      %p177 = scmp.eq.s32.totalorder %s34, 1
      %p178 = por %p176, %p177
      %p179 = scmp.ne.s32.totalorder %s170, %s171
      %p180 = scmp.eq.s32.totalorder %s34, 0
      %p181 = por %p179, %p180
      %p182 = scmp.ne.s32.totalorder %s170, %s171
      %p183 = scmp.eq.s32.totalorder %s35, 1
      %p184 = por %p182, %p183
      %p186 = scmp.ne.s32.totalorder %s171, %s185
      %p187 = scmp.eq.s32.totalorder %s35, 0
      %p188 = por %p186, %p187
      %s190 = sadd.s32 %s189, 1
      %p193 = scmp.eq.s32.totalorder %s29, 1
      %p194 = scmp.ne.s32.totalorder %s189, %s191
      %p195 = scmp.eq.s32.totalorder %s29, 0
      %p196 = por %p194, %p195
      %p197 = scmp.ne.s32.totalorder %s189, %s191
      %p198 = scmp.eq.s32.totalorder %s34, 1
      %p199 = por %p197, %p198
      %p200 = scmp.ne.s32.totalorder %s191, %s192
      %p201 = scmp.eq.s32.totalorder %s34, 0
      %p202 = por %p200, %p201
      %p203 = scmp.ne.s32.totalorder %s191, %s192
      %p204 = scmp.eq.s32.totalorder %s35, 1
      %p205 = por %p203, %p204
      %p207 = scmp.ne.s32.totalorder %s192, %s206
      %p208 = scmp.eq.s32.totalorder %s35, 0
      %p209 = por %p207, %p208
      %s211 = sadd.s32 %s210, 1
      %p214 = scmp.eq.s32.totalorder %s29, 1
      %p215 = scmp.ne.s32.totalorder %s210, %s212
      %p216 = scmp.eq.s32.totalorder %s29, 0
      %p217 = por %p215, %p216
      %p218 = scmp.ne.s32.totalorder %s210, %s212
      %p219 = scmp.eq.s32.totalorder %s34, 1
      %p220 = por %p218, %p219
      %p221 = scmp.ne.s32.totalorder %s212, %s213
      %p222 = scmp.eq.s32.totalorder %s34, 0
      %p223 = por %p221, %p222
      %p224 = scmp.ne.s32.totalorder %s212, %s213
      %p225 = scmp.eq.s32.totalorder %s35, 1
      %p226 = por %p224, %p225
      %p228 = scmp.ne.s32.totalorder %s213, %s227
      %p229 = scmp.eq.s32.totalorder %s35, 0
      %p230 = por %p228, %p229
      %s232 = sadd.s32 %s231, 1
      %p235 = scmp.eq.s32.totalorder %s29, 1
      %p236 = scmp.ne.s32.totalorder %s231, %s233
      %p237 = scmp.eq.s32.totalorder %s29, 0
      %p238 = por %p236, %p237
      %p239 = scmp.ne.s32.totalorder %s231, %s233
      %p240 = scmp.eq.s32.totalorder %s34, 1
      %p241 = por %p239, %p240
      %p242 = scmp.ne.s32.totalorder %s233, %s234
      %p243 = scmp.eq.s32.totalorder %s34, 0
      %p244 = por %p242, %p243
      %p245 = scmp.ne.s32.totalorder %s233, %s234
      %p246 = scmp.eq.s32.totalorder %s35, 1
      %p247 = por %p245, %p246
      %p249 = scmp.ne.s32.totalorder %s234, %s248
      %p250 = scmp.eq.s32.totalorder %s35, 0
      %p251 = por %p249, %p250
      %s253 = sadd.s32 %s252, 1
      %p256 = scmp.eq.s32.totalorder %s29, 1
      %p257 = scmp.ne.s32.totalorder %s252, %s254
      %p258 = scmp.eq.s32.totalorder %s29, 0
      %p259 = por %p257, %p258
      %p260 = scmp.ne.s32.totalorder %s252, %s254
      %p261 = scmp.eq.s32.totalorder %s34, 1
      %p262 = por %p260, %p261
      %p263 = scmp.ne.s32.totalorder %s254, %s255
      %p264 = scmp.eq.s32.totalorder %s34, 0
      %p265 = por %p263, %p264
      %p266 = scmp.ne.s32.totalorder %s254, %s255
      %p267 = scmp.eq.s32.totalorder %s35, 1
      %p268 = por %p266, %p267
      %p270 = scmp.ne.s32.totalorder %s255, %s269
      %p271 = scmp.eq.s32.totalorder %s35, 0
      %p272 = por %p270, %p271
      %s274 = sadd.s32 %s273, 1
      %p277 = scmp.eq.s32.totalorder %s29, 1
      %p278 = scmp.ne.s32.totalorder %s273, %s275
      %p279 = scmp.eq.s32.totalorder %s29, 0
      %p280 = por %p278, %p279
      %p281 = scmp.ne.s32.totalorder %s273, %s275
      %p282 = scmp.eq.s32.totalorder %s34, 1
      %p283 = por %p281, %p282
      %p284 = scmp.ne.s32.totalorder %s275, %s276
      %p285 = scmp.eq.s32.totalorder %s34, 0
      %p286 = por %p284, %p285
      %p287 = scmp.ne.s32.totalorder %s275, %s276
      %p288 = scmp.eq.s32.totalorder %s35, 1
      %p289 = por %p287, %p288
      %p291 = scmp.ne.s32.totalorder %s276, %s290
      %p292 = scmp.eq.s32.totalorder %s35, 0
      %p293 = por %p291, %p292
      %s295 = sadd.s32 %s294, 1
      %p298 = scmp.eq.s32.totalorder %s29, 1
      %p299 = scmp.ne.s32.totalorder %s294, %s296
      %p300 = scmp.eq.s32.totalorder %s29, 0
      %p301 = por %p299, %p300
      %p302 = scmp.ne.s32.totalorder %s294, %s296
      %p303 = scmp.eq.s32.totalorder %s34, 1
      %p304 = por %p302, %p303
      %p305 = scmp.ne.s32.totalorder %s296, %s297
      %p306 = scmp.eq.s32.totalorder %s34, 0
      %p307 = por %p305, %p306
      %p308 = scmp.ne.s32.totalorder %s296, %s297
      %p309 = scmp.eq.s32.totalorder %s35, 1
      %p310 = por %p308, %p309
      %p312 = scmp.ne.s32.totalorder %s297, %s311
      %p313 = scmp.eq.s32.totalorder %s35, 0
      %p314 = por %p312, %p313
      %s315 = ssub.s32 %s29, %s36
      %p316 = scmp.eq.s32.totalorder %s315, 0
      %s318 = sadd.s32 %s317, 1
      %s319 = scalar_select %p316, %s317, %s318
      %p322 = pneg %p316
      %p323 = scmp.eq.s32.totalorder %s29, 1
      %p324 = por %p322, %p323
      %p325 = scmp.ne.s32.totalorder %s317, %s320
      %p326 = scmp.eq.s32.totalorder %s29, 0
      %p327 = por %p325, %p326
      %p328 = scmp.ne.s32.totalorder %s317, %s320
      %p329 = scmp.eq.s32.totalorder %s34, 1
      %p330 = por %p328, %p329
      %p331 = scmp.ne.s32.totalorder %s320, %s321
      %p332 = scmp.eq.s32.totalorder %s34, 0
      %p333 = por %p331, %p332
      %p334 = scmp.ne.s32.totalorder %s320, %s321
      %p335 = scmp.eq.s32.totalorder %s35, 1
      %p336 = por %p334, %p335
      %p338 = scmp.ne.s32.totalorder %s321, %s337
      %p339 = scmp.eq.s32.totalorder %s35, 0
      %p340 = por %p338, %p339
      %p341 = scmp.le.s32.totalorder 1, %s29
      %p342 = scmp.lt.s32.totalorder %s29, 3
      %p343 = pnand %p341, %p342
      %p344 = pneg %p343
      // Predicated region
      $region9: #{tpu_custom_call.1} parent=5 // pred_check
        _
      $region10: #{tpu_custom_call.1} parent=5 // pred_check_branch
        %346 = sbr.rel (%p343) target = $region12
      $region11: #{tpu_custom_call.1} parent=5 // pred_region
        %s347 = ssub.s32 %s29, 1
        // Predicated region
        $region13: #{tpu_custom_call.1} parent=11 // pred_check
          %p348 = pneg %p76
        $region14: #{tpu_custom_call.1} parent=11 // pred_check_branch
          %350 = sbr.rel (%p348) target = $region16
        $region15: #{tpu_custom_call.1} parent=11 // pred_region
          %s352 = ssub.s32 1024, 1024
          %353 = vsyncadd [#allocation6], %s352
          %s354 = sshll.u32 [#allocation5], 4
          %s355 = int_to_ptr.vmem [resolvable:$true] %s354
          %360 = dma.hbm_to_vmem [thread:$0]  %s1, 1024, %s355, [#allocation6], 64, 64, 4
        $region16: #{tpu_custom_call.1} parent=11 // pred_fallthru
          _
        // Predicated region
        $region17: #{tpu_custom_call.1} parent=11 // pred_check
          %p361 = pneg %p97
        $region18: #{tpu_custom_call.1} parent=11 // pred_check_branch
          %363 = sbr.rel (%p361) target = $region20
        $region19: #{tpu_custom_call.1} parent=11 // pred_region
          %s365 = ssub.s32 16, 16
          %366 = vsyncadd [#allocation6], %s365
          %s368 = sshll.u32 [#allocation7], 4
          %s369 = int_to_ptr.vmem [resolvable:$true] %s368
          %371 = dma.hbm_to_vmem [thread:$0]  %s2, 16, %s369, [#allocation6]
        $region20: #{tpu_custom_call.1} parent=11 // pred_fallthru
          _
        // Predicated region
        $region21: #{tpu_custom_call.1} parent=11 // pred_check
          %p372 = pneg %p118
        $region22: #{tpu_custom_call.1} parent=11 // pred_check_branch
          %374 = sbr.rel (%p372) target = $region24
        $region23: #{tpu_custom_call.1} parent=11 // pred_region
          %s376 = ssub.s32 16, 16
          %377 = vsyncadd [#allocation9], %s376
          %s379 = sshll.u32 [#allocation8], 4
          %s380 = int_to_ptr.vmem [resolvable:$true] %s379
          %382 = dma.hbm_to_vmem [thread:$0]  %s3, 16, %s380, [#allocation9]
        $region24: #{tpu_custom_call.1} parent=11 // pred_fallthru
          _
        // Predicated region
        $region25: #{tpu_custom_call.1} parent=11 // pred_check
          %p383 = pneg %p139
        $region26: #{tpu_custom_call.1} parent=11 // pred_check_branch
          %385 = sbr.rel (%p383) target = $region28
        $region27: #{tpu_custom_call.1} parent=11 // pred_region
          %s387 = ssub.s32 1024, 1024
          %388 = vsyncadd [#allocation9], %s387
          %s389 = sshll.u32 [#allocation10], 4
          %s390 = int_to_ptr.vmem [resolvable:$true] %s389
          %395 = dma.hbm_to_vmem [thread:$0]  %s4, 1024, %s390, [#allocation9], 64, 64, 4
        $region28: #{tpu_custom_call.1} parent=11 // pred_fallthru
          _
        // Predicated region
        $region29: #{tpu_custom_call.1} parent=11 // pred_check
          %p396 = pneg %p160
        $region30: #{tpu_custom_call.1} parent=11 // pred_check_branch
          %398 = sbr.rel (%p396) target = $region32
        $region31: #{tpu_custom_call.1} parent=11 // pred_region
          %s400 = ssub.s32 16, 16
          %401 = vsyncadd [#allocation12], %s400
          %s403 = sshll.u32 [#allocation11], 4
          %s404 = int_to_ptr.vmem [resolvable:$true] %s403
          %406 = dma.hbm_to_vmem [thread:$0]  %s5, 16, %s404, [#allocation12]
        $region32: #{tpu_custom_call.1} parent=11 // pred_fallthru
          _
        // Predicated region
        $region33: #{tpu_custom_call.1} parent=11 // pred_check
          %p407 = pneg %p181
        $region34: #{tpu_custom_call.1} parent=11 // pred_check_branch
          %409 = sbr.rel (%p407) target = $region36
        $region35: #{tpu_custom_call.1} parent=11 // pred_region
          %s411 = ssub.s32 16, 16
          %412 = vsyncadd [#allocation12], %s411
          %s414 = sshll.u32 [#allocation13], 4
          %s415 = int_to_ptr.vmem [resolvable:$true] %s414
          %417 = dma.hbm_to_vmem [thread:$0]  %s6, 16, %s415, [#allocation12]
        $region36: #{tpu_custom_call.1} parent=11 // pred_fallthru
          _
        // Predicated region
        $region37: #{tpu_custom_call.1} parent=11 // pred_check
          %p418 = pneg %p202
        $region38: #{tpu_custom_call.1} parent=11 // pred_check_branch
          %420 = sbr.rel (%p418) target = $region40
        $region39: #{tpu_custom_call.1} parent=11 // pred_region
          %s422 = ssub.s32 8192, 8192
          %423 = vsyncadd [#allocation15], %s422
          %s424 = sshll.u32 [#allocation14], 4
          %s425 = int_to_ptr.vmem [resolvable:$true] %s424
          %430 = dma.hbm_to_vmem [thread:$0]  %s7, 8192, %s425, [#allocation15], 128, 128, 8
        $region40: #{tpu_custom_call.1} parent=11 // pred_fallthru
          _
        // Predicated region
        $region41: #{tpu_custom_call.1} parent=11 // pred_check
          %p431 = pneg %p223
        $region42: #{tpu_custom_call.1} parent=11 // pred_check_branch
          %433 = sbr.rel (%p431) target = $region44
        $region43: #{tpu_custom_call.1} parent=11 // pred_region
          _
        $region44: #{tpu_custom_call.1} parent=11 // pred_fallthru
          _
        // Predicated region
        $region45: #{tpu_custom_call.1} parent=11 // pred_check
          %p434 = pneg %p244
        $region46: #{tpu_custom_call.1} parent=11 // pred_check_branch
          %436 = sbr.rel (%p434) target = $region48
        $region47: #{tpu_custom_call.1} parent=11 // pred_region
          %s438 = ssub.s32 4096, 4096
          %439 = vsyncadd [#allocation15], %s438
          %s440 = sshll.u32 [#allocation16], 4
          %s441 = int_to_ptr.vmem [resolvable:$true] %s440
          %446 = dma.hbm_to_vmem [thread:$0]  %s9, 4096, %s441, [#allocation15], 64, 64, 4
        $region48: #{tpu_custom_call.1} parent=11 // pred_fallthru
          _
        // Predicated region
        $region49: #{tpu_custom_call.1} parent=11 // pred_check
          %p447 = pneg %p265
        $region50: #{tpu_custom_call.1} parent=11 // pred_check_branch
          %449 = sbr.rel (%p447) target = $region52
        $region51: #{tpu_custom_call.1} parent=11 // pred_region
          _
        $region52: #{tpu_custom_call.1} parent=11 // pred_fallthru
          _
        // Predicated region
        $region53: #{tpu_custom_call.1} parent=11 // pred_check
          %p450 = pneg %p286
        $region54: #{tpu_custom_call.1} parent=11 // pred_check_branch
          %452 = sbr.rel (%p450) target = $region56
        $region55: #{tpu_custom_call.1} parent=11 // pred_region
          _
        $region56: #{tpu_custom_call.1} parent=11 // pred_fallthru
          _
        // Predicated region
        $region57: #{tpu_custom_call.1} parent=11 // pred_check
          %p453 = pneg %p307
        $region58: #{tpu_custom_call.1} parent=11 // pred_check_branch
          %455 = sbr.rel (%p453) target = $region60
        $region59: #{tpu_custom_call.1} parent=11 // pred_region
          _
        $region60: #{tpu_custom_call.1} parent=11 // pred_fallthru
          _
      $region12: #{tpu_custom_call.1} parent=5 // pred_fallthru
        _
      %p456 = scmp.lt.s32.totalorder %s29, 2
      // Predicated region
      $region61: #{tpu_custom_call.1} parent=5 // pred_check
        %p457 = pneg %p456
      $region62: #{tpu_custom_call.1} parent=5 // pred_check_branch
        %459 = sbr.rel (%p457) target = $region64
      $region63: #{tpu_custom_call.1} parent=5 // pred_region
        // Predicated region
        $region65: #{tpu_custom_call.1} parent=63 // pred_check
          %p460 = pneg %p49
        $region66: #{tpu_custom_call.1} parent=63 // pred_check_branch
          %462 = sbr.rel (%p460) target = $region68
        $region67: #{tpu_custom_call.1} parent=63 // pred_region
          %s463 = sand.u32 %s39, 1
          %s464 = scalar_lea.sflag [#allocation3], %s463
          %s465 = sand.u32 %s39, 1
          %s466 = smul.addr %s465, 64
          %s467 = scalar_lea.vmem [#allocation2], %s466
          %s469 = ssub.s32 1024, 1024
          %470 = vsyncadd %s464, %s469
          %s471 = smul.addr %s29, 16
          %s472 = smul.addr %s471, 64
          %s473 = scalar_lea.hbm %s0, %s472
          %s474 = sshll.u32 %s467, 4
          %s475 = int_to_ptr.vmem [resolvable:$true] %s474
          %480 = dma.hbm_to_vmem [thread:$0]  %s473, 1024, %s475, %s464, 64, 64, 4
        $region68: #{tpu_custom_call.1} parent=63 // pred_fallthru
          _
      $region64: #{tpu_custom_call.1} parent=5 // pred_fallthru
        _
      %p481 = scmp.le.s32.totalorder 1, %s29
      %p482 = scmp.lt.s32.totalorder %s29, 3
      %p483 = pnand %p481, %p482
      %p484 = pneg %p483
      // Predicated region
      $region69: #{tpu_custom_call.1} parent=5 // pred_check
        _
      $region70: #{tpu_custom_call.1} parent=5 // pred_check_branch
        %486 = sbr.rel (%p483) target = $region72
      $region71: #{tpu_custom_call.1} parent=5 // pred_region
        %s487 = ssub.s32 %s29, 1
        %s488 = sand.u32 %s42, 1
        %s489 = scalar_lea.sflag [#allocation3], %s488
        %s490 = sand.u32 %s42, 1
        %s491 = smul.addr %s490, 64
        %s492 = scalar_lea.vmem [#allocation2], %s491
        // Predicated region
        $region73: #{tpu_custom_call.1} parent=71 // pred_check
          %p493 = pneg %p55
        $region74: #{tpu_custom_call.1} parent=71 // pred_check_branch
          %495 = sbr.rel (%p493) target = $region76
        $region75: #{tpu_custom_call.1} parent=71 // pred_region
          %496 = dma.done %s489, 1024
        $region76: #{tpu_custom_call.1} parent=71 // pred_fallthru
          _
        // Predicated region
        $region77: #{tpu_custom_call.1} parent=71 // pred_check
          %p497 = pneg %p76
        $region78: #{tpu_custom_call.1} parent=71 // pred_check_branch
          %499 = sbr.rel (%p497) target = $region80
        $region79: #{tpu_custom_call.1} parent=71 // pred_region
          %500 = dma.done [#allocation6], 1024
        $region80: #{tpu_custom_call.1} parent=71 // pred_fallthru
          _
        // Predicated region
        $region81: #{tpu_custom_call.1} parent=71 // pred_check
          %p501 = pneg %p97
        $region82: #{tpu_custom_call.1} parent=71 // pred_check_branch
          %503 = sbr.rel (%p501) target = $region84
        $region83: #{tpu_custom_call.1} parent=71 // pred_region
          %504 = dma.done [#allocation6], 16
        $region84: #{tpu_custom_call.1} parent=71 // pred_fallthru
          _
        // Predicated region
        $region85: #{tpu_custom_call.1} parent=71 // pred_check
          %p505 = pneg %p118
        $region86: #{tpu_custom_call.1} parent=71 // pred_check_branch
          %507 = sbr.rel (%p505) target = $region88
        $region87: #{tpu_custom_call.1} parent=71 // pred_region
          %508 = dma.done [#allocation9], 16
        $region88: #{tpu_custom_call.1} parent=71 // pred_fallthru
          _
        // Predicated region
        $region89: #{tpu_custom_call.1} parent=71 // pred_check
          %p509 = pneg %p139
        $region90: #{tpu_custom_call.1} parent=71 // pred_check_branch
          %511 = sbr.rel (%p509) target = $region92
        $region91: #{tpu_custom_call.1} parent=71 // pred_region
          %512 = dma.done [#allocation9], 1024
        $region92: #{tpu_custom_call.1} parent=71 // pred_fallthru
          _
        // Predicated region
        $region93: #{tpu_custom_call.1} parent=71 // pred_check
          %p513 = pneg %p160
        $region94: #{tpu_custom_call.1} parent=71 // pred_check_branch
          %515 = sbr.rel (%p513) target = $region96
        $region95: #{tpu_custom_call.1} parent=71 // pred_region
          %516 = dma.done [#allocation12], 16
        $region96: #{tpu_custom_call.1} parent=71 // pred_fallthru
          _
        // Predicated region
        $region97: #{tpu_custom_call.1} parent=71 // pred_check
          %p517 = pneg %p181
        $region98: #{tpu_custom_call.1} parent=71 // pred_check_branch
          %519 = sbr.rel (%p517) target = $region100
        $region99: #{tpu_custom_call.1} parent=71 // pred_region
          %520 = dma.done [#allocation12], 16
        $region100: #{tpu_custom_call.1} parent=71 // pred_fallthru
          _
        // Predicated region
        $region101: #{tpu_custom_call.1} parent=71 // pred_check
          %p521 = pneg %p202
        $region102: #{tpu_custom_call.1} parent=71 // pred_check_branch
          %523 = sbr.rel (%p521) target = $region104
        $region103: #{tpu_custom_call.1} parent=71 // pred_region
          %524 = dma.done [#allocation15], 8192
        $region104: #{tpu_custom_call.1} parent=71 // pred_fallthru
          _
        // Predicated region
        $region105: #{tpu_custom_call.1} parent=71 // pred_check
          %p525 = pneg %p244
        $region106: #{tpu_custom_call.1} parent=71 // pred_check_branch
          %527 = sbr.rel (%p525) target = $region108
        $region107: #{tpu_custom_call.1} parent=71 // pred_region
          %528 = dma.done [#allocation15], 4096
        $region108: #{tpu_custom_call.1} parent=71 // pred_fallthru
          _
        %s529 = sand.u32 %s42, 1
        %s530 = scalar_lea.sflag [#allocation3], %s529
        %s531 = sand.u32 %s42, 1
        %s532 = smul.addr %s531, 64
        %s533 = scalar_lea.vmem [#allocation2], %s532
        %p534 = pneg %p55
        %p535 = pneg %p52
        %p536 = pneg %p76
        %p537 = pneg %p73
        %p538 = pneg %p97
        %p539 = pneg %p94
        %p540 = pneg %p118
        %p541 = pneg %p115
        %p542 = pneg %p139
        %p543 = pneg %p136
        %p544 = pneg %p160
        %p545 = pneg %p157
        %p546 = pneg %p181
        %p547 = pneg %p178
        %p548 = pneg %p202
        %p549 = pneg %p199
        %p550 = pneg %p223
        %p551 = pneg %p220
        %p552 = pneg %p244
        %p553 = pneg %p241
        %p554 = pneg %p265
        %p555 = pneg %p262
        %p556 = pneg %p286
        %p557 = pneg %p283
        %p558 = pneg %p307
        %p559 = pneg %p304
        %p560 = pneg %p333
        %p561 = pneg %p330
        %s562 = sand.u32 %s320, 1
        %s563 = scalar_lea.sflag [#allocation4], %s562
        %s564 = sand.u32 %s320, 1
        %s565 = smul.addr %s564, 512
        %s566 = scalar_lea.vmem [#allocation17], %s565
        %v568 = vld [vmem:[%s492] sm:$0xf]
        %v569 = vld [vmem:[%s492 + $0x4] sm:$0xf]
        %v570 = vld [vmem:[%s492 + $0x8] sm:$0xf]
        %v571 = vld [vmem:[%s492 + $0xc] sm:$0xf]
        %v572 = vld [vmem:[%s492 + $0x10] sm:$0xf]
        %v573 = vld [vmem:[%s492 + $0x14] sm:$0xf]
        %v574 = vld [vmem:[%s492 + $0x18] sm:$0xf]
        %v575 = vld [vmem:[%s492 + $0x1c] sm:$0xf]
        %v576 = vld [vmem:[%s492 + $0x20] sm:$0xf]
        %v577 = vld [vmem:[%s492 + $0x24] sm:$0xf]
        %v578 = vld [vmem:[%s492 + $0x28] sm:$0xf]
        %v579 = vld [vmem:[%s492 + $0x2c] sm:$0xf]
        %v580 = vld [vmem:[%s492 + $0x30] sm:$0xf]
        %v581 = vld [vmem:[%s492 + $0x34] sm:$0xf]
        %v582 = vld [vmem:[%s492 + $0x38] sm:$0xf]
        %v583 = vld [vmem:[%s492 + $0x3c] sm:$0xf]
        %v584 = vld [vmem:[#allocation5] sm:$0xf]
        %v585 = vld [vmem:[#allocation5 + $0x4] sm:$0xf]
        %v586 = vld [vmem:[#allocation5 + $0x8] sm:$0xf]
        %v587 = vld [vmem:[#allocation5 + $0xc] sm:$0xf]
        %v588 = vld [vmem:[#allocation5 + $0x10] sm:$0xf]
        %v589 = vld [vmem:[#allocation5 + $0x14] sm:$0xf]
        %v590 = vld [vmem:[#allocation5 + $0x18] sm:$0xf]
        %v591 = vld [vmem:[#allocation5 + $0x1c] sm:$0xf]
        %v592 = vld [vmem:[#allocation5 + $0x20] sm:$0xf]
        %v593 = vld [vmem:[#allocation5 + $0x24] sm:$0xf]
        %v594 = vld [vmem:[#allocation5 + $0x28] sm:$0xf]
        %v595 = vld [vmem:[#allocation5 + $0x2c] sm:$0xf]
        %v596 = vld [vmem:[#allocation5 + $0x30] sm:$0xf]
        %v597 = vld [vmem:[#allocation5 + $0x34] sm:$0xf]
        %v598 = vld [vmem:[#allocation5 + $0x38] sm:$0xf]
        %v599 = vld [vmem:[#allocation5 + $0x3c] sm:$0xf]
        %v616 = vunpack.c.l.b16 %v568
        %v617 = vunpack.c.l.b16 %v569
        %v618 = vunpack.c.l.b16 %v570
        %v619 = vunpack.c.l.b16 %v571
        %v620 = vunpack.c.l.b16 %v572
        %v621 = vunpack.c.l.b16 %v573
        %v622 = vunpack.c.l.b16 %v574
        %v623 = vunpack.c.l.b16 %v575
        %v624 = vunpack.c.l.b16 %v576
        %v625 = vunpack.c.l.b16 %v577
        %v626 = vunpack.c.l.b16 %v578
        %v627 = vunpack.c.l.b16 %v579
        %v628 = vunpack.c.l.b16 %v580
        %v629 = vunpack.c.l.b16 %v581
        %v630 = vunpack.c.l.b16 %v582
        %v631 = vunpack.c.l.b16 %v583
        %v632 = vpack.c.b16 %v617, %v616
        %v633 = vpack.c.b16 %v619, %v618
        %v634 = vpack.c.b16 %v621, %v620
        %v635 = vpack.c.b16 %v623, %v622
        %v636 = vpack.c.b16 %v625, %v624
        %v637 = vpack.c.b16 %v627, %v626
        %v638 = vpack.c.b16 %v629, %v628
        %v639 = vpack.c.b16 %v631, %v630
        %v664 = vunpack.c.l.b16 %v584
        %v665 = vunpack.c.l.b16 %v585
        %v666 = vunpack.c.l.b16 %v586
        %v667 = vunpack.c.l.b16 %v587
        %v668 = vunpack.c.l.b16 %v588
        %v669 = vunpack.c.l.b16 %v589
        %v670 = vunpack.c.l.b16 %v590
        %v671 = vunpack.c.l.b16 %v591
        %v672 = vunpack.c.l.b16 %v592
        %v673 = vunpack.c.l.b16 %v593
        %v674 = vunpack.c.l.b16 %v594
        %v675 = vunpack.c.l.b16 %v595
        %v676 = vunpack.c.l.b16 %v596
        %v677 = vunpack.c.l.b16 %v597
        %v678 = vunpack.c.l.b16 %v598
        %v679 = vunpack.c.l.b16 %v599
        %v680 = vpack.c.b16 %v665, %v664
        %v681 = vpack.c.b16 %v667, %v666
        %v682 = vpack.c.b16 %v669, %v668
        %v683 = vpack.c.b16 %v671, %v670
        %v684 = vpack.c.b16 %v673, %v672
        %v685 = vpack.c.b16 %v675, %v674
        %v686 = vpack.c.b16 %v677, %v676
        %v687 = vpack.c.b16 %v679, %v678
        %696 = vmatprep.subr.bf16.mxu0 0
        %697 = vmatpush1.bf16.msra.mxu0 %v687
        %698 = vmatprep.subr.bf16.mxu0 0
        %699 = vmatpush1.bf16.msra.mxu0 %v686
        %700 = vmatprep.subr.bf16.mxu0 0
        %701 = vmatpush1.bf16.msra.mxu0 %v685
        %702 = vmatprep.subr.bf16.mxu0 0
        %703 = vmatpush1.bf16.msra.mxu0 %v684
        %704 = vmatprep.subr.bf16.mxu0 0
        %705 = vmatpush1.bf16.msra.mxu0 %v683
        %706 = vmatprep.subr.bf16.mxu0 0
        %707 = vmatpush1.bf16.msra.mxu0 %v682
        %708 = vmatprep.subr.bf16.mxu0 0
        %709 = vmatpush1.bf16.msra.mxu0 %v681
        %710 = vmatprep.subr.bf16.mxu0 0
        %711 = vmatpush1.bf16.msra.mxu0 %v680
        %712 = vmatprep.subr.bf16.mxu0 0
        %713 = vmatpush2.bf16.msra.mxu0 0
        %714 = vmatprep.subr.bf16.mxu0 0
        %715 = vmatpush2.bf16.msra.mxu0 0
        %716 = vmatprep.subr.bf16.mxu0 0
        %717 = vmatpush2.bf16.msra.mxu0 0
        %718 = vmatprep.subr.bf16.mxu0 0
        %719 = vmatpush2.bf16.msra.mxu0 0
        %720 = vmatprep.subr.bf16.mxu0 0
        %721 = vmatpush2.bf16.msra.mxu0 0
        %722 = vmatprep.subr.bf16.mxu0 0
        %723 = vmatpush2.bf16.msra.mxu0 0
        %724 = vmatprep.subr.bf16.mxu0 0
        %725 = vmatpush2.bf16.msra.mxu0 0
        %726 = vmatprep.subr.bf16.mxu0 0
        %727 = vmatpush2.bf16.msra.mxu0 0
        %728 = vmatprep.mubr.bf16.mxu0 0
        %729 = vmatmul.mubr.bf16.gmra.mxu0 %v632
        %v730 = vpop.f32.mrf.mxu0
        %v731 = vadd.f32 0.0, %v730
        %v732 = vpop.f32.mrf.mxu0
        %v733 = vpop.f32.mrf.mxu0
        %v734 = vadd.f32 0.0, %v733
        %v735 = vpop.f32.mrf.mxu0
        %736 = vmatprep.mubr.bf16.mxu0 0
        %737 = vmatmul.mubr.bf16.gmra.mxu0 %v633
        %v738 = vpop.f32.mrf.mxu0
        %v739 = vadd.f32 0.0, %v738
        %v740 = vpop.f32.mrf.mxu0
        %v741 = vpop.f32.mrf.mxu0
        %v742 = vadd.f32 0.0, %v741
        %v743 = vpop.f32.mrf.mxu0
        %744 = vmatprep.mubr.bf16.mxu0 0
        %745 = vmatmul.mubr.bf16.gmra.mxu0 %v634
        %v746 = vpop.f32.mrf.mxu0
        %v747 = vadd.f32 0.0, %v746
        %v748 = vpop.f32.mrf.mxu0
        %v749 = vpop.f32.mrf.mxu0
        %v750 = vadd.f32 0.0, %v749
        %v751 = vpop.f32.mrf.mxu0
        %752 = vmatprep.mubr.bf16.mxu0 0
        %753 = vmatmul.mubr.bf16.gmra.mxu0 %v635
        %v754 = vpop.f32.mrf.mxu0
        %v755 = vadd.f32 0.0, %v754
        %v756 = vpop.f32.mrf.mxu0
        %v757 = vpop.f32.mrf.mxu0
        %v758 = vadd.f32 0.0, %v757
        %v759 = vpop.f32.mrf.mxu0
        %760 = vmatprep.mubr.bf16.mxu0 0
        %761 = vmatmul.mubr.bf16.gmra.mxu0 %v636
        %v762 = vpop.f32.mrf.mxu0
        %v763 = vadd.f32 0.0, %v762
        %v764 = vpop.f32.mrf.mxu0
        %v765 = vpop.f32.mrf.mxu0
        %v766 = vadd.f32 0.0, %v765
        %v767 = vpop.f32.mrf.mxu0
        %768 = vmatprep.mubr.bf16.mxu0 0
        %769 = vmatmul.mubr.bf16.gmra.mxu0 %v637
        %v770 = vpop.f32.mrf.mxu0
        %v771 = vadd.f32 0.0, %v770
        %v772 = vpop.f32.mrf.mxu0
        %v773 = vpop.f32.mrf.mxu0
        %v774 = vadd.f32 0.0, %v773
        %v775 = vpop.f32.mrf.mxu0
        %776 = vmatprep.mubr.bf16.mxu0 0
        %777 = vmatmul.mubr.bf16.gmra.mxu0 %v638
        %v778 = vpop.f32.mrf.mxu0
        %v779 = vadd.f32 0.0, %v778
        %v780 = vpop.f32.mrf.mxu0
        %v781 = vpop.f32.mrf.mxu0
        %v782 = vadd.f32 0.0, %v781
        %v783 = vpop.f32.mrf.mxu0
        %784 = vmatprep.mubr.bf16.mxu0 0
        %785 = vmatmul.mubr.bf16.gmra.mxu0 %v639
        %v786 = vpop.f32.mrf.mxu0
        %v787 = vadd.f32 0.0, %v786
        %v788 = vpop.f32.mrf.mxu0
        %v789 = vpop.f32.mrf.mxu0
        %v790 = vadd.f32 0.0, %v789
        %v791 = vpop.f32.mrf.mxu0
        %792 = vdwg.mxu0
        %v793 = vld [vmem:[#allocation7] sm:$0x1]
        %v795 = vlaneseq
        %v796 = vshrl.u32 %v795, 7
        %v797 = vsub.s32 0, %v796
        %v798 = vrot.slane %v793, %v797
        %v800 = vmul.f32 %v731, %v798
        %v801 = vmul.f32 %v734, %v798
        %v802 = vmul.f32 %v739, %v798
        %v803 = vmul.f32 %v742, %v798
        %v804 = vmul.f32 %v747, %v798
        %v805 = vmul.f32 %v750, %v798
        %v806 = vmul.f32 %v755, %v798
        %v807 = vmul.f32 %v758, %v798
        %v808 = vmul.f32 %v763, %v798
        %v809 = vmul.f32 %v766, %v798
        %v810 = vmul.f32 %v771, %v798
        %v811 = vmul.f32 %v774, %v798
        %v812 = vmul.f32 %v779, %v798
        %v813 = vmul.f32 %v782, %v798
        %v814 = vmul.f32 %v787, %v798
        %v815 = vmul.f32 %v790, %v798
        %v816 = vld [vmem:[#allocation8] sm:$0x1]
        %v818 = vlaneseq
        %v819 = vshrl.u32 %v818, 7
        %v820 = vsub.s32 0, %v819
        %v821 = vrot.slane %v816, %v820
        %v823 = vadd.f32 %v800, %v821
        %v824 = vadd.f32 %v801, %v821
        %v825 = vadd.f32 %v802, %v821
        %v826 = vadd.f32 %v803, %v821
        %v827 = vadd.f32 %v804, %v821
        %v828 = vadd.f32 %v805, %v821
        %v829 = vadd.f32 %v806, %v821
        %v830 = vadd.f32 %v807, %v821
        %v831 = vadd.f32 %v808, %v821
        %v832 = vadd.f32 %v809, %v821
        %v833 = vadd.f32 %v810, %v821
        %v834 = vadd.f32 %v811, %v821
        %v835 = vadd.f32 %v812, %v821
        %v836 = vadd.f32 %v813, %v821
        %v837 = vadd.f32 %v814, %v821
        %v838 = vadd.f32 %v815, %v821
        %v839 = vmax.f32 %v823, 0.0
        %v840 = vmax.f32 %v824, 0.0
        %v841 = vmax.f32 %v825, 0.0
        %v842 = vmax.f32 %v826, 0.0
        %v843 = vmax.f32 %v827, 0.0
        %v844 = vmax.f32 %v828, 0.0
        %v845 = vmax.f32 %v829, 0.0
        %v846 = vmax.f32 %v830, 0.0
        %v847 = vmax.f32 %v831, 0.0
        %v848 = vmax.f32 %v832, 0.0
        %v849 = vmax.f32 %v833, 0.0
        %v850 = vmax.f32 %v834, 0.0
        %v851 = vmax.f32 %v835, 0.0
        %v852 = vmax.f32 %v836, 0.0
        %v853 = vmax.f32 %v837, 0.0
        %v854 = vmax.f32 %v838, 0.0
        %v855 = vpack.c.bf16 %v840, %v839
        %v856 = vpack.c.bf16 %v842, %v841
        %v857 = vpack.c.bf16 %v844, %v843
        %v858 = vpack.c.bf16 %v846, %v845
        %v859 = vpack.c.bf16 %v848, %v847
        %v860 = vpack.c.bf16 %v850, %v849
        %v861 = vpack.c.bf16 %v852, %v851
        %v862 = vpack.c.bf16 %v854, %v853
        %v863 = vld [vmem:[#allocation10] sm:$0xf]
        %v864 = vld [vmem:[#allocation10 + $0x4] sm:$0xf]
        %v865 = vld [vmem:[#allocation10 + $0x8] sm:$0xf]
        %v866 = vld [vmem:[#allocation10 + $0xc] sm:$0xf]
        %v867 = vld [vmem:[#allocation10 + $0x10] sm:$0xf]
        %v868 = vld [vmem:[#allocation10 + $0x14] sm:$0xf]
        %v869 = vld [vmem:[#allocation10 + $0x18] sm:$0xf]
        %v870 = vld [vmem:[#allocation10 + $0x1c] sm:$0xf]
        %v871 = vld [vmem:[#allocation10 + $0x20] sm:$0xf]
        %v872 = vld [vmem:[#allocation10 + $0x24] sm:$0xf]
        %v873 = vld [vmem:[#allocation10 + $0x28] sm:$0xf]
        %v874 = vld [vmem:[#allocation10 + $0x2c] sm:$0xf]
        %v875 = vld [vmem:[#allocation10 + $0x30] sm:$0xf]
        %v876 = vld [vmem:[#allocation10 + $0x34] sm:$0xf]
        %v877 = vld [vmem:[#allocation10 + $0x38] sm:$0xf]
        %v878 = vld [vmem:[#allocation10 + $0x3c] sm:$0xf]
        %v895 = vunpack.c.l.b16 %v863
        %v896 = vunpack.c.l.b16 %v864
        %v897 = vunpack.c.l.b16 %v865
        %v898 = vunpack.c.l.b16 %v866
        %v899 = vunpack.c.l.b16 %v867
        %v900 = vunpack.c.l.b16 %v868
        %v901 = vunpack.c.l.b16 %v869
        %v902 = vunpack.c.l.b16 %v870
        %v903 = vunpack.c.l.b16 %v871
        %v904 = vunpack.c.l.b16 %v872
        %v905 = vunpack.c.l.b16 %v873
        %v906 = vunpack.c.l.b16 %v874
        %v907 = vunpack.c.l.b16 %v875
        %v908 = vunpack.c.l.b16 %v876
        %v909 = vunpack.c.l.b16 %v877
        %v910 = vunpack.c.l.b16 %v878
        %v911 = vpack.c.b16 %v896, %v895
        %v912 = vpack.c.b16 %v898, %v897
        %v913 = vpack.c.b16 %v900, %v899
        %v914 = vpack.c.b16 %v902, %v901
        %v915 = vpack.c.b16 %v904, %v903
        %v916 = vpack.c.b16 %v906, %v905
        %v917 = vpack.c.b16 %v908, %v907
        %v918 = vpack.c.b16 %v910, %v909
        %927 = vmatprep.subr.bf16.mxu0 0
        %928 = vmatpush1.bf16.msra.mxu0 %v918
        %929 = vmatprep.subr.bf16.mxu0 0
        %930 = vmatpush1.bf16.msra.mxu0 %v917
        %931 = vmatprep.subr.bf16.mxu0 0
        %932 = vmatpush1.bf16.msra.mxu0 %v916
        %933 = vmatprep.subr.bf16.mxu0 0
        %934 = vmatpush1.bf16.msra.mxu0 %v915
        %935 = vmatprep.subr.bf16.mxu0 0
        %936 = vmatpush1.bf16.msra.mxu0 %v914
        %937 = vmatprep.subr.bf16.mxu0 0
        %938 = vmatpush1.bf16.msra.mxu0 %v913
        %939 = vmatprep.subr.bf16.mxu0 0
        %940 = vmatpush1.bf16.msra.mxu0 %v912
        %941 = vmatprep.subr.bf16.mxu0 0
        %942 = vmatpush1.bf16.msra.mxu0 %v911
        %943 = vmatprep.subr.bf16.mxu0 0
        %944 = vmatpush2.bf16.msra.mxu0 0
        %945 = vmatprep.subr.bf16.mxu0 0
        %946 = vmatpush2.bf16.msra.mxu0 0
        %947 = vmatprep.subr.bf16.mxu0 0
        %948 = vmatpush2.bf16.msra.mxu0 0
        %949 = vmatprep.subr.bf16.mxu0 0
        %950 = vmatpush2.bf16.msra.mxu0 0
        %951 = vmatprep.subr.bf16.mxu0 0
        %952 = vmatpush2.bf16.msra.mxu0 0
        %953 = vmatprep.subr.bf16.mxu0 0
        %954 = vmatpush2.bf16.msra.mxu0 0
        %955 = vmatprep.subr.bf16.mxu0 0
        %956 = vmatpush2.bf16.msra.mxu0 0
        %957 = vmatprep.subr.bf16.mxu0 0
        %958 = vmatpush2.bf16.msra.mxu0 0
        %959 = vmatprep.mubr.bf16.mxu0 0
        %960 = vmatmul.mubr.bf16.gmra.mxu0 %v855
        %v961 = vpop.f32.mrf.mxu0
        %v962 = vadd.f32 0.0, %v961
        %v963 = vpop.f32.mrf.mxu0
        %v964 = vpop.f32.mrf.mxu0
        %v965 = vadd.f32 0.0, %v964
        %v966 = vpop.f32.mrf.mxu0
        %967 = vmatprep.mubr.bf16.mxu0 0
        %968 = vmatmul.mubr.bf16.gmra.mxu0 %v856
        %v969 = vpop.f32.mrf.mxu0
        %v970 = vadd.f32 0.0, %v969
        %v971 = vpop.f32.mrf.mxu0
        %v972 = vpop.f32.mrf.mxu0
        %v973 = vadd.f32 0.0, %v972
        %v974 = vpop.f32.mrf.mxu0
        %975 = vmatprep.mubr.bf16.mxu0 0
        %976 = vmatmul.mubr.bf16.gmra.mxu0 %v857
        %v977 = vpop.f32.mrf.mxu0
        %v978 = vadd.f32 0.0, %v977
        %v979 = vpop.f32.mrf.mxu0
        %v980 = vpop.f32.mrf.mxu0
        %v981 = vadd.f32 0.0, %v980
        %v982 = vpop.f32.mrf.mxu0
        %983 = vmatprep.mubr.bf16.mxu0 0
        %984 = vmatmul.mubr.bf16.gmra.mxu0 %v858
        %v985 = vpop.f32.mrf.mxu0
        %v986 = vadd.f32 0.0, %v985
        %v987 = vpop.f32.mrf.mxu0
        %v988 = vpop.f32.mrf.mxu0
        %v989 = vadd.f32 0.0, %v988
        %v990 = vpop.f32.mrf.mxu0
        %991 = vmatprep.mubr.bf16.mxu0 0
        %992 = vmatmul.mubr.bf16.gmra.mxu0 %v859
        %v993 = vpop.f32.mrf.mxu0
        %v994 = vadd.f32 0.0, %v993
        %v995 = vpop.f32.mrf.mxu0
        %v996 = vpop.f32.mrf.mxu0
        %v997 = vadd.f32 0.0, %v996
        %v998 = vpop.f32.mrf.mxu0
        %999 = vmatprep.mubr.bf16.mxu0 0
        %1000 = vmatmul.mubr.bf16.gmra.mxu0 %v860
        %v1001 = vpop.f32.mrf.mxu0
        %v1002 = vadd.f32 0.0, %v1001
        %v1003 = vpop.f32.mrf.mxu0
        %v1004 = vpop.f32.mrf.mxu0
        %v1005 = vadd.f32 0.0, %v1004
        %v1006 = vpop.f32.mrf.mxu0
        %1007 = vmatprep.mubr.bf16.mxu0 0
        %1008 = vmatmul.mubr.bf16.gmra.mxu0 %v861
        %v1009 = vpop.f32.mrf.mxu0
        %v1010 = vadd.f32 0.0, %v1009
        %v1011 = vpop.f32.mrf.mxu0
        %v1012 = vpop.f32.mrf.mxu0
        %v1013 = vadd.f32 0.0, %v1012
        %v1014 = vpop.f32.mrf.mxu0
        %1015 = vmatprep.mubr.bf16.mxu0 0
        %1016 = vmatmul.mubr.bf16.gmra.mxu0 %v862
        %v1017 = vpop.f32.mrf.mxu0
        %v1018 = vadd.f32 0.0, %v1017
        %v1019 = vpop.f32.mrf.mxu0
        %v1020 = vpop.f32.mrf.mxu0
        %v1021 = vadd.f32 0.0, %v1020
        %v1022 = vpop.f32.mrf.mxu0
        %1023 = vdwg.mxu0
        %v1024 = vld [vmem:[#allocation11] sm:$0x1]
        %v1026 = vlaneseq
        %v1027 = vshrl.u32 %v1026, 7
        %v1028 = vsub.s32 0, %v1027
        %v1029 = vrot.slane %v1024, %v1028
        %v1031 = vmul.f32 %v962, %v1029
        %v1032 = vmul.f32 %v965, %v1029
        %v1033 = vmul.f32 %v970, %v1029
        %v1034 = vmul.f32 %v973, %v1029
        %v1035 = vmul.f32 %v978, %v1029
        %v1036 = vmul.f32 %v981, %v1029
        %v1037 = vmul.f32 %v986, %v1029
        %v1038 = vmul.f32 %v989, %v1029
        %v1039 = vmul.f32 %v994, %v1029
        %v1040 = vmul.f32 %v997, %v1029
        %v1041 = vmul.f32 %v1002, %v1029
        %v1042 = vmul.f32 %v1005, %v1029
        %v1043 = vmul.f32 %v1010, %v1029
        %v1044 = vmul.f32 %v1013, %v1029
        %v1045 = vmul.f32 %v1018, %v1029
        %v1046 = vmul.f32 %v1021, %v1029
        %v1047 = vld [vmem:[#allocation13] sm:$0x1]
        %v1049 = vlaneseq
        %v1050 = vshrl.u32 %v1049, 7
        %v1051 = vsub.s32 0, %v1050
        %v1052 = vrot.slane %v1047, %v1051
        %v1054 = vadd.f32 %v1031, %v1052
        %v1055 = vadd.f32 %v1032, %v1052
        %v1056 = vadd.f32 %v1033, %v1052
        %v1057 = vadd.f32 %v1034, %v1052
        %v1058 = vadd.f32 %v1035, %v1052
        %v1059 = vadd.f32 %v1036, %v1052
        %v1060 = vadd.f32 %v1037, %v1052
        %v1061 = vadd.f32 %v1038, %v1052
        %v1062 = vadd.f32 %v1039, %v1052
        %v1063 = vadd.f32 %v1040, %v1052
        %v1064 = vadd.f32 %v1041, %v1052
        %v1065 = vadd.f32 %v1042, %v1052
        %v1066 = vadd.f32 %v1043, %v1052
        %v1067 = vadd.f32 %v1044, %v1052
        %v1068 = vadd.f32 %v1045, %v1052
        %v1069 = vadd.f32 %v1046, %v1052
        %v1070 = vmax.f32 %v1054, 0.0
        %v1071 = vmax.f32 %v1055, 0.0
        %v1072 = vmax.f32 %v1056, 0.0
        %v1073 = vmax.f32 %v1057, 0.0
        %v1074 = vmax.f32 %v1058, 0.0
        %v1075 = vmax.f32 %v1059, 0.0
        %v1076 = vmax.f32 %v1060, 0.0
        %v1077 = vmax.f32 %v1061, 0.0
        %v1078 = vmax.f32 %v1062, 0.0
        %v1079 = vmax.f32 %v1063, 0.0
        %v1080 = vmax.f32 %v1064, 0.0
        %v1081 = vmax.f32 %v1065, 0.0
        %v1082 = vmax.f32 %v1066, 0.0
        %v1083 = vmax.f32 %v1067, 0.0
        %v1084 = vmax.f32 %v1068, 0.0
        %v1085 = vmax.f32 %v1069, 0.0
        %v1086 = vpack.c.bf16 %v1071, %v1070
        %v1087 = vpack.c.bf16 %v1073, %v1072
        %v1088 = vpack.c.bf16 %v1075, %v1074
        %v1089 = vpack.c.bf16 %v1077, %v1076
        %v1090 = vpack.c.bf16 %v1079, %v1078
        %v1091 = vpack.c.bf16 %v1081, %v1080
        %v1092 = vpack.c.bf16 %v1083, %v1082
        %v1093 = vpack.c.bf16 %v1085, %v1084
        %v1094 = vld [vmem:[#allocation14] sm:$0xff]
        %v1095 = vld [vmem:[#allocation14 + $0x8] sm:$0xff]
        %v1096 = vld [vmem:[#allocation14 + $0x10] sm:$0xff]
        %v1097 = vld [vmem:[#allocation14 + $0x18] sm:$0xff]
        %v1098 = vld [vmem:[#allocation14 + $0x20] sm:$0xff]
        %v1099 = vld [vmem:[#allocation14 + $0x28] sm:$0xff]
        %v1100 = vld [vmem:[#allocation14 + $0x30] sm:$0xff]
        %v1101 = vld [vmem:[#allocation14 + $0x38] sm:$0xff]
        %v1102 = vld [vmem:[#allocation14 + $0x40] sm:$0xff]
        %v1103 = vld [vmem:[#allocation14 + $0x48] sm:$0xff]
        %v1104 = vld [vmem:[#allocation14 + $0x50] sm:$0xff]
        %v1105 = vld [vmem:[#allocation14 + $0x58] sm:$0xff]
        %v1106 = vld [vmem:[#allocation14 + $0x60] sm:$0xff]
        %v1107 = vld [vmem:[#allocation14 + $0x68] sm:$0xff]
        %v1108 = vld [vmem:[#allocation14 + $0x70] sm:$0xff]
        %v1109 = vld [vmem:[#allocation14 + $0x78] sm:$0xff]
        %v1110 = vld [vmem:[%s8] sm:$0x3]
        %v1112 = vlaneseq
        %v1113 = vshrl.u32 %v1112, 7
        %v1114 = vsub.s32 0, %v1113
        %v1115 = vrot.slane %v1110, %v1114
        %v1116 = vlaneseq
        %v1117 = vshrl.u32 %v1116, 7
        %v1118 = vsub.s32 1, %v1117
        %v1119 = vrot.slane %v1110, %v1118
        %v1138 = vunpack.c.l.b16 %v1094
        %v1139 = vunpack.c.h.b16 %v1094
        %v1140 = vunpack.c.l.b16 %v1095
        %v1141 = vunpack.c.h.b16 %v1095
        %v1142 = vunpack.c.l.b16 %v1096
        %v1143 = vunpack.c.h.b16 %v1096
        %v1144 = vunpack.c.l.b16 %v1097
        %v1145 = vunpack.c.h.b16 %v1097
        %v1146 = vunpack.c.l.b16 %v1098
        %v1147 = vunpack.c.h.b16 %v1098
        %v1148 = vunpack.c.l.b16 %v1099
        %v1149 = vunpack.c.h.b16 %v1099
        %v1150 = vunpack.c.l.b16 %v1100
        %v1151 = vunpack.c.h.b16 %v1100
        %v1152 = vunpack.c.l.b16 %v1101
        %v1153 = vunpack.c.h.b16 %v1101
        %v1154 = vunpack.c.l.b16 %v1102
        %v1155 = vunpack.c.h.b16 %v1102
        %v1156 = vunpack.c.l.b16 %v1103
        %v1157 = vunpack.c.h.b16 %v1103
        %v1158 = vunpack.c.l.b16 %v1104
        %v1159 = vunpack.c.h.b16 %v1104
        %v1160 = vunpack.c.l.b16 %v1105
        %v1161 = vunpack.c.h.b16 %v1105
        %v1162 = vunpack.c.l.b16 %v1106
        %v1163 = vunpack.c.h.b16 %v1106
        %v1164 = vunpack.c.l.b16 %v1107
        %v1165 = vunpack.c.h.b16 %v1107
        %v1166 = vunpack.c.l.b16 %v1108
        %v1167 = vunpack.c.h.b16 %v1108
        %v1168 = vunpack.c.l.b16 %v1109
        %v1169 = vunpack.c.h.b16 %v1109
        %v1170 = vpack.c.b16 %v1140, %v1138
        %v1171 = vpack.c.b16 %v1141, %v1139
        %v1172 = vpack.c.b16 %v1144, %v1142
        %v1173 = vpack.c.b16 %v1145, %v1143
        %v1174 = vpack.c.b16 %v1148, %v1146
        %v1175 = vpack.c.b16 %v1149, %v1147
        %v1176 = vpack.c.b16 %v1152, %v1150
        %v1177 = vpack.c.b16 %v1153, %v1151
        %v1178 = vpack.c.b16 %v1156, %v1154
        %v1179 = vpack.c.b16 %v1157, %v1155
        %v1180 = vpack.c.b16 %v1160, %v1158
        %v1181 = vpack.c.b16 %v1161, %v1159
        %v1182 = vpack.c.b16 %v1164, %v1162
        %v1183 = vpack.c.b16 %v1165, %v1163
        %v1184 = vpack.c.b16 %v1168, %v1166
        %v1185 = vpack.c.b16 %v1169, %v1167
        %1202 = vmatprep.subr.bf16.mxu0 %v1185
        %1203 = vmatpush1.bf16.msra.mxu0 %v1184
        %1204 = vmatprep.subr.bf16.mxu0 %v1183
        %1205 = vmatpush1.bf16.msra.mxu0 %v1182
        %1206 = vmatprep.subr.bf16.mxu0 %v1181
        %1207 = vmatpush1.bf16.msra.mxu0 %v1180
        %1208 = vmatprep.subr.bf16.mxu0 %v1179
        %1209 = vmatpush1.bf16.msra.mxu0 %v1178
        %1210 = vmatprep.subr.bf16.mxu0 %v1177
        %1211 = vmatpush1.bf16.msra.mxu0 %v1176
        %1212 = vmatprep.subr.bf16.mxu0 %v1175
        %1213 = vmatpush1.bf16.msra.mxu0 %v1174
        %1214 = vmatprep.subr.bf16.mxu0 %v1173
        %1215 = vmatpush1.bf16.msra.mxu0 %v1172
        %1216 = vmatprep.subr.bf16.mxu0 %v1171
        %1217 = vmatpush1.bf16.msra.mxu0 %v1170
        %1218 = vmatprep.subr.bf16.mxu0 0
        %1219 = vmatpush2.bf16.msra.mxu0 0
        %1220 = vmatprep.subr.bf16.mxu0 0
        %1221 = vmatpush2.bf16.msra.mxu0 0
        %1222 = vmatprep.subr.bf16.mxu0 0
        %1223 = vmatpush2.bf16.msra.mxu0 0
        %1224 = vmatprep.subr.bf16.mxu0 0
        %1225 = vmatpush2.bf16.msra.mxu0 0
        %1226 = vmatprep.subr.bf16.mxu0 0
        %1227 = vmatpush2.bf16.msra.mxu0 0
        %1228 = vmatprep.subr.bf16.mxu0 0
        %1229 = vmatpush2.bf16.msra.mxu0 0
        %1230 = vmatprep.subr.bf16.mxu0 0
        %1231 = vmatpush2.bf16.msra.mxu0 0
        %1232 = vmatprep.subr.bf16.mxu0 0
        %1233 = vmatpush2.bf16.msra.mxu0 0
        %1234 = vmatprep.mubr.bf16.mxu0 0
        %1235 = vmatmul.mubr.bf16.gmra.mxu0 %v1086
        %v1236 = vpop.f32.mrf.mxu0
        %v1237 = vadd.f32 %v1115, %v1236
        %v1238 = vpop.f32.mrf.mxu0
        %v1239 = vadd.f32 %v1119, %v1238
        %v1240 = vpop.f32.mrf.mxu0
        %v1241 = vadd.f32 %v1115, %v1240
        %v1242 = vpop.f32.mrf.mxu0
        %v1243 = vadd.f32 %v1119, %v1242
        %1244 = vmatprep.mubr.bf16.mxu0 0
        %1245 = vmatmul.mubr.bf16.gmra.mxu0 %v1087
        %v1246 = vpop.f32.mrf.mxu0
        %v1247 = vadd.f32 %v1115, %v1246
        %v1248 = vpop.f32.mrf.mxu0
        %v1249 = vadd.f32 %v1119, %v1248
        %v1250 = vpop.f32.mrf.mxu0
        %v1251 = vadd.f32 %v1115, %v1250
        %v1252 = vpop.f32.mrf.mxu0
        %v1253 = vadd.f32 %v1119, %v1252
        %1254 = vmatprep.mubr.bf16.mxu0 0
        %1255 = vmatmul.mubr.bf16.gmra.mxu0 %v1088
        %v1256 = vpop.f32.mrf.mxu0
        %v1257 = vadd.f32 %v1115, %v1256
        %v1258 = vpop.f32.mrf.mxu0
        %v1259 = vadd.f32 %v1119, %v1258
        %v1260 = vpop.f32.mrf.mxu0
        %v1261 = vadd.f32 %v1115, %v1260
        %v1262 = vpop.f32.mrf.mxu0
        %v1263 = vadd.f32 %v1119, %v1262
        %1264 = vmatprep.mubr.bf16.mxu0 0
        %1265 = vmatmul.mubr.bf16.gmra.mxu0 %v1089
        %v1266 = vpop.f32.mrf.mxu0
        %v1267 = vadd.f32 %v1115, %v1266
        %v1268 = vpop.f32.mrf.mxu0
        %v1269 = vadd.f32 %v1119, %v1268
        %v1270 = vpop.f32.mrf.mxu0
        %v1271 = vadd.f32 %v1115, %v1270
        %v1272 = vpop.f32.mrf.mxu0
        %v1273 = vadd.f32 %v1119, %v1272
        %1274 = vmatprep.mubr.bf16.mxu0 0
        %1275 = vmatmul.mubr.bf16.gmra.mxu0 %v1090
        %v1276 = vpop.f32.mrf.mxu0
        %v1277 = vadd.f32 %v1115, %v1276
        %v1278 = vpop.f32.mrf.mxu0
        %v1279 = vadd.f32 %v1119, %v1278
        %v1280 = vpop.f32.mrf.mxu0
        %v1281 = vadd.f32 %v1115, %v1280
        %v1282 = vpop.f32.mrf.mxu0
        %v1283 = vadd.f32 %v1119, %v1282
        %1284 = vmatprep.mubr.bf16.mxu0 0
        %1285 = vmatmul.mubr.bf16.gmra.mxu0 %v1091
        %v1286 = vpop.f32.mrf.mxu0
        %v1287 = vadd.f32 %v1115, %v1286
        %v1288 = vpop.f32.mrf.mxu0
        %v1289 = vadd.f32 %v1119, %v1288
        %v1290 = vpop.f32.mrf.mxu0
        %v1291 = vadd.f32 %v1115, %v1290
        %v1292 = vpop.f32.mrf.mxu0
        %v1293 = vadd.f32 %v1119, %v1292
        %1294 = vmatprep.mubr.bf16.mxu0 0
        %1295 = vmatmul.mubr.bf16.gmra.mxu0 %v1092
        %v1296 = vpop.f32.mrf.mxu0
        %v1297 = vadd.f32 %v1115, %v1296
        %v1298 = vpop.f32.mrf.mxu0
        %v1299 = vadd.f32 %v1119, %v1298
        %v1300 = vpop.f32.mrf.mxu0
        %v1301 = vadd.f32 %v1115, %v1300
        %v1302 = vpop.f32.mrf.mxu0
        %v1303 = vadd.f32 %v1119, %v1302
        %1304 = vmatprep.mubr.bf16.mxu0 0
        %1305 = vmatmul.mubr.bf16.gmra.mxu0 %v1093
        %v1306 = vpop.f32.mrf.mxu0
        %v1307 = vadd.f32 %v1115, %v1306
        %v1308 = vpop.f32.mrf.mxu0
        %v1309 = vadd.f32 %v1119, %v1308
        %v1310 = vpop.f32.mrf.mxu0
        %v1311 = vadd.f32 %v1115, %v1310
        %v1312 = vpop.f32.mrf.mxu0
        %v1313 = vadd.f32 %v1119, %v1312
        %1314 = vdwg.mxu0
        %v1315 = vpack.c.bf16 %v1241, %v1237
        %v1316 = vpack.c.bf16 %v1251, %v1247
        %v1317 = vpack.c.bf16 %v1261, %v1257
        %v1318 = vpack.c.bf16 %v1271, %v1267
        %v1319 = vpack.c.bf16 %v1281, %v1277
        %v1320 = vpack.c.bf16 %v1291, %v1287
        %v1321 = vpack.c.bf16 %v1301, %v1297
        %v1322 = vpack.c.bf16 %v1311, %v1307
        %v1323 = vpack.c.bf16 %v1243, %v1239
        %v1324 = vpack.c.bf16 %v1253, %v1249
        %v1325 = vpack.c.bf16 %v1263, %v1259
        %v1326 = vpack.c.bf16 %v1273, %v1269
        %v1327 = vpack.c.bf16 %v1283, %v1279
        %v1328 = vpack.c.bf16 %v1293, %v1289
        %v1329 = vpack.c.bf16 %v1303, %v1299
        %v1330 = vpack.c.bf16 %v1313, %v1309
        %1331 = vmatprep.subr.bf16.mxu0 0
        %1332 = vmatpush1.bf16.xpose.msra.mxu0 %v1322
        %1333 = vmatprep.subr.bf16.mxu0 0
        %1334 = vmatpush1.bf16.xpose.msra.mxu0 %v1321
        %1335 = vmatprep.subr.bf16.mxu0 0
        %1336 = vmatpush1.bf16.xpose.msra.mxu0 %v1320
        %1337 = vmatprep.subr.bf16.mxu0 0
        %1338 = vmatpush1.bf16.xpose.msra.mxu0 %v1319
        %1339 = vmatprep.subr.bf16.mxu0 0
        %1340 = vmatpush1.bf16.xpose.msra.mxu0 %v1318
        %1341 = vmatprep.subr.bf16.mxu0 0
        %1342 = vmatpush1.bf16.xpose.msra.mxu0 %v1317
        %1343 = vmatprep.subr.bf16.mxu0 0
        %1344 = vmatpush1.bf16.xpose.msra.mxu0 %v1316
        %1345 = vmatprep.subr.bf16.mxu0 0
        %1346 = vmatpush1.bf16.xpose.msra.mxu0 %v1315
        %1347 = vmatprep.subr.bf16.mxu0 0
        %1348 = vmatpush2.bf16.xpose.msra.mxu0 0
        %1349 = vmatprep.subr.bf16.mxu0 0
        %1350 = vmatpush2.bf16.xpose.msra.mxu0 0
        %1351 = vmatprep.subr.bf16.mxu0 0
        %1352 = vmatpush2.bf16.xpose.msra.mxu0 0
        %1353 = vmatprep.subr.bf16.mxu0 0
        %1354 = vmatpush2.bf16.xpose.msra.mxu0 0
        %1355 = vmatprep.subr.bf16.mxu0 0
        %1356 = vmatpush2.bf16.xpose.msra.mxu0 0
        %1357 = vmatprep.subr.bf16.mxu0 0
        %1358 = vmatpush2.bf16.xpose.msra.mxu0 0
        %1359 = vmatprep.subr.bf16.mxu0 0
        %1360 = vmatpush2.bf16.xpose.msra.mxu0 0
        %1361 = vmatprep.subr.bf16.mxu0 0
        %1362 = vmatpush2.bf16.xpose.msra.mxu0 0
        %1363 = vmatprep.mubr.bf16.mxu0 0
        %1364 = vmatmul.mubr.bf16.gmra.mxu0 %v1315
        %v1365 = vpop.f32.mrf.mxu0
        %v1366 = vadd.f32 0.0, %v1365
        %v1367 = vpop.f32.mrf.mxu0
        %v1368 = vpop.f32.mrf.mxu0
        %v1369 = vadd.f32 0.0, %v1368
        %v1370 = vpop.f32.mrf.mxu0
        %1371 = vmatprep.mubr.bf16.mxu0 0
        %1372 = vmatmul.mubr.bf16.gmra.mxu0 %v1316
        %v1373 = vpop.f32.mrf.mxu0
        %v1374 = vadd.f32 0.0, %v1373
        %v1375 = vpop.f32.mrf.mxu0
        %v1376 = vpop.f32.mrf.mxu0
        %v1377 = vadd.f32 0.0, %v1376
        %v1378 = vpop.f32.mrf.mxu0
        %1379 = vmatprep.mubr.bf16.mxu0 0
        %1380 = vmatmul.mubr.bf16.gmra.mxu0 %v1317
        %v1381 = vpop.f32.mrf.mxu0
        %v1382 = vadd.f32 0.0, %v1381
        %v1383 = vpop.f32.mrf.mxu0
        %v1384 = vpop.f32.mrf.mxu0
        %v1385 = vadd.f32 0.0, %v1384
        %v1386 = vpop.f32.mrf.mxu0
        %1387 = vmatprep.mubr.bf16.mxu0 0
        %1388 = vmatmul.mubr.bf16.gmra.mxu0 %v1318
        %v1389 = vpop.f32.mrf.mxu0
        %v1390 = vadd.f32 0.0, %v1389
        %v1391 = vpop.f32.mrf.mxu0
        %v1392 = vpop.f32.mrf.mxu0
        %v1393 = vadd.f32 0.0, %v1392
        %v1394 = vpop.f32.mrf.mxu0
        %1395 = vmatprep.mubr.bf16.mxu0 0
        %1396 = vmatmul.mubr.bf16.gmra.mxu0 %v1319
        %v1397 = vpop.f32.mrf.mxu0
        %v1398 = vadd.f32 0.0, %v1397
        %v1399 = vpop.f32.mrf.mxu0
        %v1400 = vpop.f32.mrf.mxu0
        %v1401 = vadd.f32 0.0, %v1400
        %v1402 = vpop.f32.mrf.mxu0
        %1403 = vmatprep.mubr.bf16.mxu0 0
        %1404 = vmatmul.mubr.bf16.gmra.mxu0 %v1320
        %v1405 = vpop.f32.mrf.mxu0
        %v1406 = vadd.f32 0.0, %v1405
        %v1407 = vpop.f32.mrf.mxu0
        %v1408 = vpop.f32.mrf.mxu0
        %v1409 = vadd.f32 0.0, %v1408
        %v1410 = vpop.f32.mrf.mxu0
        %1411 = vmatprep.mubr.bf16.mxu0 0
        %1412 = vmatmul.mubr.bf16.gmra.mxu0 %v1321
        %v1413 = vpop.f32.mrf.mxu0
        %v1414 = vadd.f32 0.0, %v1413
        %v1415 = vpop.f32.mrf.mxu0
        %v1416 = vpop.f32.mrf.mxu0
        %v1417 = vadd.f32 0.0, %v1416
        %v1418 = vpop.f32.mrf.mxu0
        %1419 = vmatprep.mubr.bf16.mxu0 0
        %1420 = vmatmul.mubr.bf16.gmra.mxu0 %v1322
        %v1421 = vpop.f32.mrf.mxu0
        %v1422 = vadd.f32 0.0, %v1421
        %v1423 = vpop.f32.mrf.mxu0
        %v1424 = vpop.f32.mrf.mxu0
        %v1425 = vadd.f32 0.0, %v1424
        %v1426 = vpop.f32.mrf.mxu0
        %1427 = vdwg.mxu0
        %v1428 = vmax.f32 %v1366, %v1382
        %v1429 = vmax.f32 %v1369, %v1385
        %v1430 = vmax.f32 %v1374, %v1390
        %v1431 = vmax.f32 %v1377, %v1393
        %v1432 = vmax.f32 %v1428, %v1398
        %v1433 = vmax.f32 %v1429, %v1401
        %v1434 = vmax.f32 %v1430, %v1406
        %v1435 = vmax.f32 %v1431, %v1409
        %v1436 = vmax.f32 %v1432, %v1414
        %v1437 = vmax.f32 %v1433, %v1417
        %v1438 = vmax.f32 %v1434, %v1422
        %v1439 = vmax.f32 %v1435, %v1425
        %v1440 = vmax.f32 %v1436, %v1437
        %v1441 = vmax.f32 %v1438, %v1439
        %v1442 = vmax.f32 %v1440, %v1441
        %v1443 = vrot.slane %v1442, 4
        %v1444 = vmax.f32 %v1442, %v1443
        %v1445 = vrot.slane %v1444, 2
        %v1446 = vmax.f32 %v1444, %v1445
        %v1447 = vrot.slane %v1446, 1
        %v1448 = vmax.f32 %v1446, %v1447
        %v1449 = vsub.f32 %v1366, %v1448
        %v1450 = vsub.f32 %v1369, %v1448
        %v1451 = vsub.f32 %v1374, %v1448
        %v1452 = vsub.f32 %v1377, %v1448
        %v1453 = vsub.f32 %v1382, %v1448
        %v1454 = vsub.f32 %v1385, %v1448
        %v1455 = vsub.f32 %v1390, %v1448
        %v1456 = vsub.f32 %v1393, %v1448
        %v1457 = vsub.f32 %v1398, %v1448
        %v1458 = vsub.f32 %v1401, %v1448
        %v1459 = vsub.f32 %v1406, %v1448
        %v1460 = vsub.f32 %v1409, %v1448
        %v1461 = vsub.f32 %v1414, %v1448
        %v1462 = vsub.f32 %v1417, %v1448
        %v1463 = vsub.f32 %v1422, %v1448
        %v1464 = vsub.f32 %v1425, %v1448
        %v1465 = vmul.f32 %v1449, 1.442695
        %v1466 = vpow.pop %v1465
        %v1467 = vmul.f32 %v1450, 1.442695
        %v1468 = vpow.pop %v1467
        %v1469 = vmul.f32 %v1451, 1.442695
        %v1470 = vpow.pop %v1469
        %v1471 = vmul.f32 %v1452, 1.442695
        %v1472 = vpow.pop %v1471
        %v1473 = vmul.f32 %v1453, 1.442695
        %v1474 = vpow.pop %v1473
        %v1475 = vmul.f32 %v1454, 1.442695
        %v1476 = vpow.pop %v1475
        %v1477 = vmul.f32 %v1455, 1.442695
        %v1478 = vpow.pop %v1477
        %v1479 = vmul.f32 %v1456, 1.442695
        %v1480 = vpow.pop %v1479
        %v1481 = vmul.f32 %v1457, 1.442695
        %v1482 = vpow.pop %v1481
        %v1483 = vmul.f32 %v1458, 1.442695
        %v1484 = vpow.pop %v1483
        %v1485 = vmul.f32 %v1459, 1.442695
        %v1486 = vpow.pop %v1485
        %v1487 = vmul.f32 %v1460, 1.442695
        %v1488 = vpow.pop %v1487
        %v1489 = vmul.f32 %v1461, 1.442695
        %v1490 = vpow.pop %v1489
        %v1491 = vmul.f32 %v1462, 1.442695
        %v1492 = vpow.pop %v1491
        %v1493 = vmul.f32 %v1463, 1.442695
        %v1494 = vpow.pop %v1493
        %v1495 = vmul.f32 %v1464, 1.442695
        %v1496 = vpow.pop %v1495
        %v1497 = vadd.f32 %v1466, %v1468
        %v1498 = vadd.f32 %v1497, %v1470
        %v1499 = vadd.f32 %v1498, %v1472
        %v1500 = vadd.f32 %v1499, %v1474
        %v1501 = vadd.f32 %v1500, %v1476
        %v1502 = vadd.f32 %v1501, %v1478
        %v1503 = vadd.f32 %v1502, %v1480
        %v1504 = vadd.f32 %v1503, %v1482
        %v1505 = vadd.f32 %v1504, %v1484
        %v1506 = vadd.f32 %v1505, %v1486
        %v1507 = vadd.f32 %v1506, %v1488
        %v1508 = vadd.f32 %v1507, %v1490
        %v1509 = vadd.f32 %v1508, %v1492
        %v1510 = vadd.f32 %v1509, %v1494
        %v1511 = vadd.f32 %v1510, %v1496
        %v1512 = vrot.slane %v1511, 4
        %v1513 = vadd.f32 %v1511, %v1512
        %v1514 = vrot.slane %v1513, 2
        %v1515 = vadd.f32 %v1513, %v1514
        %v1516 = vrot.slane %v1515, 1
        %v1517 = vadd.f32 %v1515, %v1516
        %v1518 = vrcp.pop %v1517
        %v1519 = vmul.f32 %v1466, %v1518
        %v1520 = vmul.f32 %v1468, %v1518
        %v1521 = vmul.f32 %v1470, %v1518
        %v1522 = vmul.f32 %v1472, %v1518
        %v1523 = vmul.f32 %v1474, %v1518
        %v1524 = vmul.f32 %v1476, %v1518
        %v1525 = vmul.f32 %v1478, %v1518
        %v1526 = vmul.f32 %v1480, %v1518
        %v1527 = vmul.f32 %v1482, %v1518
        %v1528 = vmul.f32 %v1484, %v1518
        %v1529 = vmul.f32 %v1486, %v1518
        %v1530 = vmul.f32 %v1488, %v1518
        %v1531 = vmul.f32 %v1490, %v1518
        %v1532 = vmul.f32 %v1492, %v1518
        %v1533 = vmul.f32 %v1494, %v1518
        %v1534 = vmul.f32 %v1496, %v1518
        %1535 = vadd.xlane.f32.xlu0 %v1519
        %v1536 = vpop.xlane.xlu0 %1535
        %1537 = vadd.xlane.f32.xlu0 %v1520
        %v1538 = vpop.xlane.xlu0 %1537
        %1539 = vadd.xlane.f32.xlu0 %v1521
        %v1540 = vpop.xlane.xlu0 %1539
        %1541 = vadd.xlane.f32.xlu0 %v1522
        %v1542 = vpop.xlane.xlu0 %1541
        %1543 = vadd.xlane.f32.xlu0 %v1523
        %v1544 = vpop.xlane.xlu0 %1543
        %1545 = vadd.xlane.f32.xlu0 %v1524
        %v1546 = vpop.xlane.xlu0 %1545
        %1547 = vadd.xlane.f32.xlu0 %v1525
        %v1548 = vpop.xlane.xlu0 %1547
        %1549 = vadd.xlane.f32.xlu0 %v1526
        %v1550 = vpop.xlane.xlu0 %1549
        %1551 = vadd.xlane.f32.xlu0 %v1527
        %v1552 = vpop.xlane.xlu0 %1551
        %1553 = vadd.xlane.f32.xlu0 %v1528
        %v1554 = vpop.xlane.xlu0 %1553
        %1555 = vadd.xlane.f32.xlu0 %v1529
        %v1556 = vpop.xlane.xlu0 %1555
        %1557 = vadd.xlane.f32.xlu0 %v1530
        %v1558 = vpop.xlane.xlu0 %1557
        %1559 = vadd.xlane.f32.xlu0 %v1531
        %v1560 = vpop.xlane.xlu0 %1559
        %1561 = vadd.xlane.f32.xlu0 %v1532
        %v1562 = vpop.xlane.xlu0 %1561
        %1563 = vadd.xlane.f32.xlu0 %v1533
        %v1564 = vpop.xlane.xlu0 %1563
        %1565 = vadd.xlane.f32.xlu0 %v1534
        %v1566 = vpop.xlane.xlu0 %1565
        %v1567 = vadd.f32 %v1536, 1e-09
        %v1568 = vadd.f32 %v1538, 1e-09
        %v1569 = vadd.f32 %v1540, 1e-09
        %v1570 = vadd.f32 %v1542, 1e-09
        %v1571 = vadd.f32 %v1544, 1e-09
        %v1572 = vadd.f32 %v1546, 1e-09
        %v1573 = vadd.f32 %v1548, 1e-09
        %v1574 = vadd.f32 %v1550, 1e-09
        %v1575 = vadd.f32 %v1552, 1e-09
        %v1576 = vadd.f32 %v1554, 1e-09
        %v1577 = vadd.f32 %v1556, 1e-09
        %v1578 = vadd.f32 %v1558, 1e-09
        %v1579 = vadd.f32 %v1560, 1e-09
        %v1580 = vadd.f32 %v1562, 1e-09
        %v1581 = vadd.f32 %v1564, 1e-09
        %v1582 = vadd.f32 %v1566, 1e-09
        %v1583 = vrcp.pop %v1567
        %v1584 = vrcp.pop %v1568
        %v1585 = vrcp.pop %v1569
        %v1586 = vrcp.pop %v1570
        %v1587 = vrcp.pop %v1571
        %v1588 = vrcp.pop %v1572
        %v1589 = vrcp.pop %v1573
        %v1590 = vrcp.pop %v1574
        %v1591 = vrcp.pop %v1575
        %v1592 = vrcp.pop %v1576
        %v1593 = vrcp.pop %v1577
        %v1594 = vrcp.pop %v1578
        %v1595 = vrcp.pop %v1579
        %v1596 = vrcp.pop %v1580
        %v1597 = vrcp.pop %v1581
        %v1598 = vrcp.pop %v1582
        %v1599 = vpack.c.bf16 %v1520, %v1519
        %v1600 = vpack.c.bf16 %v1522, %v1521
        %v1601 = vpack.c.bf16 %v1524, %v1523
        %v1602 = vpack.c.bf16 %v1526, %v1525
        %v1603 = vpack.c.bf16 %v1528, %v1527
        %v1604 = vpack.c.bf16 %v1530, %v1529
        %v1605 = vpack.c.bf16 %v1532, %v1531
        %v1606 = vpack.c.bf16 %v1534, %v1533
        %1607 = vmatprep.subr.bf16.mxu0 0
        %1608 = vmatpush1.bf16.msra.mxu0 %v1330
        %1609 = vmatprep.subr.bf16.mxu0 0
        %1610 = vmatpush1.bf16.msra.mxu0 %v1329
        %1611 = vmatprep.subr.bf16.mxu0 0
        %1612 = vmatpush1.bf16.msra.mxu0 %v1328
        %1613 = vmatprep.subr.bf16.mxu0 0
        %1614 = vmatpush1.bf16.msra.mxu0 %v1327
        %1615 = vmatprep.subr.bf16.mxu0 0
        %1616 = vmatpush1.bf16.msra.mxu0 %v1326
        %1617 = vmatprep.subr.bf16.mxu0 0
        %1618 = vmatpush1.bf16.msra.mxu0 %v1325
        %1619 = vmatprep.subr.bf16.mxu0 0
        %1620 = vmatpush1.bf16.msra.mxu0 %v1324
        %1621 = vmatprep.subr.bf16.mxu0 0
        %1622 = vmatpush1.bf16.msra.mxu0 %v1323
        %1623 = vmatprep.subr.bf16.mxu0 0
        %1624 = vmatpush2.bf16.msra.mxu0 0
        %1625 = vmatprep.subr.bf16.mxu0 0
        %1626 = vmatpush2.bf16.msra.mxu0 0
        %1627 = vmatprep.subr.bf16.mxu0 0
        %1628 = vmatpush2.bf16.msra.mxu0 0
        %1629 = vmatprep.subr.bf16.mxu0 0
        %1630 = vmatpush2.bf16.msra.mxu0 0
        %1631 = vmatprep.subr.bf16.mxu0 0
        %1632 = vmatpush2.bf16.msra.mxu0 0
        %1633 = vmatprep.subr.bf16.mxu0 0
        %1634 = vmatpush2.bf16.msra.mxu0 0
        %1635 = vmatprep.subr.bf16.mxu0 0
        %1636 = vmatpush2.bf16.msra.mxu0 0
        %1637 = vmatprep.subr.bf16.mxu0 0
        %1638 = vmatpush2.bf16.msra.mxu0 0
        %1639 = vmatprep.mubr.bf16.mxu0 0
        %1640 = vmatmul.mubr.bf16.gmra.mxu0 %v1599
        %v1641 = vpop.f32.mrf.mxu0
        %v1642 = vadd.f32 0.0, %v1641
        %v1643 = vpop.f32.mrf.mxu0
        %v1644 = vpop.f32.mrf.mxu0
        %v1645 = vadd.f32 0.0, %v1644
        %v1646 = vpop.f32.mrf.mxu0
        %1647 = vmatprep.mubr.bf16.mxu0 0
        %1648 = vmatmul.mubr.bf16.gmra.mxu0 %v1600
        %v1649 = vpop.f32.mrf.mxu0
        %v1650 = vadd.f32 0.0, %v1649
        %v1651 = vpop.f32.mrf.mxu0
        %v1652 = vpop.f32.mrf.mxu0
        %v1653 = vadd.f32 0.0, %v1652
        %v1654 = vpop.f32.mrf.mxu0
        %1655 = vmatprep.mubr.bf16.mxu0 0
        %1656 = vmatmul.mubr.bf16.gmra.mxu0 %v1601
        %v1657 = vpop.f32.mrf.mxu0
        %v1658 = vadd.f32 0.0, %v1657
        %v1659 = vpop.f32.mrf.mxu0
        %v1660 = vpop.f32.mrf.mxu0
        %v1661 = vadd.f32 0.0, %v1660
        %v1662 = vpop.f32.mrf.mxu0
        %1663 = vmatprep.mubr.bf16.mxu0 0
        %1664 = vmatmul.mubr.bf16.gmra.mxu0 %v1602
        %v1665 = vpop.f32.mrf.mxu0
        %v1666 = vadd.f32 0.0, %v1665
        %v1667 = vpop.f32.mrf.mxu0
        %v1668 = vpop.f32.mrf.mxu0
        %v1669 = vadd.f32 0.0, %v1668
        %v1670 = vpop.f32.mrf.mxu0
        %1671 = vmatprep.mubr.bf16.mxu0 0
        %1672 = vmatmul.mubr.bf16.gmra.mxu0 %v1603
        %v1673 = vpop.f32.mrf.mxu0
        %v1674 = vadd.f32 0.0, %v1673
        %v1675 = vpop.f32.mrf.mxu0
        %v1676 = vpop.f32.mrf.mxu0
        %v1677 = vadd.f32 0.0, %v1676
        %v1678 = vpop.f32.mrf.mxu0
        %1679 = vmatprep.mubr.bf16.mxu0 0
        %1680 = vmatmul.mubr.bf16.gmra.mxu0 %v1604
        %v1681 = vpop.f32.mrf.mxu0
        %v1682 = vadd.f32 0.0, %v1681
        %v1683 = vpop.f32.mrf.mxu0
        %v1684 = vpop.f32.mrf.mxu0
        %v1685 = vadd.f32 0.0, %v1684
        %v1686 = vpop.f32.mrf.mxu0
        %1687 = vmatprep.mubr.bf16.mxu0 0
        %1688 = vmatmul.mubr.bf16.gmra.mxu0 %v1605
        %v1689 = vpop.f32.mrf.mxu0
        %v1690 = vadd.f32 0.0, %v1689
        %v1691 = vpop.f32.mrf.mxu0
        %v1692 = vpop.f32.mrf.mxu0
        %v1693 = vadd.f32 0.0, %v1692
        %v1694 = vpop.f32.mrf.mxu0
        %1695 = vmatprep.mubr.bf16.mxu0 0
        %1696 = vmatmul.mubr.bf16.gmra.mxu0 %v1606
        %v1697 = vpop.f32.mrf.mxu0
        %v1698 = vadd.f32 0.0, %v1697
        %v1699 = vpop.f32.mrf.mxu0
        %v1700 = vpop.f32.mrf.mxu0
        %v1701 = vadd.f32 0.0, %v1700
        %v1702 = vpop.f32.mrf.mxu0
        %1703 = vdwg.mxu0
        %v1704 = vmul.f32 %v1583, %v1642
        %v1705 = vmul.f32 %v1584, %v1645
        %v1706 = vmul.f32 %v1585, %v1650
        %v1707 = vmul.f32 %v1586, %v1653
        %v1708 = vmul.f32 %v1587, %v1658
        %v1709 = vmul.f32 %v1588, %v1661
        %v1710 = vmul.f32 %v1589, %v1666
        %v1711 = vmul.f32 %v1590, %v1669
        %v1712 = vmul.f32 %v1591, %v1674
        %v1713 = vmul.f32 %v1592, %v1677
        %v1714 = vmul.f32 %v1593, %v1682
        %v1715 = vmul.f32 %v1594, %v1685
        %v1716 = vmul.f32 %v1595, %v1690
        %v1717 = vmul.f32 %v1596, %v1693
        %v1718 = vmul.f32 %v1597, %v1698
        %v1719 = vmul.f32 %v1598, %v1701
        %v1720 = vsub.f32 %v1070, %v1704
        %v1721 = vsub.f32 %v1071, %v1705
        %v1722 = vsub.f32 %v1072, %v1706
        %v1723 = vsub.f32 %v1073, %v1707
        %v1724 = vsub.f32 %v1074, %v1708
        %v1725 = vsub.f32 %v1075, %v1709
        %v1726 = vsub.f32 %v1076, %v1710
        %v1727 = vsub.f32 %v1077, %v1711
        %v1728 = vsub.f32 %v1078, %v1712
        %v1729 = vsub.f32 %v1079, %v1713
        %v1730 = vsub.f32 %v1080, %v1714
        %v1731 = vsub.f32 %v1081, %v1715
        %v1732 = vsub.f32 %v1082, %v1716
        %v1733 = vsub.f32 %v1083, %v1717
        %v1734 = vsub.f32 %v1084, %v1718
        %v1735 = vsub.f32 %v1085, %v1719
        %v1736 = vpack.c.bf16 %v1721, %v1720
        %v1737 = vpack.c.bf16 %v1723, %v1722
        %v1738 = vpack.c.bf16 %v1725, %v1724
        %v1739 = vpack.c.bf16 %v1727, %v1726
        %v1740 = vpack.c.bf16 %v1729, %v1728
        %v1741 = vpack.c.bf16 %v1731, %v1730
        %v1742 = vpack.c.bf16 %v1733, %v1732
        %v1743 = vpack.c.bf16 %v1735, %v1734
        %v1744 = vld [vmem:[#allocation16] sm:$0xf]
        %v1745 = vld [vmem:[#allocation16 + $0x4] sm:$0xf]
        %v1746 = vld [vmem:[#allocation16 + $0x8] sm:$0xf]
        %v1747 = vld [vmem:[#allocation16 + $0xc] sm:$0xf]
        %v1748 = vld [vmem:[#allocation16 + $0x10] sm:$0xf]
        %v1749 = vld [vmem:[#allocation16 + $0x14] sm:$0xf]
        %v1750 = vld [vmem:[#allocation16 + $0x18] sm:$0xf]
        %v1751 = vld [vmem:[#allocation16 + $0x1c] sm:$0xf]
        %v1752 = vld [vmem:[#allocation16 + $0x20] sm:$0xf]
        %v1753 = vld [vmem:[#allocation16 + $0x24] sm:$0xf]
        %v1754 = vld [vmem:[#allocation16 + $0x28] sm:$0xf]
        %v1755 = vld [vmem:[#allocation16 + $0x2c] sm:$0xf]
        %v1756 = vld [vmem:[#allocation16 + $0x30] sm:$0xf]
        %v1757 = vld [vmem:[#allocation16 + $0x34] sm:$0xf]
        %v1758 = vld [vmem:[#allocation16 + $0x38] sm:$0xf]
        %v1759 = vld [vmem:[#allocation16 + $0x3c] sm:$0xf]
        %v1760 = vld [vmem:[%s10] sm:$0x1]
        %v1762 = vlaneseq
        %v1763 = vshrl.u32 %v1762, 7
        %v1764 = vsub.s32 0, %v1763
        %v1765 = vrot.slane %v1760, %v1764
        %v1783 = vunpack.c.l.b16 %v1744
        %v1784 = vunpack.c.l.b16 %v1745
        %v1785 = vunpack.c.l.b16 %v1746
        %v1786 = vunpack.c.l.b16 %v1747
        %v1787 = vunpack.c.l.b16 %v1748
        %v1788 = vunpack.c.l.b16 %v1749
        %v1789 = vunpack.c.l.b16 %v1750
        %v1790 = vunpack.c.l.b16 %v1751
        %v1791 = vunpack.c.l.b16 %v1752
        %v1792 = vunpack.c.l.b16 %v1753
        %v1793 = vunpack.c.l.b16 %v1754
        %v1794 = vunpack.c.l.b16 %v1755
        %v1795 = vunpack.c.l.b16 %v1756
        %v1796 = vunpack.c.l.b16 %v1757
        %v1797 = vunpack.c.l.b16 %v1758
        %v1798 = vunpack.c.l.b16 %v1759
        %v1799 = vpack.c.b16 %v1784, %v1783
        %v1800 = vpack.c.b16 %v1786, %v1785
        %v1801 = vpack.c.b16 %v1788, %v1787
        %v1802 = vpack.c.b16 %v1790, %v1789
        %v1803 = vpack.c.b16 %v1792, %v1791
        %v1804 = vpack.c.b16 %v1794, %v1793
        %v1805 = vpack.c.b16 %v1796, %v1795
        %v1806 = vpack.c.b16 %v1798, %v1797
        %1815 = vmatprep.subr.bf16.mxu0 0
        %1816 = vmatpush1.bf16.msra.mxu0 %v1806
        %1817 = vmatprep.subr.bf16.mxu0 0
        %1818 = vmatpush1.bf16.msra.mxu0 %v1805
        %1819 = vmatprep.subr.bf16.mxu0 0
        %1820 = vmatpush1.bf16.msra.mxu0 %v1804
        %1821 = vmatprep.subr.bf16.mxu0 0
        %1822 = vmatpush1.bf16.msra.mxu0 %v1803
        %1823 = vmatprep.subr.bf16.mxu0 0
        %1824 = vmatpush1.bf16.msra.mxu0 %v1802
        %1825 = vmatprep.subr.bf16.mxu0 0
        %1826 = vmatpush1.bf16.msra.mxu0 %v1801
        %1827 = vmatprep.subr.bf16.mxu0 0
        %1828 = vmatpush1.bf16.msra.mxu0 %v1800
        %1829 = vmatprep.subr.bf16.mxu0 0
        %1830 = vmatpush1.bf16.msra.mxu0 %v1799
        %1831 = vmatprep.subr.bf16.mxu0 0
        %1832 = vmatpush2.bf16.msra.mxu0 0
        %1833 = vmatprep.subr.bf16.mxu0 0
        %1834 = vmatpush2.bf16.msra.mxu0 0
        %1835 = vmatprep.subr.bf16.mxu0 0
        %1836 = vmatpush2.bf16.msra.mxu0 0
        %1837 = vmatprep.subr.bf16.mxu0 0
        %1838 = vmatpush2.bf16.msra.mxu0 0
        %1839 = vmatprep.subr.bf16.mxu0 0
        %1840 = vmatpush2.bf16.msra.mxu0 0
        %1841 = vmatprep.subr.bf16.mxu0 0
        %1842 = vmatpush2.bf16.msra.mxu0 0
        %1843 = vmatprep.subr.bf16.mxu0 0
        %1844 = vmatpush2.bf16.msra.mxu0 0
        %1845 = vmatprep.subr.bf16.mxu0 0
        %1846 = vmatpush2.bf16.msra.mxu0 0
        %1847 = vmatprep.mubr.bf16.mxu0 0
        %1848 = vmatmul.mubr.bf16.gmra.mxu0 %v1736
        %v1849 = vpop.f32.mrf.mxu0
        %v1850 = vadd.f32 %v1765, %v1849
        %v1851 = vpop.f32.mrf.mxu0
        %v1852 = vpop.f32.mrf.mxu0
        %v1853 = vadd.f32 %v1765, %v1852
        %v1854 = vpop.f32.mrf.mxu0
        %1855 = vmatprep.mubr.bf16.mxu0 0
        %1856 = vmatmul.mubr.bf16.gmra.mxu0 %v1737
        %v1857 = vpop.f32.mrf.mxu0
        %v1858 = vadd.f32 %v1765, %v1857
        %v1859 = vpop.f32.mrf.mxu0
        %v1860 = vpop.f32.mrf.mxu0
        %v1861 = vadd.f32 %v1765, %v1860
        %v1862 = vpop.f32.mrf.mxu0
        %1863 = vmatprep.mubr.bf16.mxu0 0
        %1864 = vmatmul.mubr.bf16.gmra.mxu0 %v1738
        %v1865 = vpop.f32.mrf.mxu0
        %v1866 = vadd.f32 %v1765, %v1865
        %v1867 = vpop.f32.mrf.mxu0
        %v1868 = vpop.f32.mrf.mxu0
        %v1869 = vadd.f32 %v1765, %v1868
        %v1870 = vpop.f32.mrf.mxu0
        %1871 = vmatprep.mubr.bf16.mxu0 0
        %1872 = vmatmul.mubr.bf16.gmra.mxu0 %v1739
        %v1873 = vpop.f32.mrf.mxu0
        %v1874 = vadd.f32 %v1765, %v1873
        %v1875 = vpop.f32.mrf.mxu0
        %v1876 = vpop.f32.mrf.mxu0
        %v1877 = vadd.f32 %v1765, %v1876
        %v1878 = vpop.f32.mrf.mxu0
        %1879 = vmatprep.mubr.bf16.mxu0 0
        %1880 = vmatmul.mubr.bf16.gmra.mxu0 %v1740
        %v1881 = vpop.f32.mrf.mxu0
        %v1882 = vadd.f32 %v1765, %v1881
        %v1883 = vpop.f32.mrf.mxu0
        %v1884 = vpop.f32.mrf.mxu0
        %v1885 = vadd.f32 %v1765, %v1884
        %v1886 = vpop.f32.mrf.mxu0
        %1887 = vmatprep.mubr.bf16.mxu0 0
        %1888 = vmatmul.mubr.bf16.gmra.mxu0 %v1741
        %v1889 = vpop.f32.mrf.mxu0
        %v1890 = vadd.f32 %v1765, %v1889
        %v1891 = vpop.f32.mrf.mxu0
        %v1892 = vpop.f32.mrf.mxu0
        %v1893 = vadd.f32 %v1765, %v1892
        %v1894 = vpop.f32.mrf.mxu0
        %1895 = vmatprep.mubr.bf16.mxu0 0
        %1896 = vmatmul.mubr.bf16.gmra.mxu0 %v1742
        %v1897 = vpop.f32.mrf.mxu0
        %v1898 = vadd.f32 %v1765, %v1897
        %v1899 = vpop.f32.mrf.mxu0
        %v1900 = vpop.f32.mrf.mxu0
        %v1901 = vadd.f32 %v1765, %v1900
        %v1902 = vpop.f32.mrf.mxu0
        %1903 = vmatprep.mubr.bf16.mxu0 0
        %1904 = vmatmul.mubr.bf16.gmra.mxu0 %v1743
        %v1905 = vpop.f32.mrf.mxu0
        %v1906 = vadd.f32 %v1765, %v1905
        %v1907 = vpop.f32.mrf.mxu0
        %v1908 = vpop.f32.mrf.mxu0
        %v1909 = vadd.f32 %v1765, %v1908
        %v1910 = vpop.f32.mrf.mxu0
        %1911 = vdwg.mxu0
        %v1912 = vld [vmem:[%s11] sm:$0x1]
        %v1914 = vlaneseq
        %v1915 = vshrl.u32 %v1914, 7
        %v1916 = vsub.s32 0, %v1915
        %v1917 = vrot.slane %v1912, %v1916
        %v1919 = vmul.f32 %v1850, %v1917
        %v1920 = vmul.f32 %v1853, %v1917
        %v1921 = vmul.f32 %v1858, %v1917
        %v1922 = vmul.f32 %v1861, %v1917
        %v1923 = vmul.f32 %v1866, %v1917
        %v1924 = vmul.f32 %v1869, %v1917
        %v1925 = vmul.f32 %v1874, %v1917
        %v1926 = vmul.f32 %v1877, %v1917
        %v1927 = vmul.f32 %v1882, %v1917
        %v1928 = vmul.f32 %v1885, %v1917
        %v1929 = vmul.f32 %v1890, %v1917
        %v1930 = vmul.f32 %v1893, %v1917
        %v1931 = vmul.f32 %v1898, %v1917
        %v1932 = vmul.f32 %v1901, %v1917
        %v1933 = vmul.f32 %v1906, %v1917
        %v1934 = vmul.f32 %v1909, %v1917
        %v1935 = vld [vmem:[%s12] sm:$0x1]
        %v1937 = vlaneseq
        %v1938 = vshrl.u32 %v1937, 7
        %v1939 = vsub.s32 0, %v1938
        %v1940 = vrot.slane %v1935, %v1939
        %v1942 = vadd.f32 %v1919, %v1940
        %v1943 = vadd.f32 %v1920, %v1940
        %v1944 = vadd.f32 %v1921, %v1940
        %v1945 = vadd.f32 %v1922, %v1940
        %v1946 = vadd.f32 %v1923, %v1940
        %v1947 = vadd.f32 %v1924, %v1940
        %v1948 = vadd.f32 %v1925, %v1940
        %v1949 = vadd.f32 %v1926, %v1940
        %v1950 = vadd.f32 %v1927, %v1940
        %v1951 = vadd.f32 %v1928, %v1940
        %v1952 = vadd.f32 %v1929, %v1940
        %v1953 = vadd.f32 %v1930, %v1940
        %v1954 = vadd.f32 %v1931, %v1940
        %v1955 = vadd.f32 %v1932, %v1940
        %v1956 = vadd.f32 %v1933, %v1940
        %v1957 = vadd.f32 %v1934, %v1940
        %v1958 = vmax.f32 %v1942, 0.0
        %v1959 = vmax.f32 %v1943, 0.0
        %v1960 = vmax.f32 %v1944, 0.0
        %v1961 = vmax.f32 %v1945, 0.0
        %v1962 = vmax.f32 %v1946, 0.0
        %v1963 = vmax.f32 %v1947, 0.0
        %v1964 = vmax.f32 %v1948, 0.0
        %v1965 = vmax.f32 %v1949, 0.0
        %v1966 = vmax.f32 %v1950, 0.0
        %v1967 = vmax.f32 %v1951, 0.0
        %v1968 = vmax.f32 %v1952, 0.0
        %v1969 = vmax.f32 %v1953, 0.0
        %v1970 = vmax.f32 %v1954, 0.0
        %v1971 = vmax.f32 %v1955, 0.0
        %v1972 = vmax.f32 %v1956, 0.0
        %v1973 = vmax.f32 %v1957, 0.0
        %v1974 = vadd.f32 %v1070, %v1958
        %v1975 = vadd.f32 %v1071, %v1959
        %v1976 = vadd.f32 %v1072, %v1960
        %v1977 = vadd.f32 %v1073, %v1961
        %v1978 = vadd.f32 %v1074, %v1962
        %v1979 = vadd.f32 %v1075, %v1963
        %v1980 = vadd.f32 %v1076, %v1964
        %v1981 = vadd.f32 %v1077, %v1965
        %v1982 = vadd.f32 %v1078, %v1966
        %v1983 = vadd.f32 %v1079, %v1967
        %v1984 = vadd.f32 %v1080, %v1968
        %v1985 = vadd.f32 %v1081, %v1969
        %v1986 = vadd.f32 %v1082, %v1970
        %v1987 = vadd.f32 %v1083, %v1971
        %v1988 = vadd.f32 %v1084, %v1972
        %v1989 = vadd.f32 %v1085, %v1973
        %1990 = vst [vmem:[%s566] sm:$0xff] %v1974
        %1991 = vst [vmem:[%s566 + $0x20] sm:$0xff] %v1975
        %1992 = vst [vmem:[%s566 + $0x40] sm:$0xff] %v1976
        %1993 = vst [vmem:[%s566 + $0x60] sm:$0xff] %v1977
        %1994 = vst [vmem:[%s566 + $0x80] sm:$0xff] %v1978
        %1995 = vst [vmem:[%s566 + $0xa0] sm:$0xff] %v1979
        %1996 = vst [vmem:[%s566 + $0xc0] sm:$0xff] %v1980
        %1997 = vst [vmem:[%s566 + $0xe0] sm:$0xff] %v1981
        %1998 = vst [vmem:[%s566 + $0x100] sm:$0xff] %v1982
        %1999 = vst [vmem:[%s566 + $0x120] sm:$0xff] %v1983
        %2000 = vst [vmem:[%s566 + $0x140] sm:$0xff] %v1984
        %2001 = vst [vmem:[%s566 + $0x160] sm:$0xff] %v1985
        %2002 = vst [vmem:[%s566 + $0x180] sm:$0xff] %v1986
        %2003 = vst [vmem:[%s566 + $0x1a0] sm:$0xff] %v1987
        %2004 = vst [vmem:[%s566 + $0x1c0] sm:$0xff] %v1988
        %2005 = vst [vmem:[%s566 + $0x1e0] sm:$0xff] %v1989
        %v2006 = vpack.c.bf16 %v1975, %v1974
        %v2007 = vpack.c.bf16 %v1977, %v1976
        %v2008 = vpack.c.bf16 %v1979, %v1978
        %v2009 = vpack.c.bf16 %v1981, %v1980
        %v2010 = vpack.c.bf16 %v1983, %v1982
        %v2011 = vpack.c.bf16 %v1985, %v1984
        %v2012 = vpack.c.bf16 %v1987, %v1986
        %v2013 = vpack.c.bf16 %v1989, %v1988
        %s2014 = scalar_lea.vmem [#allocation14], 128
        %v2015 = vld [vmem:[%s2014] sm:$0xff]
        %v2016 = vld [vmem:[%s2014 + $0x8] sm:$0xff]
        %v2017 = vld [vmem:[%s2014 + $0x10] sm:$0xff]
        %v2018 = vld [vmem:[%s2014 + $0x18] sm:$0xff]
        %v2019 = vld [vmem:[%s2014 + $0x20] sm:$0xff]
        %v2020 = vld [vmem:[%s2014 + $0x28] sm:$0xff]
        %v2021 = vld [vmem:[%s2014 + $0x30] sm:$0xff]
        %v2022 = vld [vmem:[%s2014 + $0x38] sm:$0xff]
        %v2023 = vld [vmem:[%s2014 + $0x40] sm:$0xff]
        %v2024 = vld [vmem:[%s2014 + $0x48] sm:$0xff]
        %v2025 = vld [vmem:[%s2014 + $0x50] sm:$0xff]
        %v2026 = vld [vmem:[%s2014 + $0x58] sm:$0xff]
        %v2027 = vld [vmem:[%s2014 + $0x60] sm:$0xff]
        %v2028 = vld [vmem:[%s2014 + $0x68] sm:$0xff]
        %v2029 = vld [vmem:[%s2014 + $0x70] sm:$0xff]
        %v2030 = vld [vmem:[%s2014 + $0x78] sm:$0xff]
        %s2031 = scalar_lea.vmem %s8, 2
        %v2032 = vld [vmem:[%s2031] sm:$0x3]
        %v2034 = vlaneseq
        %v2035 = vshrl.u32 %v2034, 7
        %v2036 = vsub.s32 0, %v2035
        %v2037 = vrot.slane %v2032, %v2036
        %v2038 = vlaneseq
        %v2039 = vshrl.u32 %v2038, 7
        %v2040 = vsub.s32 1, %v2039
        %v2041 = vrot.slane %v2032, %v2040
        %v2060 = vunpack.c.l.b16 %v2015
        %v2061 = vunpack.c.h.b16 %v2015
        %v2062 = vunpack.c.l.b16 %v2016
        %v2063 = vunpack.c.h.b16 %v2016
        %v2064 = vunpack.c.l.b16 %v2017
        %v2065 = vunpack.c.h.b16 %v2017
        %v2066 = vunpack.c.l.b16 %v2018
        %v2067 = vunpack.c.h.b16 %v2018
        %v2068 = vunpack.c.l.b16 %v2019
        %v2069 = vunpack.c.h.b16 %v2019
        %v2070 = vunpack.c.l.b16 %v2020
        %v2071 = vunpack.c.h.b16 %v2020
        %v2072 = vunpack.c.l.b16 %v2021
        %v2073 = vunpack.c.h.b16 %v2021
        %v2074 = vunpack.c.l.b16 %v2022
        %v2075 = vunpack.c.h.b16 %v2022
        %v2076 = vunpack.c.l.b16 %v2023
        %v2077 = vunpack.c.h.b16 %v2023
        %v2078 = vunpack.c.l.b16 %v2024
        %v2079 = vunpack.c.h.b16 %v2024
        %v2080 = vunpack.c.l.b16 %v2025
        %v2081 = vunpack.c.h.b16 %v2025
        %v2082 = vunpack.c.l.b16 %v2026
        %v2083 = vunpack.c.h.b16 %v2026
        %v2084 = vunpack.c.l.b16 %v2027
        %v2085 = vunpack.c.h.b16 %v2027
        %v2086 = vunpack.c.l.b16 %v2028
        %v2087 = vunpack.c.h.b16 %v2028
        %v2088 = vunpack.c.l.b16 %v2029
        %v2089 = vunpack.c.h.b16 %v2029
        %v2090 = vunpack.c.l.b16 %v2030
        %v2091 = vunpack.c.h.b16 %v2030
        %v2092 = vpack.c.b16 %v2062, %v2060
        %v2093 = vpack.c.b16 %v2063, %v2061
        %v2094 = vpack.c.b16 %v2066, %v2064
        %v2095 = vpack.c.b16 %v2067, %v2065
        %v2096 = vpack.c.b16 %v2070, %v2068
        %v2097 = vpack.c.b16 %v2071, %v2069
        %v2098 = vpack.c.b16 %v2074, %v2072
        %v2099 = vpack.c.b16 %v2075, %v2073
        %v2100 = vpack.c.b16 %v2078, %v2076
        %v2101 = vpack.c.b16 %v2079, %v2077
        %v2102 = vpack.c.b16 %v2082, %v2080
        %v2103 = vpack.c.b16 %v2083, %v2081
        %v2104 = vpack.c.b16 %v2086, %v2084
        %v2105 = vpack.c.b16 %v2087, %v2085
        %v2106 = vpack.c.b16 %v2090, %v2088
        %v2107 = vpack.c.b16 %v2091, %v2089
        %2124 = vmatprep.subr.bf16.mxu0 %v2107
        %2125 = vmatpush1.bf16.msra.mxu0 %v2106
        %2126 = vmatprep.subr.bf16.mxu0 %v2105
        %2127 = vmatpush1.bf16.msra.mxu0 %v2104
        %2128 = vmatprep.subr.bf16.mxu0 %v2103
        %2129 = vmatpush1.bf16.msra.mxu0 %v2102
        %2130 = vmatprep.subr.bf16.mxu0 %v2101
        %2131 = vmatpush1.bf16.msra.mxu0 %v2100
        %2132 = vmatprep.subr.bf16.mxu0 %v2099
        %2133 = vmatpush1.bf16.msra.mxu0 %v2098
        %2134 = vmatprep.subr.bf16.mxu0 %v2097
        %2135 = vmatpush1.bf16.msra.mxu0 %v2096
        %2136 = vmatprep.subr.bf16.mxu0 %v2095
        %2137 = vmatpush1.bf16.msra.mxu0 %v2094
        %2138 = vmatprep.subr.bf16.mxu0 %v2093
        %2139 = vmatpush1.bf16.msra.mxu0 %v2092
        %2140 = vmatprep.subr.bf16.mxu0 0
        %2141 = vmatpush2.bf16.msra.mxu0 0
        %2142 = vmatprep.subr.bf16.mxu0 0
        %2143 = vmatpush2.bf16.msra.mxu0 0
        %2144 = vmatprep.subr.bf16.mxu0 0
        %2145 = vmatpush2.bf16.msra.mxu0 0
        %2146 = vmatprep.subr.bf16.mxu0 0
        %2147 = vmatpush2.bf16.msra.mxu0 0
        %2148 = vmatprep.subr.bf16.mxu0 0
        %2149 = vmatpush2.bf16.msra.mxu0 0
        %2150 = vmatprep.subr.bf16.mxu0 0
        %2151 = vmatpush2.bf16.msra.mxu0 0
        %2152 = vmatprep.subr.bf16.mxu0 0
        %2153 = vmatpush2.bf16.msra.mxu0 0
        %2154 = vmatprep.subr.bf16.mxu0 0
        %2155 = vmatpush2.bf16.msra.mxu0 0
        %2156 = vmatprep.mubr.bf16.mxu0 0
        %2157 = vmatmul.mubr.bf16.gmra.mxu0 %v2006
        %v2158 = vpop.f32.mrf.mxu0
        %v2159 = vadd.f32 %v2037, %v2158
        %v2160 = vpop.f32.mrf.mxu0
        %v2161 = vadd.f32 %v2041, %v2160
        %v2162 = vpop.f32.mrf.mxu0
        %v2163 = vadd.f32 %v2037, %v2162
        %v2164 = vpop.f32.mrf.mxu0
        %v2165 = vadd.f32 %v2041, %v2164
        %2166 = vmatprep.mubr.bf16.mxu0 0
        %2167 = vmatmul.mubr.bf16.gmra.mxu0 %v2007
        %v2168 = vpop.f32.mrf.mxu0
        %v2169 = vadd.f32 %v2037, %v2168
        %v2170 = vpop.f32.mrf.mxu0
        %v2171 = vadd.f32 %v2041, %v2170
        %v2172 = vpop.f32.mrf.mxu0
        %v2173 = vadd.f32 %v2037, %v2172
        %v2174 = vpop.f32.mrf.mxu0
        %v2175 = vadd.f32 %v2041, %v2174
        %2176 = vmatprep.mubr.bf16.mxu0 0
        %2177 = vmatmul.mubr.bf16.gmra.mxu0 %v2008
        %v2178 = vpop.f32.mrf.mxu0
        %v2179 = vadd.f32 %v2037, %v2178
        %v2180 = vpop.f32.mrf.mxu0
        %v2181 = vadd.f32 %v2041, %v2180
        %v2182 = vpop.f32.mrf.mxu0
        %v2183 = vadd.f32 %v2037, %v2182
        %v2184 = vpop.f32.mrf.mxu0
        %v2185 = vadd.f32 %v2041, %v2184
        %2186 = vmatprep.mubr.bf16.mxu0 0
        %2187 = vmatmul.mubr.bf16.gmra.mxu0 %v2009
        %v2188 = vpop.f32.mrf.mxu0
        %v2189 = vadd.f32 %v2037, %v2188
        %v2190 = vpop.f32.mrf.mxu0
        %v2191 = vadd.f32 %v2041, %v2190
        %v2192 = vpop.f32.mrf.mxu0
        %v2193 = vadd.f32 %v2037, %v2192
        %v2194 = vpop.f32.mrf.mxu0
        %v2195 = vadd.f32 %v2041, %v2194
        %2196 = vmatprep.mubr.bf16.mxu0 0
        %2197 = vmatmul.mubr.bf16.gmra.mxu0 %v2010
        %v2198 = vpop.f32.mrf.mxu0
        %v2199 = vadd.f32 %v2037, %v2198
        %v2200 = vpop.f32.mrf.mxu0
        %v2201 = vadd.f32 %v2041, %v2200
        %v2202 = vpop.f32.mrf.mxu0
        %v2203 = vadd.f32 %v2037, %v2202
        %v2204 = vpop.f32.mrf.mxu0
        %v2205 = vadd.f32 %v2041, %v2204
        %2206 = vmatprep.mubr.bf16.mxu0 0
        %2207 = vmatmul.mubr.bf16.gmra.mxu0 %v2011
        %v2208 = vpop.f32.mrf.mxu0
        %v2209 = vadd.f32 %v2037, %v2208
        %v2210 = vpop.f32.mrf.mxu0
        %v2211 = vadd.f32 %v2041, %v2210
        %v2212 = vpop.f32.mrf.mxu0
        %v2213 = vadd.f32 %v2037, %v2212
        %v2214 = vpop.f32.mrf.mxu0
        %v2215 = vadd.f32 %v2041, %v2214
        %2216 = vmatprep.mubr.bf16.mxu0 0
        %2217 = vmatmul.mubr.bf16.gmra.mxu0 %v2012
        %v2218 = vpop.f32.mrf.mxu0
        %v2219 = vadd.f32 %v2037, %v2218
        %v2220 = vpop.f32.mrf.mxu0
        %v2221 = vadd.f32 %v2041, %v2220
        %v2222 = vpop.f32.mrf.mxu0
        %v2223 = vadd.f32 %v2037, %v2222
        %v2224 = vpop.f32.mrf.mxu0
        %v2225 = vadd.f32 %v2041, %v2224
        %2226 = vmatprep.mubr.bf16.mxu0 0
        %2227 = vmatmul.mubr.bf16.gmra.mxu0 %v2013
        %v2228 = vpop.f32.mrf.mxu0
        %v2229 = vadd.f32 %v2037, %v2228
        %v2230 = vpop.f32.mrf.mxu0
        %v2231 = vadd.f32 %v2041, %v2230
        %v2232 = vpop.f32.mrf.mxu0
        %v2233 = vadd.f32 %v2037, %v2232
        %v2234 = vpop.f32.mrf.mxu0
        %v2235 = vadd.f32 %v2041, %v2234
        %2236 = vdwg.mxu0
        %v2237 = vpack.c.bf16 %v2163, %v2159
        %v2238 = vpack.c.bf16 %v2173, %v2169
        %v2239 = vpack.c.bf16 %v2183, %v2179
        %v2240 = vpack.c.bf16 %v2193, %v2189
        %v2241 = vpack.c.bf16 %v2203, %v2199
        %v2242 = vpack.c.bf16 %v2213, %v2209
        %v2243 = vpack.c.bf16 %v2223, %v2219
        %v2244 = vpack.c.bf16 %v2233, %v2229
        %v2245 = vpack.c.bf16 %v2165, %v2161
        %v2246 = vpack.c.bf16 %v2175, %v2171
        %v2247 = vpack.c.bf16 %v2185, %v2181
        %v2248 = vpack.c.bf16 %v2195, %v2191
        %v2249 = vpack.c.bf16 %v2205, %v2201
        %v2250 = vpack.c.bf16 %v2215, %v2211
        %v2251 = vpack.c.bf16 %v2225, %v2221
        %v2252 = vpack.c.bf16 %v2235, %v2231
        %2253 = vmatprep.subr.bf16.mxu0 0
        %2254 = vmatpush1.bf16.xpose.msra.mxu0 %v2244
        %2255 = vmatprep.subr.bf16.mxu0 0
        %2256 = vmatpush1.bf16.xpose.msra.mxu0 %v2243
        %2257 = vmatprep.subr.bf16.mxu0 0
        %2258 = vmatpush1.bf16.xpose.msra.mxu0 %v2242
        %2259 = vmatprep.subr.bf16.mxu0 0
        %2260 = vmatpush1.bf16.xpose.msra.mxu0 %v2241
        %2261 = vmatprep.subr.bf16.mxu0 0
        %2262 = vmatpush1.bf16.xpose.msra.mxu0 %v2240
        %2263 = vmatprep.subr.bf16.mxu0 0
        %2264 = vmatpush1.bf16.xpose.msra.mxu0 %v2239
        %2265 = vmatprep.subr.bf16.mxu0 0
        %2266 = vmatpush1.bf16.xpose.msra.mxu0 %v2238
        %2267 = vmatprep.subr.bf16.mxu0 0
        %2268 = vmatpush1.bf16.xpose.msra.mxu0 %v2237
        %2269 = vmatprep.subr.bf16.mxu0 0
        %2270 = vmatpush2.bf16.xpose.msra.mxu0 0
        %2271 = vmatprep.subr.bf16.mxu0 0
        %2272 = vmatpush2.bf16.xpose.msra.mxu0 0
        %2273 = vmatprep.subr.bf16.mxu0 0
        %2274 = vmatpush2.bf16.xpose.msra.mxu0 0
        %2275 = vmatprep.subr.bf16.mxu0 0
        %2276 = vmatpush2.bf16.xpose.msra.mxu0 0
        %2277 = vmatprep.subr.bf16.mxu0 0
        %2278 = vmatpush2.bf16.xpose.msra.mxu0 0
        %2279 = vmatprep.subr.bf16.mxu0 0
        %2280 = vmatpush2.bf16.xpose.msra.mxu0 0
        %2281 = vmatprep.subr.bf16.mxu0 0
        %2282 = vmatpush2.bf16.xpose.msra.mxu0 0
        %2283 = vmatprep.subr.bf16.mxu0 0
        %2284 = vmatpush2.bf16.xpose.msra.mxu0 0
        %2285 = vmatprep.mubr.bf16.mxu0 0
        %2286 = vmatmul.mubr.bf16.gmra.mxu0 %v2237
        %v2287 = vpop.f32.mrf.mxu0
        %v2288 = vadd.f32 0.0, %v2287
        %v2289 = vpop.f32.mrf.mxu0
        %v2290 = vpop.f32.mrf.mxu0
        %v2291 = vadd.f32 0.0, %v2290
        %v2292 = vpop.f32.mrf.mxu0
        %2293 = vmatprep.mubr.bf16.mxu0 0
        %2294 = vmatmul.mubr.bf16.gmra.mxu0 %v2238
        %v2295 = vpop.f32.mrf.mxu0
        %v2296 = vadd.f32 0.0, %v2295
        %v2297 = vpop.f32.mrf.mxu0
        %v2298 = vpop.f32.mrf.mxu0
        %v2299 = vadd.f32 0.0, %v2298
        %v2300 = vpop.f32.mrf.mxu0
        %2301 = vmatprep.mubr.bf16.mxu0 0
        %2302 = vmatmul.mubr.bf16.gmra.mxu0 %v2239
        %v2303 = vpop.f32.mrf.mxu0
        %v2304 = vadd.f32 0.0, %v2303
        %v2305 = vpop.f32.mrf.mxu0
        %v2306 = vpop.f32.mrf.mxu0
        %v2307 = vadd.f32 0.0, %v2306
        %v2308 = vpop.f32.mrf.mxu0
        %2309 = vmatprep.mubr.bf16.mxu0 0
        %2310 = vmatmul.mubr.bf16.gmra.mxu0 %v2240
        %v2311 = vpop.f32.mrf.mxu0
        %v2312 = vadd.f32 0.0, %v2311
        %v2313 = vpop.f32.mrf.mxu0
        %v2314 = vpop.f32.mrf.mxu0
        %v2315 = vadd.f32 0.0, %v2314
        %v2316 = vpop.f32.mrf.mxu0
        %2317 = vmatprep.mubr.bf16.mxu0 0
        %2318 = vmatmul.mubr.bf16.gmra.mxu0 %v2241
        %v2319 = vpop.f32.mrf.mxu0
        %v2320 = vadd.f32 0.0, %v2319
        %v2321 = vpop.f32.mrf.mxu0
        %v2322 = vpop.f32.mrf.mxu0
        %v2323 = vadd.f32 0.0, %v2322
        %v2324 = vpop.f32.mrf.mxu0
        %2325 = vmatprep.mubr.bf16.mxu0 0
        %2326 = vmatmul.mubr.bf16.gmra.mxu0 %v2242
        %v2327 = vpop.f32.mrf.mxu0
        %v2328 = vadd.f32 0.0, %v2327
        %v2329 = vpop.f32.mrf.mxu0
        %v2330 = vpop.f32.mrf.mxu0
        %v2331 = vadd.f32 0.0, %v2330
        %v2332 = vpop.f32.mrf.mxu0
        %2333 = vmatprep.mubr.bf16.mxu0 0
        %2334 = vmatmul.mubr.bf16.gmra.mxu0 %v2243
        %v2335 = vpop.f32.mrf.mxu0
        %v2336 = vadd.f32 0.0, %v2335
        %v2337 = vpop.f32.mrf.mxu0
        %v2338 = vpop.f32.mrf.mxu0
        %v2339 = vadd.f32 0.0, %v2338
        %v2340 = vpop.f32.mrf.mxu0
        %2341 = vmatprep.mubr.bf16.mxu0 0
        %2342 = vmatmul.mubr.bf16.gmra.mxu0 %v2244
        %v2343 = vpop.f32.mrf.mxu0
        %v2344 = vadd.f32 0.0, %v2343
        %v2345 = vpop.f32.mrf.mxu0
        %v2346 = vpop.f32.mrf.mxu0
        %v2347 = vadd.f32 0.0, %v2346
        %v2348 = vpop.f32.mrf.mxu0
        %2349 = vdwg.mxu0
        %v2350 = vmax.f32 %v2288, %v2304
        %v2351 = vmax.f32 %v2291, %v2307
        %v2352 = vmax.f32 %v2296, %v2312
        %v2353 = vmax.f32 %v2299, %v2315
        %v2354 = vmax.f32 %v2350, %v2320
        %v2355 = vmax.f32 %v2351, %v2323
        %v2356 = vmax.f32 %v2352, %v2328
        %v2357 = vmax.f32 %v2353, %v2331
        %v2358 = vmax.f32 %v2354, %v2336
        %v2359 = vmax.f32 %v2355, %v2339
        %v2360 = vmax.f32 %v2356, %v2344
        %v2361 = vmax.f32 %v2357, %v2347
        %v2362 = vmax.f32 %v2358, %v2359
        %v2363 = vmax.f32 %v2360, %v2361
        %v2364 = vmax.f32 %v2362, %v2363
        %v2365 = vrot.slane %v2364, 4
        %v2366 = vmax.f32 %v2364, %v2365
        %v2367 = vrot.slane %v2366, 2
        %v2368 = vmax.f32 %v2366, %v2367
        %v2369 = vrot.slane %v2368, 1
        %v2370 = vmax.f32 %v2368, %v2369
        %v2371 = vsub.f32 %v2288, %v2370
        %v2372 = vsub.f32 %v2291, %v2370
        %v2373 = vsub.f32 %v2296, %v2370
        %v2374 = vsub.f32 %v2299, %v2370
        %v2375 = vsub.f32 %v2304, %v2370
        %v2376 = vsub.f32 %v2307, %v2370
        %v2377 = vsub.f32 %v2312, %v2370
        %v2378 = vsub.f32 %v2315, %v2370
        %v2379 = vsub.f32 %v2320, %v2370
        %v2380 = vsub.f32 %v2323, %v2370
        %v2381 = vsub.f32 %v2328, %v2370
        %v2382 = vsub.f32 %v2331, %v2370
        %v2383 = vsub.f32 %v2336, %v2370
        %v2384 = vsub.f32 %v2339, %v2370
        %v2385 = vsub.f32 %v2344, %v2370
        %v2386 = vsub.f32 %v2347, %v2370
        %v2387 = vmul.f32 %v2371, 1.442695
        %v2388 = vpow.pop %v2387
        %v2389 = vmul.f32 %v2372, 1.442695
        %v2390 = vpow.pop %v2389
        %v2391 = vmul.f32 %v2373, 1.442695
        %v2392 = vpow.pop %v2391
        %v2393 = vmul.f32 %v2374, 1.442695
        %v2394 = vpow.pop %v2393
        %v2395 = vmul.f32 %v2375, 1.442695
        %v2396 = vpow.pop %v2395
        %v2397 = vmul.f32 %v2376, 1.442695
        %v2398 = vpow.pop %v2397
        %v2399 = vmul.f32 %v2377, 1.442695
        %v2400 = vpow.pop %v2399
        %v2401 = vmul.f32 %v2378, 1.442695
        %v2402 = vpow.pop %v2401
        %v2403 = vmul.f32 %v2379, 1.442695
        %v2404 = vpow.pop %v2403
        %v2405 = vmul.f32 %v2380, 1.442695
        %v2406 = vpow.pop %v2405
        %v2407 = vmul.f32 %v2381, 1.442695
        %v2408 = vpow.pop %v2407
        %v2409 = vmul.f32 %v2382, 1.442695
        %v2410 = vpow.pop %v2409
        %v2411 = vmul.f32 %v2383, 1.442695
        %v2412 = vpow.pop %v2411
        %v2413 = vmul.f32 %v2384, 1.442695
        %v2414 = vpow.pop %v2413
        %v2415 = vmul.f32 %v2385, 1.442695
        %v2416 = vpow.pop %v2415
        %v2417 = vmul.f32 %v2386, 1.442695
        %v2418 = vpow.pop %v2417
        %v2419 = vadd.f32 %v2388, %v2390
        %v2420 = vadd.f32 %v2419, %v2392
        %v2421 = vadd.f32 %v2420, %v2394
        %v2422 = vadd.f32 %v2421, %v2396
        %v2423 = vadd.f32 %v2422, %v2398
        %v2424 = vadd.f32 %v2423, %v2400
        %v2425 = vadd.f32 %v2424, %v2402
        %v2426 = vadd.f32 %v2425, %v2404
        %v2427 = vadd.f32 %v2426, %v2406
        %v2428 = vadd.f32 %v2427, %v2408
        %v2429 = vadd.f32 %v2428, %v2410
        %v2430 = vadd.f32 %v2429, %v2412
        %v2431 = vadd.f32 %v2430, %v2414
        %v2432 = vadd.f32 %v2431, %v2416
        %v2433 = vadd.f32 %v2432, %v2418
        %v2434 = vrot.slane %v2433, 4
        %v2435 = vadd.f32 %v2433, %v2434
        %v2436 = vrot.slane %v2435, 2
        %v2437 = vadd.f32 %v2435, %v2436
        %v2438 = vrot.slane %v2437, 1
        %v2439 = vadd.f32 %v2437, %v2438
        %v2440 = vrcp.pop %v2439
        %v2441 = vmul.f32 %v2388, %v2440
        %v2442 = vmul.f32 %v2390, %v2440
        %v2443 = vmul.f32 %v2392, %v2440
        %v2444 = vmul.f32 %v2394, %v2440
        %v2445 = vmul.f32 %v2396, %v2440
        %v2446 = vmul.f32 %v2398, %v2440
        %v2447 = vmul.f32 %v2400, %v2440
        %v2448 = vmul.f32 %v2402, %v2440
        %v2449 = vmul.f32 %v2404, %v2440
        %v2450 = vmul.f32 %v2406, %v2440
        %v2451 = vmul.f32 %v2408, %v2440
        %v2452 = vmul.f32 %v2410, %v2440
        %v2453 = vmul.f32 %v2412, %v2440
        %v2454 = vmul.f32 %v2414, %v2440
        %v2455 = vmul.f32 %v2416, %v2440
        %v2456 = vmul.f32 %v2418, %v2440
        %2457 = vadd.xlane.f32.xlu0 %v2441
        %v2458 = vpop.xlane.xlu0 %2457
        %2459 = vadd.xlane.f32.xlu0 %v2442
        %v2460 = vpop.xlane.xlu0 %2459
        %2461 = vadd.xlane.f32.xlu0 %v2443
        %v2462 = vpop.xlane.xlu0 %2461
        %2463 = vadd.xlane.f32.xlu0 %v2444
        %v2464 = vpop.xlane.xlu0 %2463
        %2465 = vadd.xlane.f32.xlu0 %v2445
        %v2466 = vpop.xlane.xlu0 %2465
        %2467 = vadd.xlane.f32.xlu0 %v2446
        %v2468 = vpop.xlane.xlu0 %2467
        %2469 = vadd.xlane.f32.xlu0 %v2447
        %v2470 = vpop.xlane.xlu0 %2469
        %2471 = vadd.xlane.f32.xlu0 %v2448
        %v2472 = vpop.xlane.xlu0 %2471
        %2473 = vadd.xlane.f32.xlu0 %v2449
        %v2474 = vpop.xlane.xlu0 %2473
        %2475 = vadd.xlane.f32.xlu0 %v2450
        %v2476 = vpop.xlane.xlu0 %2475
        %2477 = vadd.xlane.f32.xlu0 %v2451
        %v2478 = vpop.xlane.xlu0 %2477
        %2479 = vadd.xlane.f32.xlu0 %v2452
        %v2480 = vpop.xlane.xlu0 %2479
        %2481 = vadd.xlane.f32.xlu0 %v2453
        %v2482 = vpop.xlane.xlu0 %2481
        %2483 = vadd.xlane.f32.xlu0 %v2454
        %v2484 = vpop.xlane.xlu0 %2483
        %2485 = vadd.xlane.f32.xlu0 %v2455
        %v2486 = vpop.xlane.xlu0 %2485
        %2487 = vadd.xlane.f32.xlu0 %v2456
        %v2488 = vpop.xlane.xlu0 %2487
        %v2489 = vadd.f32 %v2458, 1e-09
        %v2490 = vadd.f32 %v2460, 1e-09
        %v2491 = vadd.f32 %v2462, 1e-09
        %v2492 = vadd.f32 %v2464, 1e-09
        %v2493 = vadd.f32 %v2466, 1e-09
        %v2494 = vadd.f32 %v2468, 1e-09
        %v2495 = vadd.f32 %v2470, 1e-09
        %v2496 = vadd.f32 %v2472, 1e-09
        %v2497 = vadd.f32 %v2474, 1e-09
        %v2498 = vadd.f32 %v2476, 1e-09
        %v2499 = vadd.f32 %v2478, 1e-09
        %v2500 = vadd.f32 %v2480, 1e-09
        %v2501 = vadd.f32 %v2482, 1e-09
        %v2502 = vadd.f32 %v2484, 1e-09
        %v2503 = vadd.f32 %v2486, 1e-09
        %v2504 = vadd.f32 %v2488, 1e-09
        %v2505 = vrcp.pop %v2489
        %v2506 = vrcp.pop %v2490
        %v2507 = vrcp.pop %v2491
        %v2508 = vrcp.pop %v2492
        %v2509 = vrcp.pop %v2493
        %v2510 = vrcp.pop %v2494
        %v2511 = vrcp.pop %v2495
        %v2512 = vrcp.pop %v2496
        %v2513 = vrcp.pop %v2497
        %v2514 = vrcp.pop %v2498
        %v2515 = vrcp.pop %v2499
        %v2516 = vrcp.pop %v2500
        %v2517 = vrcp.pop %v2501
        %v2518 = vrcp.pop %v2502
        %v2519 = vrcp.pop %v2503
        %v2520 = vrcp.pop %v2504
        %v2521 = vpack.c.bf16 %v2442, %v2441
        %v2522 = vpack.c.bf16 %v2444, %v2443
        %v2523 = vpack.c.bf16 %v2446, %v2445
        %v2524 = vpack.c.bf16 %v2448, %v2447
        %v2525 = vpack.c.bf16 %v2450, %v2449
        %v2526 = vpack.c.bf16 %v2452, %v2451
        %v2527 = vpack.c.bf16 %v2454, %v2453
        %v2528 = vpack.c.bf16 %v2456, %v2455
        %2529 = vmatprep.subr.bf16.mxu0 0
        %2530 = vmatpush1.bf16.msra.mxu0 %v2252
        %2531 = vmatprep.subr.bf16.mxu0 0
        %2532 = vmatpush1.bf16.msra.mxu0 %v2251
        %2533 = vmatprep.subr.bf16.mxu0 0
        %2534 = vmatpush1.bf16.msra.mxu0 %v2250
        %2535 = vmatprep.subr.bf16.mxu0 0
        %2536 = vmatpush1.bf16.msra.mxu0 %v2249
        %2537 = vmatprep.subr.bf16.mxu0 0
        %2538 = vmatpush1.bf16.msra.mxu0 %v2248
        %2539 = vmatprep.subr.bf16.mxu0 0
        %2540 = vmatpush1.bf16.msra.mxu0 %v2247
        %2541 = vmatprep.subr.bf16.mxu0 0
        %2542 = vmatpush1.bf16.msra.mxu0 %v2246
        %2543 = vmatprep.subr.bf16.mxu0 0
        %2544 = vmatpush1.bf16.msra.mxu0 %v2245
        %2545 = vmatprep.subr.bf16.mxu0 0
        %2546 = vmatpush2.bf16.msra.mxu0 0
        %2547 = vmatprep.subr.bf16.mxu0 0
        %2548 = vmatpush2.bf16.msra.mxu0 0
        %2549 = vmatprep.subr.bf16.mxu0 0
        %2550 = vmatpush2.bf16.msra.mxu0 0
        %2551 = vmatprep.subr.bf16.mxu0 0
        %2552 = vmatpush2.bf16.msra.mxu0 0
        %2553 = vmatprep.subr.bf16.mxu0 0
        %2554 = vmatpush2.bf16.msra.mxu0 0
        %2555 = vmatprep.subr.bf16.mxu0 0
        %2556 = vmatpush2.bf16.msra.mxu0 0
        %2557 = vmatprep.subr.bf16.mxu0 0
        %2558 = vmatpush2.bf16.msra.mxu0 0
        %2559 = vmatprep.subr.bf16.mxu0 0
        %2560 = vmatpush2.bf16.msra.mxu0 0
        %2561 = vmatprep.mubr.bf16.mxu0 0
        %2562 = vmatmul.mubr.bf16.gmra.mxu0 %v2521
        %v2563 = vpop.f32.mrf.mxu0
        %v2564 = vadd.f32 0.0, %v2563
        %v2565 = vpop.f32.mrf.mxu0
        %v2566 = vpop.f32.mrf.mxu0
        %v2567 = vadd.f32 0.0, %v2566
        %v2568 = vpop.f32.mrf.mxu0
        %2569 = vmatprep.mubr.bf16.mxu0 0
        %2570 = vmatmul.mubr.bf16.gmra.mxu0 %v2522
        %v2571 = vpop.f32.mrf.mxu0
        %v2572 = vadd.f32 0.0, %v2571
        %v2573 = vpop.f32.mrf.mxu0
        %v2574 = vpop.f32.mrf.mxu0
        %v2575 = vadd.f32 0.0, %v2574
        %v2576 = vpop.f32.mrf.mxu0
        %2577 = vmatprep.mubr.bf16.mxu0 0
        %2578 = vmatmul.mubr.bf16.gmra.mxu0 %v2523
        %v2579 = vpop.f32.mrf.mxu0
        %v2580 = vadd.f32 0.0, %v2579
        %v2581 = vpop.f32.mrf.mxu0
        %v2582 = vpop.f32.mrf.mxu0
        %v2583 = vadd.f32 0.0, %v2582
        %v2584 = vpop.f32.mrf.mxu0
        %2585 = vmatprep.mubr.bf16.mxu0 0
        %2586 = vmatmul.mubr.bf16.gmra.mxu0 %v2524
        %v2587 = vpop.f32.mrf.mxu0
        %v2588 = vadd.f32 0.0, %v2587
        %v2589 = vpop.f32.mrf.mxu0
        %v2590 = vpop.f32.mrf.mxu0
        %v2591 = vadd.f32 0.0, %v2590
        %v2592 = vpop.f32.mrf.mxu0
        %2593 = vmatprep.mubr.bf16.mxu0 0
        %2594 = vmatmul.mubr.bf16.gmra.mxu0 %v2525
        %v2595 = vpop.f32.mrf.mxu0
        %v2596 = vadd.f32 0.0, %v2595
        %v2597 = vpop.f32.mrf.mxu0
        %v2598 = vpop.f32.mrf.mxu0
        %v2599 = vadd.f32 0.0, %v2598
        %v2600 = vpop.f32.mrf.mxu0
        %2601 = vmatprep.mubr.bf16.mxu0 0
        %2602 = vmatmul.mubr.bf16.gmra.mxu0 %v2526
        %v2603 = vpop.f32.mrf.mxu0
        %v2604 = vadd.f32 0.0, %v2603
        %v2605 = vpop.f32.mrf.mxu0
        %v2606 = vpop.f32.mrf.mxu0
        %v2607 = vadd.f32 0.0, %v2606
        %v2608 = vpop.f32.mrf.mxu0
        %2609 = vmatprep.mubr.bf16.mxu0 0
        %2610 = vmatmul.mubr.bf16.gmra.mxu0 %v2527
        %v2611 = vpop.f32.mrf.mxu0
        %v2612 = vadd.f32 0.0, %v2611
        %v2613 = vpop.f32.mrf.mxu0
        %v2614 = vpop.f32.mrf.mxu0
        %v2615 = vadd.f32 0.0, %v2614
        %v2616 = vpop.f32.mrf.mxu0
        %2617 = vmatprep.mubr.bf16.mxu0 0
        %2618 = vmatmul.mubr.bf16.gmra.mxu0 %v2528
        %v2619 = vpop.f32.mrf.mxu0
        %v2620 = vadd.f32 0.0, %v2619
        %v2621 = vpop.f32.mrf.mxu0
        %v2622 = vpop.f32.mrf.mxu0
        %v2623 = vadd.f32 0.0, %v2622
        %v2624 = vpop.f32.mrf.mxu0
        %2625 = vdwg.mxu0
        %v2626 = vmul.f32 %v2505, %v2564
        %v2627 = vmul.f32 %v2506, %v2567
        %v2628 = vmul.f32 %v2507, %v2572
        %v2629 = vmul.f32 %v2508, %v2575
        %v2630 = vmul.f32 %v2509, %v2580
        %v2631 = vmul.f32 %v2510, %v2583
        %v2632 = vmul.f32 %v2511, %v2588
        %v2633 = vmul.f32 %v2512, %v2591
        %v2634 = vmul.f32 %v2513, %v2596
        %v2635 = vmul.f32 %v2514, %v2599
        %v2636 = vmul.f32 %v2515, %v2604
        %v2637 = vmul.f32 %v2516, %v2607
        %v2638 = vmul.f32 %v2517, %v2612
        %v2639 = vmul.f32 %v2518, %v2615
        %v2640 = vmul.f32 %v2519, %v2620
        %v2641 = vmul.f32 %v2520, %v2623
        %v2642 = vsub.f32 %v1974, %v2626
        %v2643 = vsub.f32 %v1975, %v2627
        %v2644 = vsub.f32 %v1976, %v2628
        %v2645 = vsub.f32 %v1977, %v2629
        %v2646 = vsub.f32 %v1978, %v2630
        %v2647 = vsub.f32 %v1979, %v2631
        %v2648 = vsub.f32 %v1980, %v2632
        %v2649 = vsub.f32 %v1981, %v2633
        %v2650 = vsub.f32 %v1982, %v2634
        %v2651 = vsub.f32 %v1983, %v2635
        %v2652 = vsub.f32 %v1984, %v2636
        %v2653 = vsub.f32 %v1985, %v2637
        %v2654 = vsub.f32 %v1986, %v2638
        %v2655 = vsub.f32 %v1987, %v2639
        %v2656 = vsub.f32 %v1988, %v2640
        %v2657 = vsub.f32 %v1989, %v2641
        %v2658 = vpack.c.bf16 %v2643, %v2642
        %v2659 = vpack.c.bf16 %v2645, %v2644
        %v2660 = vpack.c.bf16 %v2647, %v2646
        %v2661 = vpack.c.bf16 %v2649, %v2648
        %v2662 = vpack.c.bf16 %v2651, %v2650
        %v2663 = vpack.c.bf16 %v2653, %v2652
        %v2664 = vpack.c.bf16 %v2655, %v2654
        %v2665 = vpack.c.bf16 %v2657, %v2656
        %s2666 = scalar_lea.vmem [#allocation16], 64
        %v2667 = vld [vmem:[%s2666] sm:$0xf]
        %v2668 = vld [vmem:[%s2666 + $0x4] sm:$0xf]
        %v2669 = vld [vmem:[%s2666 + $0x8] sm:$0xf]
        %v2670 = vld [vmem:[%s2666 + $0xc] sm:$0xf]
        %v2671 = vld [vmem:[%s2666 + $0x10] sm:$0xf]
        %v2672 = vld [vmem:[%s2666 + $0x14] sm:$0xf]
        %v2673 = vld [vmem:[%s2666 + $0x18] sm:$0xf]
        %v2674 = vld [vmem:[%s2666 + $0x1c] sm:$0xf]
        %v2675 = vld [vmem:[%s2666 + $0x20] sm:$0xf]
        %v2676 = vld [vmem:[%s2666 + $0x24] sm:$0xf]
        %v2677 = vld [vmem:[%s2666 + $0x28] sm:$0xf]
        %v2678 = vld [vmem:[%s2666 + $0x2c] sm:$0xf]
        %v2679 = vld [vmem:[%s2666 + $0x30] sm:$0xf]
        %v2680 = vld [vmem:[%s2666 + $0x34] sm:$0xf]
        %v2681 = vld [vmem:[%s2666 + $0x38] sm:$0xf]
        %v2682 = vld [vmem:[%s2666 + $0x3c] sm:$0xf]
        %s2683 = scalar_lea.vmem %s10, 1
        %v2684 = vld [vmem:[%s2683] sm:$0x1]
        %v2686 = vlaneseq
        %v2687 = vshrl.u32 %v2686, 7
        %v2688 = vsub.s32 0, %v2687
        %v2689 = vrot.slane %v2684, %v2688
        %v2707 = vunpack.c.l.b16 %v2667
        %v2708 = vunpack.c.l.b16 %v2668
        %v2709 = vunpack.c.l.b16 %v2669
        %v2710 = vunpack.c.l.b16 %v2670
        %v2711 = vunpack.c.l.b16 %v2671
        %v2712 = vunpack.c.l.b16 %v2672
        %v2713 = vunpack.c.l.b16 %v2673
        %v2714 = vunpack.c.l.b16 %v2674
        %v2715 = vunpack.c.l.b16 %v2675
        %v2716 = vunpack.c.l.b16 %v2676
        %v2717 = vunpack.c.l.b16 %v2677
        %v2718 = vunpack.c.l.b16 %v2678
        %v2719 = vunpack.c.l.b16 %v2679
        %v2720 = vunpack.c.l.b16 %v2680
        %v2721 = vunpack.c.l.b16 %v2681
        %v2722 = vunpack.c.l.b16 %v2682
        %v2723 = vpack.c.b16 %v2708, %v2707
        %v2724 = vpack.c.b16 %v2710, %v2709
        %v2725 = vpack.c.b16 %v2712, %v2711
        %v2726 = vpack.c.b16 %v2714, %v2713
        %v2727 = vpack.c.b16 %v2716, %v2715
        %v2728 = vpack.c.b16 %v2718, %v2717
        %v2729 = vpack.c.b16 %v2720, %v2719
        %v2730 = vpack.c.b16 %v2722, %v2721
        %2739 = vmatprep.subr.bf16.mxu0 0
        %2740 = vmatpush1.bf16.msra.mxu0 %v2730
        %2741 = vmatprep.subr.bf16.mxu0 0
        %2742 = vmatpush1.bf16.msra.mxu0 %v2729
        %2743 = vmatprep.subr.bf16.mxu0 0
        %2744 = vmatpush1.bf16.msra.mxu0 %v2728
        %2745 = vmatprep.subr.bf16.mxu0 0
        %2746 = vmatpush1.bf16.msra.mxu0 %v2727
        %2747 = vmatprep.subr.bf16.mxu0 0
        %2748 = vmatpush1.bf16.msra.mxu0 %v2726
        %2749 = vmatprep.subr.bf16.mxu0 0
        %2750 = vmatpush1.bf16.msra.mxu0 %v2725
        %2751 = vmatprep.subr.bf16.mxu0 0
        %2752 = vmatpush1.bf16.msra.mxu0 %v2724
        %2753 = vmatprep.subr.bf16.mxu0 0
        %2754 = vmatpush1.bf16.msra.mxu0 %v2723
        %2755 = vmatprep.subr.bf16.mxu0 0
        %2756 = vmatpush2.bf16.msra.mxu0 0
        %2757 = vmatprep.subr.bf16.mxu0 0
        %2758 = vmatpush2.bf16.msra.mxu0 0
        %2759 = vmatprep.subr.bf16.mxu0 0
        %2760 = vmatpush2.bf16.msra.mxu0 0
        %2761 = vmatprep.subr.bf16.mxu0 0
        %2762 = vmatpush2.bf16.msra.mxu0 0
        %2763 = vmatprep.subr.bf16.mxu0 0
        %2764 = vmatpush2.bf16.msra.mxu0 0
        %2765 = vmatprep.subr.bf16.mxu0 0
        %2766 = vmatpush2.bf16.msra.mxu0 0
        %2767 = vmatprep.subr.bf16.mxu0 0
        %2768 = vmatpush2.bf16.msra.mxu0 0
        %2769 = vmatprep.subr.bf16.mxu0 0
        %2770 = vmatpush2.bf16.msra.mxu0 0
        %2771 = vmatprep.mubr.bf16.mxu0 0
        %2772 = vmatmul.mubr.bf16.gmra.mxu0 %v2658
        %v2773 = vpop.f32.mrf.mxu0
        %v2774 = vadd.f32 %v2689, %v2773
        %v2775 = vpop.f32.mrf.mxu0
        %v2776 = vpop.f32.mrf.mxu0
        %v2777 = vadd.f32 %v2689, %v2776
        %v2778 = vpop.f32.mrf.mxu0
        %2779 = vmatprep.mubr.bf16.mxu0 0
        %2780 = vmatmul.mubr.bf16.gmra.mxu0 %v2659
        %v2781 = vpop.f32.mrf.mxu0
        %v2782 = vadd.f32 %v2689, %v2781
        %v2783 = vpop.f32.mrf.mxu0
        %v2784 = vpop.f32.mrf.mxu0
        %v2785 = vadd.f32 %v2689, %v2784
        %v2786 = vpop.f32.mrf.mxu0
        %2787 = vmatprep.mubr.bf16.mxu0 0
        %2788 = vmatmul.mubr.bf16.gmra.mxu0 %v2660
        %v2789 = vpop.f32.mrf.mxu0
        %v2790 = vadd.f32 %v2689, %v2789
        %v2791 = vpop.f32.mrf.mxu0
        %v2792 = vpop.f32.mrf.mxu0
        %v2793 = vadd.f32 %v2689, %v2792
        %v2794 = vpop.f32.mrf.mxu0
        %2795 = vmatprep.mubr.bf16.mxu0 0
        %2796 = vmatmul.mubr.bf16.gmra.mxu0 %v2661
        %v2797 = vpop.f32.mrf.mxu0
        %v2798 = vadd.f32 %v2689, %v2797
        %v2799 = vpop.f32.mrf.mxu0
        %v2800 = vpop.f32.mrf.mxu0
        %v2801 = vadd.f32 %v2689, %v2800
        %v2802 = vpop.f32.mrf.mxu0
        %2803 = vmatprep.mubr.bf16.mxu0 0
        %2804 = vmatmul.mubr.bf16.gmra.mxu0 %v2662
        %v2805 = vpop.f32.mrf.mxu0
        %v2806 = vadd.f32 %v2689, %v2805
        %v2807 = vpop.f32.mrf.mxu0
        %v2808 = vpop.f32.mrf.mxu0
        %v2809 = vadd.f32 %v2689, %v2808
        %v2810 = vpop.f32.mrf.mxu0
        %2811 = vmatprep.mubr.bf16.mxu0 0
        %2812 = vmatmul.mubr.bf16.gmra.mxu0 %v2663
        %v2813 = vpop.f32.mrf.mxu0
        %v2814 = vadd.f32 %v2689, %v2813
        %v2815 = vpop.f32.mrf.mxu0
        %v2816 = vpop.f32.mrf.mxu0
        %v2817 = vadd.f32 %v2689, %v2816
        %v2818 = vpop.f32.mrf.mxu0
        %2819 = vmatprep.mubr.bf16.mxu0 0
        %2820 = vmatmul.mubr.bf16.gmra.mxu0 %v2664
        %v2821 = vpop.f32.mrf.mxu0
        %v2822 = vadd.f32 %v2689, %v2821
        %v2823 = vpop.f32.mrf.mxu0
        %v2824 = vpop.f32.mrf.mxu0
        %v2825 = vadd.f32 %v2689, %v2824
        %v2826 = vpop.f32.mrf.mxu0
        %2827 = vmatprep.mubr.bf16.mxu0 0
        %2828 = vmatmul.mubr.bf16.gmra.mxu0 %v2665
        %v2829 = vpop.f32.mrf.mxu0
        %v2830 = vadd.f32 %v2689, %v2829
        %v2831 = vpop.f32.mrf.mxu0
        %v2832 = vpop.f32.mrf.mxu0
        %v2833 = vadd.f32 %v2689, %v2832
        %v2834 = vpop.f32.mrf.mxu0
        %2835 = vdwg.mxu0
        %s2836 = scalar_lea.vmem %s11, 1
        %v2837 = vld [vmem:[%s2836] sm:$0x1]
        %v2839 = vlaneseq
        %v2840 = vshrl.u32 %v2839, 7
        %v2841 = vsub.s32 0, %v2840
        %v2842 = vrot.slane %v2837, %v2841
        %v2844 = vmul.f32 %v2774, %v2842
        %v2845 = vmul.f32 %v2777, %v2842
        %v2846 = vmul.f32 %v2782, %v2842
        %v2847 = vmul.f32 %v2785, %v2842
        %v2848 = vmul.f32 %v2790, %v2842
        %v2849 = vmul.f32 %v2793, %v2842
        %v2850 = vmul.f32 %v2798, %v2842
        %v2851 = vmul.f32 %v2801, %v2842
        %v2852 = vmul.f32 %v2806, %v2842
        %v2853 = vmul.f32 %v2809, %v2842
        %v2854 = vmul.f32 %v2814, %v2842
        %v2855 = vmul.f32 %v2817, %v2842
        %v2856 = vmul.f32 %v2822, %v2842
        %v2857 = vmul.f32 %v2825, %v2842
        %v2858 = vmul.f32 %v2830, %v2842
        %v2859 = vmul.f32 %v2833, %v2842
        %s2860 = scalar_lea.vmem %s12, 1
        %v2861 = vld [vmem:[%s2860] sm:$0x1]
        %v2863 = vlaneseq
        %v2864 = vshrl.u32 %v2863, 7
        %v2865 = vsub.s32 0, %v2864
        %v2866 = vrot.slane %v2861, %v2865
        %v2868 = vadd.f32 %v2844, %v2866
        %v2869 = vadd.f32 %v2845, %v2866
        %v2870 = vadd.f32 %v2846, %v2866
        %v2871 = vadd.f32 %v2847, %v2866
        %v2872 = vadd.f32 %v2848, %v2866
        %v2873 = vadd.f32 %v2849, %v2866
        %v2874 = vadd.f32 %v2850, %v2866
        %v2875 = vadd.f32 %v2851, %v2866
        %v2876 = vadd.f32 %v2852, %v2866
        %v2877 = vadd.f32 %v2853, %v2866
        %v2878 = vadd.f32 %v2854, %v2866
        %v2879 = vadd.f32 %v2855, %v2866
        %v2880 = vadd.f32 %v2856, %v2866
        %v2881 = vadd.f32 %v2857, %v2866
        %v2882 = vadd.f32 %v2858, %v2866
        %v2883 = vadd.f32 %v2859, %v2866
        %v2884 = vmax.f32 %v2868, 0.0
        %v2885 = vmax.f32 %v2869, 0.0
        %v2886 = vmax.f32 %v2870, 0.0
        %v2887 = vmax.f32 %v2871, 0.0
        %v2888 = vmax.f32 %v2872, 0.0
        %v2889 = vmax.f32 %v2873, 0.0
        %v2890 = vmax.f32 %v2874, 0.0
        %v2891 = vmax.f32 %v2875, 0.0
        %v2892 = vmax.f32 %v2876, 0.0
        %v2893 = vmax.f32 %v2877, 0.0
        %v2894 = vmax.f32 %v2878, 0.0
        %v2895 = vmax.f32 %v2879, 0.0
        %v2896 = vmax.f32 %v2880, 0.0
        %v2897 = vmax.f32 %v2881, 0.0
        %v2898 = vmax.f32 %v2882, 0.0
        %v2899 = vmax.f32 %v2883, 0.0
        %v2900 = vadd.f32 %v1974, %v2884
        %v2901 = vadd.f32 %v1975, %v2885
        %v2902 = vadd.f32 %v1976, %v2886
        %v2903 = vadd.f32 %v1977, %v2887
        %v2904 = vadd.f32 %v1978, %v2888
        %v2905 = vadd.f32 %v1979, %v2889
        %v2906 = vadd.f32 %v1980, %v2890
        %v2907 = vadd.f32 %v1981, %v2891
        %v2908 = vadd.f32 %v1982, %v2892
        %v2909 = vadd.f32 %v1983, %v2893
        %v2910 = vadd.f32 %v1984, %v2894
        %v2911 = vadd.f32 %v1985, %v2895
        %v2912 = vadd.f32 %v1986, %v2896
        %v2913 = vadd.f32 %v1987, %v2897
        %v2914 = vadd.f32 %v1988, %v2898
        %v2915 = vadd.f32 %v1989, %v2899
        %2916 = vst [vmem:[%s566 + $0x8] sm:$0xff] %v2900
        %2917 = vst [vmem:[%s566 + $0x28] sm:$0xff] %v2901
        %2918 = vst [vmem:[%s566 + $0x48] sm:$0xff] %v2902
        %2919 = vst [vmem:[%s566 + $0x68] sm:$0xff] %v2903
        %2920 = vst [vmem:[%s566 + $0x88] sm:$0xff] %v2904
        %2921 = vst [vmem:[%s566 + $0xa8] sm:$0xff] %v2905
        %2922 = vst [vmem:[%s566 + $0xc8] sm:$0xff] %v2906
        %2923 = vst [vmem:[%s566 + $0xe8] sm:$0xff] %v2907
        %2924 = vst [vmem:[%s566 + $0x108] sm:$0xff] %v2908
        %2925 = vst [vmem:[%s566 + $0x128] sm:$0xff] %v2909
        %2926 = vst [vmem:[%s566 + $0x148] sm:$0xff] %v2910
        %2927 = vst [vmem:[%s566 + $0x168] sm:$0xff] %v2911
        %2928 = vst [vmem:[%s566 + $0x188] sm:$0xff] %v2912
        %2929 = vst [vmem:[%s566 + $0x1a8] sm:$0xff] %v2913
        %2930 = vst [vmem:[%s566 + $0x1c8] sm:$0xff] %v2914
        %2931 = vst [vmem:[%s566 + $0x1e8] sm:$0xff] %v2915
        %v2932 = vpack.c.bf16 %v2901, %v2900
        %v2933 = vpack.c.bf16 %v2903, %v2902
        %v2934 = vpack.c.bf16 %v2905, %v2904
        %v2935 = vpack.c.bf16 %v2907, %v2906
        %v2936 = vpack.c.bf16 %v2909, %v2908
        %v2937 = vpack.c.bf16 %v2911, %v2910
        %v2938 = vpack.c.bf16 %v2913, %v2912
        %v2939 = vpack.c.bf16 %v2915, %v2914
        %s2940 = scalar_lea.vmem [#allocation14], 256
        %v2941 = vld [vmem:[%s2940] sm:$0xff]
        %v2942 = vld [vmem:[%s2940 + $0x8] sm:$0xff]
        %v2943 = vld [vmem:[%s2940 + $0x10] sm:$0xff]
        %v2944 = vld [vmem:[%s2940 + $0x18] sm:$0xff]
        %v2945 = vld [vmem:[%s2940 + $0x20] sm:$0xff]
        %v2946 = vld [vmem:[%s2940 + $0x28] sm:$0xff]
        %v2947 = vld [vmem:[%s2940 + $0x30] sm:$0xff]
        %v2948 = vld [vmem:[%s2940 + $0x38] sm:$0xff]
        %v2949 = vld [vmem:[%s2940 + $0x40] sm:$0xff]
        %v2950 = vld [vmem:[%s2940 + $0x48] sm:$0xff]
        %v2951 = vld [vmem:[%s2940 + $0x50] sm:$0xff]
        %v2952 = vld [vmem:[%s2940 + $0x58] sm:$0xff]
        %v2953 = vld [vmem:[%s2940 + $0x60] sm:$0xff]
        %v2954 = vld [vmem:[%s2940 + $0x68] sm:$0xff]
        %v2955 = vld [vmem:[%s2940 + $0x70] sm:$0xff]
        %v2956 = vld [vmem:[%s2940 + $0x78] sm:$0xff]
        %s2957 = scalar_lea.vmem %s8, 4
        %v2958 = vld [vmem:[%s2957] sm:$0x3]
        %v2960 = vlaneseq
        %v2961 = vshrl.u32 %v2960, 7
        %v2962 = vsub.s32 0, %v2961
        %v2963 = vrot.slane %v2958, %v2962
        %v2964 = vlaneseq
        %v2965 = vshrl.u32 %v2964, 7
        %v2966 = vsub.s32 1, %v2965
        %v2967 = vrot.slane %v2958, %v2966
        %v2986 = vunpack.c.l.b16 %v2941
        %v2987 = vunpack.c.h.b16 %v2941
        %v2988 = vunpack.c.l.b16 %v2942
        %v2989 = vunpack.c.h.b16 %v2942
        %v2990 = vunpack.c.l.b16 %v2943
        %v2991 = vunpack.c.h.b16 %v2943
        %v2992 = vunpack.c.l.b16 %v2944
        %v2993 = vunpack.c.h.b16 %v2944
        %v2994 = vunpack.c.l.b16 %v2945
        %v2995 = vunpack.c.h.b16 %v2945
        %v2996 = vunpack.c.l.b16 %v2946
        %v2997 = vunpack.c.h.b16 %v2946
        %v2998 = vunpack.c.l.b16 %v2947
        %v2999 = vunpack.c.h.b16 %v2947
        %v3000 = vunpack.c.l.b16 %v2948
        %v3001 = vunpack.c.h.b16 %v2948
        %v3002 = vunpack.c.l.b16 %v2949
        %v3003 = vunpack.c.h.b16 %v2949
        %v3004 = vunpack.c.l.b16 %v2950
        %v3005 = vunpack.c.h.b16 %v2950
        %v3006 = vunpack.c.l.b16 %v2951
        %v3007 = vunpack.c.h.b16 %v2951
        %v3008 = vunpack.c.l.b16 %v2952
        %v3009 = vunpack.c.h.b16 %v2952
        %v3010 = vunpack.c.l.b16 %v2953
        %v3011 = vunpack.c.h.b16 %v2953
        %v3012 = vunpack.c.l.b16 %v2954
        %v3013 = vunpack.c.h.b16 %v2954
        %v3014 = vunpack.c.l.b16 %v2955
        %v3015 = vunpack.c.h.b16 %v2955
        %v3016 = vunpack.c.l.b16 %v2956
        %v3017 = vunpack.c.h.b16 %v2956
        %v3018 = vpack.c.b16 %v2988, %v2986
        %v3019 = vpack.c.b16 %v2989, %v2987
        %v3020 = vpack.c.b16 %v2992, %v2990
        %v3021 = vpack.c.b16 %v2993, %v2991
        %v3022 = vpack.c.b16 %v2996, %v2994
        %v3023 = vpack.c.b16 %v2997, %v2995
        %v3024 = vpack.c.b16 %v3000, %v2998
        %v3025 = vpack.c.b16 %v3001, %v2999
        %v3026 = vpack.c.b16 %v3004, %v3002
        %v3027 = vpack.c.b16 %v3005, %v3003
        %v3028 = vpack.c.b16 %v3008, %v3006
        %v3029 = vpack.c.b16 %v3009, %v3007
        %v3030 = vpack.c.b16 %v3012, %v3010
        %v3031 = vpack.c.b16 %v3013, %v3011
        %v3032 = vpack.c.b16 %v3016, %v3014
        %v3033 = vpack.c.b16 %v3017, %v3015
        %3050 = vmatprep.subr.bf16.mxu0 %v3033
        %3051 = vmatpush1.bf16.msra.mxu0 %v3032
        %3052 = vmatprep.subr.bf16.mxu0 %v3031
        %3053 = vmatpush1.bf16.msra.mxu0 %v3030
        %3054 = vmatprep.subr.bf16.mxu0 %v3029
        %3055 = vmatpush1.bf16.msra.mxu0 %v3028
        %3056 = vmatprep.subr.bf16.mxu0 %v3027
        %3057 = vmatpush1.bf16.msra.mxu0 %v3026
        %3058 = vmatprep.subr.bf16.mxu0 %v3025
        %3059 = vmatpush1.bf16.msra.mxu0 %v3024
        %3060 = vmatprep.subr.bf16.mxu0 %v3023
        %3061 = vmatpush1.bf16.msra.mxu0 %v3022
        %3062 = vmatprep.subr.bf16.mxu0 %v3021
        %3063 = vmatpush1.bf16.msra.mxu0 %v3020
        %3064 = vmatprep.subr.bf16.mxu0 %v3019
        %3065 = vmatpush1.bf16.msra.mxu0 %v3018
        %3066 = vmatprep.subr.bf16.mxu0 0
        %3067 = vmatpush2.bf16.msra.mxu0 0
        %3068 = vmatprep.subr.bf16.mxu0 0
        %3069 = vmatpush2.bf16.msra.mxu0 0
        %3070 = vmatprep.subr.bf16.mxu0 0
        %3071 = vmatpush2.bf16.msra.mxu0 0
        %3072 = vmatprep.subr.bf16.mxu0 0
        %3073 = vmatpush2.bf16.msra.mxu0 0
        %3074 = vmatprep.subr.bf16.mxu0 0
        %3075 = vmatpush2.bf16.msra.mxu0 0
        %3076 = vmatprep.subr.bf16.mxu0 0
        %3077 = vmatpush2.bf16.msra.mxu0 0
        %3078 = vmatprep.subr.bf16.mxu0 0
        %3079 = vmatpush2.bf16.msra.mxu0 0
        %3080 = vmatprep.subr.bf16.mxu0 0
        %3081 = vmatpush2.bf16.msra.mxu0 0
        %3082 = vmatprep.mubr.bf16.mxu0 0
        %3083 = vmatmul.mubr.bf16.gmra.mxu0 %v2932
        %v3084 = vpop.f32.mrf.mxu0
        %v3085 = vadd.f32 %v2963, %v3084
        %v3086 = vpop.f32.mrf.mxu0
        %v3087 = vadd.f32 %v2967, %v3086
        %v3088 = vpop.f32.mrf.mxu0
        %v3089 = vadd.f32 %v2963, %v3088
        %v3090 = vpop.f32.mrf.mxu0
        %v3091 = vadd.f32 %v2967, %v3090
        %3092 = vmatprep.mubr.bf16.mxu0 0
        %3093 = vmatmul.mubr.bf16.gmra.mxu0 %v2933
        %v3094 = vpop.f32.mrf.mxu0
        %v3095 = vadd.f32 %v2963, %v3094
        %v3096 = vpop.f32.mrf.mxu0
        %v3097 = vadd.f32 %v2967, %v3096
        %v3098 = vpop.f32.mrf.mxu0
        %v3099 = vadd.f32 %v2963, %v3098
        %v3100 = vpop.f32.mrf.mxu0
        %v3101 = vadd.f32 %v2967, %v3100
        %3102 = vmatprep.mubr.bf16.mxu0 0
        %3103 = vmatmul.mubr.bf16.gmra.mxu0 %v2934
        %v3104 = vpop.f32.mrf.mxu0
        %v3105 = vadd.f32 %v2963, %v3104
        %v3106 = vpop.f32.mrf.mxu0
        %v3107 = vadd.f32 %v2967, %v3106
        %v3108 = vpop.f32.mrf.mxu0
        %v3109 = vadd.f32 %v2963, %v3108
        %v3110 = vpop.f32.mrf.mxu0
        %v3111 = vadd.f32 %v2967, %v3110
        %3112 = vmatprep.mubr.bf16.mxu0 0
        %3113 = vmatmul.mubr.bf16.gmra.mxu0 %v2935
        %v3114 = vpop.f32.mrf.mxu0
        %v3115 = vadd.f32 %v2963, %v3114
        %v3116 = vpop.f32.mrf.mxu0
        %v3117 = vadd.f32 %v2967, %v3116
        %v3118 = vpop.f32.mrf.mxu0
        %v3119 = vadd.f32 %v2963, %v3118
        %v3120 = vpop.f32.mrf.mxu0
        %v3121 = vadd.f32 %v2967, %v3120
        %3122 = vmatprep.mubr.bf16.mxu0 0
        %3123 = vmatmul.mubr.bf16.gmra.mxu0 %v2936
        %v3124 = vpop.f32.mrf.mxu0
        %v3125 = vadd.f32 %v2963, %v3124
        %v3126 = vpop.f32.mrf.mxu0
        %v3127 = vadd.f32 %v2967, %v3126
        %v3128 = vpop.f32.mrf.mxu0
        %v3129 = vadd.f32 %v2963, %v3128
        %v3130 = vpop.f32.mrf.mxu0
        %v3131 = vadd.f32 %v2967, %v3130
        %3132 = vmatprep.mubr.bf16.mxu0 0
        %3133 = vmatmul.mubr.bf16.gmra.mxu0 %v2937
        %v3134 = vpop.f32.mrf.mxu0
        %v3135 = vadd.f32 %v2963, %v3134
        %v3136 = vpop.f32.mrf.mxu0
        %v3137 = vadd.f32 %v2967, %v3136
        %v3138 = vpop.f32.mrf.mxu0
        %v3139 = vadd.f32 %v2963, %v3138
        %v3140 = vpop.f32.mrf.mxu0
        %v3141 = vadd.f32 %v2967, %v3140
        %3142 = vmatprep.mubr.bf16.mxu0 0
        %3143 = vmatmul.mubr.bf16.gmra.mxu0 %v2938
        %v3144 = vpop.f32.mrf.mxu0
        %v3145 = vadd.f32 %v2963, %v3144
        %v3146 = vpop.f32.mrf.mxu0
        %v3147 = vadd.f32 %v2967, %v3146
        %v3148 = vpop.f32.mrf.mxu0
        %v3149 = vadd.f32 %v2963, %v3148
        %v3150 = vpop.f32.mrf.mxu0
        %v3151 = vadd.f32 %v2967, %v3150
        %3152 = vmatprep.mubr.bf16.mxu0 0
        %3153 = vmatmul.mubr.bf16.gmra.mxu0 %v2939
        %v3154 = vpop.f32.mrf.mxu0
        %v3155 = vadd.f32 %v2963, %v3154
        %v3156 = vpop.f32.mrf.mxu0
        %v3157 = vadd.f32 %v2967, %v3156
        %v3158 = vpop.f32.mrf.mxu0
        %v3159 = vadd.f32 %v2963, %v3158
        %v3160 = vpop.f32.mrf.mxu0
        %v3161 = vadd.f32 %v2967, %v3160
        %3162 = vdwg.mxu0
        %v3163 = vpack.c.bf16 %v3089, %v3085
        %v3164 = vpack.c.bf16 %v3099, %v3095
        %v3165 = vpack.c.bf16 %v3109, %v3105
        %v3166 = vpack.c.bf16 %v3119, %v3115
        %v3167 = vpack.c.bf16 %v3129, %v3125
        %v3168 = vpack.c.bf16 %v3139, %v3135
        %v3169 = vpack.c.bf16 %v3149, %v3145
        %v3170 = vpack.c.bf16 %v3159, %v3155
        %v3171 = vpack.c.bf16 %v3091, %v3087
        %v3172 = vpack.c.bf16 %v3101, %v3097
        %v3173 = vpack.c.bf16 %v3111, %v3107
        %v3174 = vpack.c.bf16 %v3121, %v3117
        %v3175 = vpack.c.bf16 %v3131, %v3127
        %v3176 = vpack.c.bf16 %v3141, %v3137
        %v3177 = vpack.c.bf16 %v3151, %v3147
        %v3178 = vpack.c.bf16 %v3161, %v3157
        %3179 = vmatprep.subr.bf16.mxu0 0
        %3180 = vmatpush1.bf16.xpose.msra.mxu0 %v3170
        %3181 = vmatprep.subr.bf16.mxu0 0
        %3182 = vmatpush1.bf16.xpose.msra.mxu0 %v3169
        %3183 = vmatprep.subr.bf16.mxu0 0
        %3184 = vmatpush1.bf16.xpose.msra.mxu0 %v3168
        %3185 = vmatprep.subr.bf16.mxu0 0
        %3186 = vmatpush1.bf16.xpose.msra.mxu0 %v3167
        %3187 = vmatprep.subr.bf16.mxu0 0
        %3188 = vmatpush1.bf16.xpose.msra.mxu0 %v3166
        %3189 = vmatprep.subr.bf16.mxu0 0
        %3190 = vmatpush1.bf16.xpose.msra.mxu0 %v3165
        %3191 = vmatprep.subr.bf16.mxu0 0
        %3192 = vmatpush1.bf16.xpose.msra.mxu0 %v3164
        %3193 = vmatprep.subr.bf16.mxu0 0
        %3194 = vmatpush1.bf16.xpose.msra.mxu0 %v3163
        %3195 = vmatprep.subr.bf16.mxu0 0
        %3196 = vmatpush2.bf16.xpose.msra.mxu0 0
        %3197 = vmatprep.subr.bf16.mxu0 0
        %3198 = vmatpush2.bf16.xpose.msra.mxu0 0
        %3199 = vmatprep.subr.bf16.mxu0 0
        %3200 = vmatpush2.bf16.xpose.msra.mxu0 0
        %3201 = vmatprep.subr.bf16.mxu0 0
        %3202 = vmatpush2.bf16.xpose.msra.mxu0 0
        %3203 = vmatprep.subr.bf16.mxu0 0
        %3204 = vmatpush2.bf16.xpose.msra.mxu0 0
        %3205 = vmatprep.subr.bf16.mxu0 0
        %3206 = vmatpush2.bf16.xpose.msra.mxu0 0
        %3207 = vmatprep.subr.bf16.mxu0 0
        %3208 = vmatpush2.bf16.xpose.msra.mxu0 0
        %3209 = vmatprep.subr.bf16.mxu0 0
        %3210 = vmatpush2.bf16.xpose.msra.mxu0 0
        %3211 = vmatprep.mubr.bf16.mxu0 0
        %3212 = vmatmul.mubr.bf16.gmra.mxu0 %v3163
        %v3213 = vpop.f32.mrf.mxu0
        %v3214 = vadd.f32 0.0, %v3213
        %v3215 = vpop.f32.mrf.mxu0
        %v3216 = vpop.f32.mrf.mxu0
        %v3217 = vadd.f32 0.0, %v3216
        %v3218 = vpop.f32.mrf.mxu0
        %3219 = vmatprep.mubr.bf16.mxu0 0
        %3220 = vmatmul.mubr.bf16.gmra.mxu0 %v3164
        %v3221 = vpop.f32.mrf.mxu0
        %v3222 = vadd.f32 0.0, %v3221
        %v3223 = vpop.f32.mrf.mxu0
        %v3224 = vpop.f32.mrf.mxu0
        %v3225 = vadd.f32 0.0, %v3224
        %v3226 = vpop.f32.mrf.mxu0
        %3227 = vmatprep.mubr.bf16.mxu0 0
        %3228 = vmatmul.mubr.bf16.gmra.mxu0 %v3165
        %v3229 = vpop.f32.mrf.mxu0
        %v3230 = vadd.f32 0.0, %v3229
        %v3231 = vpop.f32.mrf.mxu0
        %v3232 = vpop.f32.mrf.mxu0
        %v3233 = vadd.f32 0.0, %v3232
        %v3234 = vpop.f32.mrf.mxu0
        %3235 = vmatprep.mubr.bf16.mxu0 0
        %3236 = vmatmul.mubr.bf16.gmra.mxu0 %v3166
        %v3237 = vpop.f32.mrf.mxu0
        %v3238 = vadd.f32 0.0, %v3237
        %v3239 = vpop.f32.mrf.mxu0
        %v3240 = vpop.f32.mrf.mxu0
        %v3241 = vadd.f32 0.0, %v3240
        %v3242 = vpop.f32.mrf.mxu0
        %3243 = vmatprep.mubr.bf16.mxu0 0
        %3244 = vmatmul.mubr.bf16.gmra.mxu0 %v3167
        %v3245 = vpop.f32.mrf.mxu0
        %v3246 = vadd.f32 0.0, %v3245
        %v3247 = vpop.f32.mrf.mxu0
        %v3248 = vpop.f32.mrf.mxu0
        %v3249 = vadd.f32 0.0, %v3248
        %v3250 = vpop.f32.mrf.mxu0
        %3251 = vmatprep.mubr.bf16.mxu0 0
        %3252 = vmatmul.mubr.bf16.gmra.mxu0 %v3168
        %v3253 = vpop.f32.mrf.mxu0
        %v3254 = vadd.f32 0.0, %v3253
        %v3255 = vpop.f32.mrf.mxu0
        %v3256 = vpop.f32.mrf.mxu0
        %v3257 = vadd.f32 0.0, %v3256
        %v3258 = vpop.f32.mrf.mxu0
        %3259 = vmatprep.mubr.bf16.mxu0 0
        %3260 = vmatmul.mubr.bf16.gmra.mxu0 %v3169
        %v3261 = vpop.f32.mrf.mxu0
        %v3262 = vadd.f32 0.0, %v3261
        %v3263 = vpop.f32.mrf.mxu0
        %v3264 = vpop.f32.mrf.mxu0
        %v3265 = vadd.f32 0.0, %v3264
        %v3266 = vpop.f32.mrf.mxu0
        %3267 = vmatprep.mubr.bf16.mxu0 0
        %3268 = vmatmul.mubr.bf16.gmra.mxu0 %v3170
        %v3269 = vpop.f32.mrf.mxu0
        %v3270 = vadd.f32 0.0, %v3269
        %v3271 = vpop.f32.mrf.mxu0
        %v3272 = vpop.f32.mrf.mxu0
        %v3273 = vadd.f32 0.0, %v3272
        %v3274 = vpop.f32.mrf.mxu0
        %3275 = vdwg.mxu0
        %v3276 = vmax.f32 %v3214, %v3230
        %v3277 = vmax.f32 %v3217, %v3233
        %v3278 = vmax.f32 %v3222, %v3238
        %v3279 = vmax.f32 %v3225, %v3241
        %v3280 = vmax.f32 %v3276, %v3246
        %v3281 = vmax.f32 %v3277, %v3249
        %v3282 = vmax.f32 %v3278, %v3254
        %v3283 = vmax.f32 %v3279, %v3257
        %v3284 = vmax.f32 %v3280, %v3262
        %v3285 = vmax.f32 %v3281, %v3265
        %v3286 = vmax.f32 %v3282, %v3270
        %v3287 = vmax.f32 %v3283, %v3273
        %v3288 = vmax.f32 %v3284, %v3285
        %v3289 = vmax.f32 %v3286, %v3287
        %v3290 = vmax.f32 %v3288, %v3289
        %v3291 = vrot.slane %v3290, 4
        %v3292 = vmax.f32 %v3290, %v3291
        %v3293 = vrot.slane %v3292, 2
        %v3294 = vmax.f32 %v3292, %v3293
        %v3295 = vrot.slane %v3294, 1
        %v3296 = vmax.f32 %v3294, %v3295
        %v3297 = vsub.f32 %v3214, %v3296
        %v3298 = vsub.f32 %v3217, %v3296
        %v3299 = vsub.f32 %v3222, %v3296
        %v3300 = vsub.f32 %v3225, %v3296
        %v3301 = vsub.f32 %v3230, %v3296
        %v3302 = vsub.f32 %v3233, %v3296
        %v3303 = vsub.f32 %v3238, %v3296
        %v3304 = vsub.f32 %v3241, %v3296
        %v3305 = vsub.f32 %v3246, %v3296
        %v3306 = vsub.f32 %v3249, %v3296
        %v3307 = vsub.f32 %v3254, %v3296
        %v3308 = vsub.f32 %v3257, %v3296
        %v3309 = vsub.f32 %v3262, %v3296
        %v3310 = vsub.f32 %v3265, %v3296
        %v3311 = vsub.f32 %v3270, %v3296
        %v3312 = vsub.f32 %v3273, %v3296
        %v3313 = vmul.f32 %v3297, 1.442695
        %v3314 = vpow.pop %v3313
        %v3315 = vmul.f32 %v3298, 1.442695
        %v3316 = vpow.pop %v3315
        %v3317 = vmul.f32 %v3299, 1.442695
        %v3318 = vpow.pop %v3317
        %v3319 = vmul.f32 %v3300, 1.442695
        %v3320 = vpow.pop %v3319
        %v3321 = vmul.f32 %v3301, 1.442695
        %v3322 = vpow.pop %v3321
        %v3323 = vmul.f32 %v3302, 1.442695
        %v3324 = vpow.pop %v3323
        %v3325 = vmul.f32 %v3303, 1.442695
        %v3326 = vpow.pop %v3325
        %v3327 = vmul.f32 %v3304, 1.442695
        %v3328 = vpow.pop %v3327
        %v3329 = vmul.f32 %v3305, 1.442695
        %v3330 = vpow.pop %v3329
        %v3331 = vmul.f32 %v3306, 1.442695
        %v3332 = vpow.pop %v3331
        %v3333 = vmul.f32 %v3307, 1.442695
        %v3334 = vpow.pop %v3333
        %v3335 = vmul.f32 %v3308, 1.442695
        %v3336 = vpow.pop %v3335
        %v3337 = vmul.f32 %v3309, 1.442695
        %v3338 = vpow.pop %v3337
        %v3339 = vmul.f32 %v3310, 1.442695
        %v3340 = vpow.pop %v3339
        %v3341 = vmul.f32 %v3311, 1.442695
        %v3342 = vpow.pop %v3341
        %v3343 = vmul.f32 %v3312, 1.442695
        %v3344 = vpow.pop %v3343
        %v3345 = vadd.f32 %v3314, %v3316
        %v3346 = vadd.f32 %v3345, %v3318
        %v3347 = vadd.f32 %v3346, %v3320
        %v3348 = vadd.f32 %v3347, %v3322
        %v3349 = vadd.f32 %v3348, %v3324
        %v3350 = vadd.f32 %v3349, %v3326
        %v3351 = vadd.f32 %v3350, %v3328
        %v3352 = vadd.f32 %v3351, %v3330
        %v3353 = vadd.f32 %v3352, %v3332
        %v3354 = vadd.f32 %v3353, %v3334
        %v3355 = vadd.f32 %v3354, %v3336
        %v3356 = vadd.f32 %v3355, %v3338
        %v3357 = vadd.f32 %v3356, %v3340
        %v3358 = vadd.f32 %v3357, %v3342
        %v3359 = vadd.f32 %v3358, %v3344
        %v3360 = vrot.slane %v3359, 4
        %v3361 = vadd.f32 %v3359, %v3360
        %v3362 = vrot.slane %v3361, 2
        %v3363 = vadd.f32 %v3361, %v3362
        %v3364 = vrot.slane %v3363, 1
        %v3365 = vadd.f32 %v3363, %v3364
        %v3366 = vrcp.pop %v3365
        %v3367 = vmul.f32 %v3314, %v3366
        %v3368 = vmul.f32 %v3316, %v3366
        %v3369 = vmul.f32 %v3318, %v3366
        %v3370 = vmul.f32 %v3320, %v3366
        %v3371 = vmul.f32 %v3322, %v3366
        %v3372 = vmul.f32 %v3324, %v3366
        %v3373 = vmul.f32 %v3326, %v3366
        %v3374 = vmul.f32 %v3328, %v3366
        %v3375 = vmul.f32 %v3330, %v3366
        %v3376 = vmul.f32 %v3332, %v3366
        %v3377 = vmul.f32 %v3334, %v3366
        %v3378 = vmul.f32 %v3336, %v3366
        %v3379 = vmul.f32 %v3338, %v3366
        %v3380 = vmul.f32 %v3340, %v3366
        %v3381 = vmul.f32 %v3342, %v3366
        %v3382 = vmul.f32 %v3344, %v3366
        %3383 = vadd.xlane.f32.xlu0 %v3367
        %v3384 = vpop.xlane.xlu0 %3383
        %3385 = vadd.xlane.f32.xlu0 %v3368
        %v3386 = vpop.xlane.xlu0 %3385
        %3387 = vadd.xlane.f32.xlu0 %v3369
        %v3388 = vpop.xlane.xlu0 %3387
        %3389 = vadd.xlane.f32.xlu0 %v3370
        %v3390 = vpop.xlane.xlu0 %3389
        %3391 = vadd.xlane.f32.xlu0 %v3371
        %v3392 = vpop.xlane.xlu0 %3391
        %3393 = vadd.xlane.f32.xlu0 %v3372
        %v3394 = vpop.xlane.xlu0 %3393
        %3395 = vadd.xlane.f32.xlu0 %v3373
        %v3396 = vpop.xlane.xlu0 %3395
        %3397 = vadd.xlane.f32.xlu0 %v3374
        %v3398 = vpop.xlane.xlu0 %3397
        %3399 = vadd.xlane.f32.xlu0 %v3375
        %v3400 = vpop.xlane.xlu0 %3399
        %3401 = vadd.xlane.f32.xlu0 %v3376
        %v3402 = vpop.xlane.xlu0 %3401
        %3403 = vadd.xlane.f32.xlu0 %v3377
        %v3404 = vpop.xlane.xlu0 %3403
        %3405 = vadd.xlane.f32.xlu0 %v3378
        %v3406 = vpop.xlane.xlu0 %3405
        %3407 = vadd.xlane.f32.xlu0 %v3379
        %v3408 = vpop.xlane.xlu0 %3407
        %3409 = vadd.xlane.f32.xlu0 %v3380
        %v3410 = vpop.xlane.xlu0 %3409
        %3411 = vadd.xlane.f32.xlu0 %v3381
        %v3412 = vpop.xlane.xlu0 %3411
        %3413 = vadd.xlane.f32.xlu0 %v3382
        %v3414 = vpop.xlane.xlu0 %3413
        %v3415 = vadd.f32 %v3384, 1e-09
        %v3416 = vadd.f32 %v3386, 1e-09
        %v3417 = vadd.f32 %v3388, 1e-09
        %v3418 = vadd.f32 %v3390, 1e-09
        %v3419 = vadd.f32 %v3392, 1e-09
        %v3420 = vadd.f32 %v3394, 1e-09
        %v3421 = vadd.f32 %v3396, 1e-09
        %v3422 = vadd.f32 %v3398, 1e-09
        %v3423 = vadd.f32 %v3400, 1e-09
        %v3424 = vadd.f32 %v3402, 1e-09
        %v3425 = vadd.f32 %v3404, 1e-09
        %v3426 = vadd.f32 %v3406, 1e-09
        %v3427 = vadd.f32 %v3408, 1e-09
        %v3428 = vadd.f32 %v3410, 1e-09
        %v3429 = vadd.f32 %v3412, 1e-09
        %v3430 = vadd.f32 %v3414, 1e-09
        %v3431 = vrcp.pop %v3415
        %v3432 = vrcp.pop %v3416
        %v3433 = vrcp.pop %v3417
        %v3434 = vrcp.pop %v3418
        %v3435 = vrcp.pop %v3419
        %v3436 = vrcp.pop %v3420
        %v3437 = vrcp.pop %v3421
        %v3438 = vrcp.pop %v3422
        %v3439 = vrcp.pop %v3423
        %v3440 = vrcp.pop %v3424
        %v3441 = vrcp.pop %v3425
        %v3442 = vrcp.pop %v3426
        %v3443 = vrcp.pop %v3427
        %v3444 = vrcp.pop %v3428
        %v3445 = vrcp.pop %v3429
        %v3446 = vrcp.pop %v3430
        %v3447 = vpack.c.bf16 %v3368, %v3367
        %v3448 = vpack.c.bf16 %v3370, %v3369
        %v3449 = vpack.c.bf16 %v3372, %v3371
        %v3450 = vpack.c.bf16 %v3374, %v3373
        %v3451 = vpack.c.bf16 %v3376, %v3375
        %v3452 = vpack.c.bf16 %v3378, %v3377
        %v3453 = vpack.c.bf16 %v3380, %v3379
        %v3454 = vpack.c.bf16 %v3382, %v3381
        %3455 = vmatprep.subr.bf16.mxu0 0
        %3456 = vmatpush1.bf16.msra.mxu0 %v3178
        %3457 = vmatprep.subr.bf16.mxu0 0
        %3458 = vmatpush1.bf16.msra.mxu0 %v3177
        %3459 = vmatprep.subr.bf16.mxu0 0
        %3460 = vmatpush1.bf16.msra.mxu0 %v3176
        %3461 = vmatprep.subr.bf16.mxu0 0
        %3462 = vmatpush1.bf16.msra.mxu0 %v3175
        %3463 = vmatprep.subr.bf16.mxu0 0
        %3464 = vmatpush1.bf16.msra.mxu0 %v3174
        %3465 = vmatprep.subr.bf16.mxu0 0
        %3466 = vmatpush1.bf16.msra.mxu0 %v3173
        %3467 = vmatprep.subr.bf16.mxu0 0
        %3468 = vmatpush1.bf16.msra.mxu0 %v3172
        %3469 = vmatprep.subr.bf16.mxu0 0
        %3470 = vmatpush1.bf16.msra.mxu0 %v3171
        %3471 = vmatprep.subr.bf16.mxu0 0
        %3472 = vmatpush2.bf16.msra.mxu0 0
        %3473 = vmatprep.subr.bf16.mxu0 0
        %3474 = vmatpush2.bf16.msra.mxu0 0
        %3475 = vmatprep.subr.bf16.mxu0 0
        %3476 = vmatpush2.bf16.msra.mxu0 0
        %3477 = vmatprep.subr.bf16.mxu0 0
        %3478 = vmatpush2.bf16.msra.mxu0 0
        %3479 = vmatprep.subr.bf16.mxu0 0
        %3480 = vmatpush2.bf16.msra.mxu0 0
        %3481 = vmatprep.subr.bf16.mxu0 0
        %3482 = vmatpush2.bf16.msra.mxu0 0
        %3483 = vmatprep.subr.bf16.mxu0 0
        %3484 = vmatpush2.bf16.msra.mxu0 0
        %3485 = vmatprep.subr.bf16.mxu0 0
        %3486 = vmatpush2.bf16.msra.mxu0 0
        %3487 = vmatprep.mubr.bf16.mxu0 0
        %3488 = vmatmul.mubr.bf16.gmra.mxu0 %v3447
        %v3489 = vpop.f32.mrf.mxu0
        %v3490 = vadd.f32 0.0, %v3489
        %v3491 = vpop.f32.mrf.mxu0
        %v3492 = vpop.f32.mrf.mxu0
        %v3493 = vadd.f32 0.0, %v3492
        %v3494 = vpop.f32.mrf.mxu0
        %3495 = vmatprep.mubr.bf16.mxu0 0
        %3496 = vmatmul.mubr.bf16.gmra.mxu0 %v3448
        %v3497 = vpop.f32.mrf.mxu0
        %v3498 = vadd.f32 0.0, %v3497
        %v3499 = vpop.f32.mrf.mxu0
        %v3500 = vpop.f32.mrf.mxu0
        %v3501 = vadd.f32 0.0, %v3500
        %v3502 = vpop.f32.mrf.mxu0
        %3503 = vmatprep.mubr.bf16.mxu0 0
        %3504 = vmatmul.mubr.bf16.gmra.mxu0 %v3449
        %v3505 = vpop.f32.mrf.mxu0
        %v3506 = vadd.f32 0.0, %v3505
        %v3507 = vpop.f32.mrf.mxu0
        %v3508 = vpop.f32.mrf.mxu0
        %v3509 = vadd.f32 0.0, %v3508
        %v3510 = vpop.f32.mrf.mxu0
        %3511 = vmatprep.mubr.bf16.mxu0 0
        %3512 = vmatmul.mubr.bf16.gmra.mxu0 %v3450
        %v3513 = vpop.f32.mrf.mxu0
        %v3514 = vadd.f32 0.0, %v3513
        %v3515 = vpop.f32.mrf.mxu0
        %v3516 = vpop.f32.mrf.mxu0
        %v3517 = vadd.f32 0.0, %v3516
        %v3518 = vpop.f32.mrf.mxu0
        %3519 = vmatprep.mubr.bf16.mxu0 0
        %3520 = vmatmul.mubr.bf16.gmra.mxu0 %v3451
        %v3521 = vpop.f32.mrf.mxu0
        %v3522 = vadd.f32 0.0, %v3521
        %v3523 = vpop.f32.mrf.mxu0
        %v3524 = vpop.f32.mrf.mxu0
        %v3525 = vadd.f32 0.0, %v3524
        %v3526 = vpop.f32.mrf.mxu0
        %3527 = vmatprep.mubr.bf16.mxu0 0
        %3528 = vmatmul.mubr.bf16.gmra.mxu0 %v3452
        %v3529 = vpop.f32.mrf.mxu0
        %v3530 = vadd.f32 0.0, %v3529
        %v3531 = vpop.f32.mrf.mxu0
        %v3532 = vpop.f32.mrf.mxu0
        %v3533 = vadd.f32 0.0, %v3532
        %v3534 = vpop.f32.mrf.mxu0
        %3535 = vmatprep.mubr.bf16.mxu0 0
        %3536 = vmatmul.mubr.bf16.gmra.mxu0 %v3453
        %v3537 = vpop.f32.mrf.mxu0
        %v3538 = vadd.f32 0.0, %v3537
        %v3539 = vpop.f32.mrf.mxu0
        %v3540 = vpop.f32.mrf.mxu0
        %v3541 = vadd.f32 0.0, %v3540
        %v3542 = vpop.f32.mrf.mxu0
        %3543 = vmatprep.mubr.bf16.mxu0 0
        %3544 = vmatmul.mubr.bf16.gmra.mxu0 %v3454
        %v3545 = vpop.f32.mrf.mxu0
        %v3546 = vadd.f32 0.0, %v3545
        %v3547 = vpop.f32.mrf.mxu0
        %v3548 = vpop.f32.mrf.mxu0
        %v3549 = vadd.f32 0.0, %v3548
        %v3550 = vpop.f32.mrf.mxu0
        %3551 = vdwg.mxu0
        %v3552 = vmul.f32 %v3431, %v3490
        %v3553 = vmul.f32 %v3432, %v3493
        %v3554 = vmul.f32 %v3433, %v3498
        %v3555 = vmul.f32 %v3434, %v3501
        %v3556 = vmul.f32 %v3435, %v3506
        %v3557 = vmul.f32 %v3436, %v3509
        %v3558 = vmul.f32 %v3437, %v3514
        %v3559 = vmul.f32 %v3438, %v3517
        %v3560 = vmul.f32 %v3439, %v3522
        %v3561 = vmul.f32 %v3440, %v3525
        %v3562 = vmul.f32 %v3441, %v3530
        %v3563 = vmul.f32 %v3442, %v3533
        %v3564 = vmul.f32 %v3443, %v3538
        %v3565 = vmul.f32 %v3444, %v3541
        %v3566 = vmul.f32 %v3445, %v3546
        %v3567 = vmul.f32 %v3446, %v3549
        %v3568 = vsub.f32 %v2900, %v3552
        %v3569 = vsub.f32 %v2901, %v3553
        %v3570 = vsub.f32 %v2902, %v3554
        %v3571 = vsub.f32 %v2903, %v3555
        %v3572 = vsub.f32 %v2904, %v3556
        %v3573 = vsub.f32 %v2905, %v3557
        %v3574 = vsub.f32 %v2906, %v3558
        %v3575 = vsub.f32 %v2907, %v3559
        %v3576 = vsub.f32 %v2908, %v3560
        %v3577 = vsub.f32 %v2909, %v3561
        %v3578 = vsub.f32 %v2910, %v3562
        %v3579 = vsub.f32 %v2911, %v3563
        %v3580 = vsub.f32 %v2912, %v3564
        %v3581 = vsub.f32 %v2913, %v3565
        %v3582 = vsub.f32 %v2914, %v3566
        %v3583 = vsub.f32 %v2915, %v3567
        %v3584 = vpack.c.bf16 %v3569, %v3568
        %v3585 = vpack.c.bf16 %v3571, %v3570
        %v3586 = vpack.c.bf16 %v3573, %v3572
        %v3587 = vpack.c.bf16 %v3575, %v3574
        %v3588 = vpack.c.bf16 %v3577, %v3576
        %v3589 = vpack.c.bf16 %v3579, %v3578
        %v3590 = vpack.c.bf16 %v3581, %v3580
        %v3591 = vpack.c.bf16 %v3583, %v3582
        %s3592 = scalar_lea.vmem [#allocation16], 128
        %v3593 = vld [vmem:[%s3592] sm:$0xf]
        %v3594 = vld [vmem:[%s3592 + $0x4] sm:$0xf]
        %v3595 = vld [vmem:[%s3592 + $0x8] sm:$0xf]
        %v3596 = vld [vmem:[%s3592 + $0xc] sm:$0xf]
        %v3597 = vld [vmem:[%s3592 + $0x10] sm:$0xf]
        %v3598 = vld [vmem:[%s3592 + $0x14] sm:$0xf]
        %v3599 = vld [vmem:[%s3592 + $0x18] sm:$0xf]
        %v3600 = vld [vmem:[%s3592 + $0x1c] sm:$0xf]
        %v3601 = vld [vmem:[%s3592 + $0x20] sm:$0xf]
        %v3602 = vld [vmem:[%s3592 + $0x24] sm:$0xf]
        %v3603 = vld [vmem:[%s3592 + $0x28] sm:$0xf]
        %v3604 = vld [vmem:[%s3592 + $0x2c] sm:$0xf]
        %v3605 = vld [vmem:[%s3592 + $0x30] sm:$0xf]
        %v3606 = vld [vmem:[%s3592 + $0x34] sm:$0xf]
        %v3607 = vld [vmem:[%s3592 + $0x38] sm:$0xf]
        %v3608 = vld [vmem:[%s3592 + $0x3c] sm:$0xf]
        %s3609 = scalar_lea.vmem %s10, 2
        %v3610 = vld [vmem:[%s3609] sm:$0x1]
        %v3612 = vlaneseq
        %v3613 = vshrl.u32 %v3612, 7
        %v3614 = vsub.s32 0, %v3613
        %v3615 = vrot.slane %v3610, %v3614
        %v3633 = vunpack.c.l.b16 %v3593
        %v3634 = vunpack.c.l.b16 %v3594
        %v3635 = vunpack.c.l.b16 %v3595
        %v3636 = vunpack.c.l.b16 %v3596
        %v3637 = vunpack.c.l.b16 %v3597
        %v3638 = vunpack.c.l.b16 %v3598
        %v3639 = vunpack.c.l.b16 %v3599
        %v3640 = vunpack.c.l.b16 %v3600
        %v3641 = vunpack.c.l.b16 %v3601
        %v3642 = vunpack.c.l.b16 %v3602
        %v3643 = vunpack.c.l.b16 %v3603
        %v3644 = vunpack.c.l.b16 %v3604
        %v3645 = vunpack.c.l.b16 %v3605
        %v3646 = vunpack.c.l.b16 %v3606
        %v3647 = vunpack.c.l.b16 %v3607
        %v3648 = vunpack.c.l.b16 %v3608
        %v3649 = vpack.c.b16 %v3634, %v3633
        %v3650 = vpack.c.b16 %v3636, %v3635
        %v3651 = vpack.c.b16 %v3638, %v3637
        %v3652 = vpack.c.b16 %v3640, %v3639
        %v3653 = vpack.c.b16 %v3642, %v3641
        %v3654 = vpack.c.b16 %v3644, %v3643
        %v3655 = vpack.c.b16 %v3646, %v3645
        %v3656 = vpack.c.b16 %v3648, %v3647
        %3665 = vmatprep.subr.bf16.mxu0 0
        %3666 = vmatpush1.bf16.msra.mxu0 %v3656
        %3667 = vmatprep.subr.bf16.mxu0 0
        %3668 = vmatpush1.bf16.msra.mxu0 %v3655
        %3669 = vmatprep.subr.bf16.mxu0 0
        %3670 = vmatpush1.bf16.msra.mxu0 %v3654
        %3671 = vmatprep.subr.bf16.mxu0 0
        %3672 = vmatpush1.bf16.msra.mxu0 %v3653
        %3673 = vmatprep.subr.bf16.mxu0 0
        %3674 = vmatpush1.bf16.msra.mxu0 %v3652
        %3675 = vmatprep.subr.bf16.mxu0 0
        %3676 = vmatpush1.bf16.msra.mxu0 %v3651
        %3677 = vmatprep.subr.bf16.mxu0 0
        %3678 = vmatpush1.bf16.msra.mxu0 %v3650
        %3679 = vmatprep.subr.bf16.mxu0 0
        %3680 = vmatpush1.bf16.msra.mxu0 %v3649
        %3681 = vmatprep.subr.bf16.mxu0 0
        %3682 = vmatpush2.bf16.msra.mxu0 0
        %3683 = vmatprep.subr.bf16.mxu0 0
        %3684 = vmatpush2.bf16.msra.mxu0 0
        %3685 = vmatprep.subr.bf16.mxu0 0
        %3686 = vmatpush2.bf16.msra.mxu0 0
        %3687 = vmatprep.subr.bf16.mxu0 0
        %3688 = vmatpush2.bf16.msra.mxu0 0
        %3689 = vmatprep.subr.bf16.mxu0 0
        %3690 = vmatpush2.bf16.msra.mxu0 0
        %3691 = vmatprep.subr.bf16.mxu0 0
        %3692 = vmatpush2.bf16.msra.mxu0 0
        %3693 = vmatprep.subr.bf16.mxu0 0
        %3694 = vmatpush2.bf16.msra.mxu0 0
        %3695 = vmatprep.subr.bf16.mxu0 0
        %3696 = vmatpush2.bf16.msra.mxu0 0
        %3697 = vmatprep.mubr.bf16.mxu0 0
        %3698 = vmatmul.mubr.bf16.gmra.mxu0 %v3584
        %v3699 = vpop.f32.mrf.mxu0
        %v3700 = vadd.f32 %v3615, %v3699
        %v3701 = vpop.f32.mrf.mxu0
        %v3702 = vpop.f32.mrf.mxu0
        %v3703 = vadd.f32 %v3615, %v3702
        %v3704 = vpop.f32.mrf.mxu0
        %3705 = vmatprep.mubr.bf16.mxu0 0
        %3706 = vmatmul.mubr.bf16.gmra.mxu0 %v3585
        %v3707 = vpop.f32.mrf.mxu0
        %v3708 = vadd.f32 %v3615, %v3707
        %v3709 = vpop.f32.mrf.mxu0
        %v3710 = vpop.f32.mrf.mxu0
        %v3711 = vadd.f32 %v3615, %v3710
        %v3712 = vpop.f32.mrf.mxu0
        %3713 = vmatprep.mubr.bf16.mxu0 0
        %3714 = vmatmul.mubr.bf16.gmra.mxu0 %v3586
        %v3715 = vpop.f32.mrf.mxu0
        %v3716 = vadd.f32 %v3615, %v3715
        %v3717 = vpop.f32.mrf.mxu0
        %v3718 = vpop.f32.mrf.mxu0
        %v3719 = vadd.f32 %v3615, %v3718
        %v3720 = vpop.f32.mrf.mxu0
        %3721 = vmatprep.mubr.bf16.mxu0 0
        %3722 = vmatmul.mubr.bf16.gmra.mxu0 %v3587
        %v3723 = vpop.f32.mrf.mxu0
        %v3724 = vadd.f32 %v3615, %v3723
        %v3725 = vpop.f32.mrf.mxu0
        %v3726 = vpop.f32.mrf.mxu0
        %v3727 = vadd.f32 %v3615, %v3726
        %v3728 = vpop.f32.mrf.mxu0
        %3729 = vmatprep.mubr.bf16.mxu0 0
        %3730 = vmatmul.mubr.bf16.gmra.mxu0 %v3588
        %v3731 = vpop.f32.mrf.mxu0
        %v3732 = vadd.f32 %v3615, %v3731
        %v3733 = vpop.f32.mrf.mxu0
        %v3734 = vpop.f32.mrf.mxu0
        %v3735 = vadd.f32 %v3615, %v3734
        %v3736 = vpop.f32.mrf.mxu0
        %3737 = vmatprep.mubr.bf16.mxu0 0
        %3738 = vmatmul.mubr.bf16.gmra.mxu0 %v3589
        %v3739 = vpop.f32.mrf.mxu0
        %v3740 = vadd.f32 %v3615, %v3739
        %v3741 = vpop.f32.mrf.mxu0
        %v3742 = vpop.f32.mrf.mxu0
        %v3743 = vadd.f32 %v3615, %v3742
        %v3744 = vpop.f32.mrf.mxu0
        %3745 = vmatprep.mubr.bf16.mxu0 0
        %3746 = vmatmul.mubr.bf16.gmra.mxu0 %v3590
        %v3747 = vpop.f32.mrf.mxu0
        %v3748 = vadd.f32 %v3615, %v3747
        %v3749 = vpop.f32.mrf.mxu0
        %v3750 = vpop.f32.mrf.mxu0
        %v3751 = vadd.f32 %v3615, %v3750
        %v3752 = vpop.f32.mrf.mxu0
        %3753 = vmatprep.mubr.bf16.mxu0 0
        %3754 = vmatmul.mubr.bf16.gmra.mxu0 %v3591
        %v3755 = vpop.f32.mrf.mxu0
        %v3756 = vadd.f32 %v3615, %v3755
        %v3757 = vpop.f32.mrf.mxu0
        %v3758 = vpop.f32.mrf.mxu0
        %v3759 = vadd.f32 %v3615, %v3758
        %v3760 = vpop.f32.mrf.mxu0
        %3761 = vdwg.mxu0
        %s3762 = scalar_lea.vmem %s11, 2
        %v3763 = vld [vmem:[%s3762] sm:$0x1]
        %v3765 = vlaneseq
        %v3766 = vshrl.u32 %v3765, 7
        %v3767 = vsub.s32 0, %v3766
        %v3768 = vrot.slane %v3763, %v3767
        %v3770 = vmul.f32 %v3700, %v3768
        %v3771 = vmul.f32 %v3703, %v3768
        %v3772 = vmul.f32 %v3708, %v3768
        %v3773 = vmul.f32 %v3711, %v3768
        %v3774 = vmul.f32 %v3716, %v3768
        %v3775 = vmul.f32 %v3719, %v3768
        %v3776 = vmul.f32 %v3724, %v3768
        %v3777 = vmul.f32 %v3727, %v3768
        %v3778 = vmul.f32 %v3732, %v3768
        %v3779 = vmul.f32 %v3735, %v3768
        %v3780 = vmul.f32 %v3740, %v3768
        %v3781 = vmul.f32 %v3743, %v3768
        %v3782 = vmul.f32 %v3748, %v3768
        %v3783 = vmul.f32 %v3751, %v3768
        %v3784 = vmul.f32 %v3756, %v3768
        %v3785 = vmul.f32 %v3759, %v3768
        %s3786 = scalar_lea.vmem %s12, 2
        %v3787 = vld [vmem:[%s3786] sm:$0x1]
        %v3789 = vlaneseq
        %v3790 = vshrl.u32 %v3789, 7
        %v3791 = vsub.s32 0, %v3790
        %v3792 = vrot.slane %v3787, %v3791
        %v3794 = vadd.f32 %v3770, %v3792
        %v3795 = vadd.f32 %v3771, %v3792
        %v3796 = vadd.f32 %v3772, %v3792
        %v3797 = vadd.f32 %v3773, %v3792
        %v3798 = vadd.f32 %v3774, %v3792
        %v3799 = vadd.f32 %v3775, %v3792
        %v3800 = vadd.f32 %v3776, %v3792
        %v3801 = vadd.f32 %v3777, %v3792
        %v3802 = vadd.f32 %v3778, %v3792
        %v3803 = vadd.f32 %v3779, %v3792
        %v3804 = vadd.f32 %v3780, %v3792
        %v3805 = vadd.f32 %v3781, %v3792
        %v3806 = vadd.f32 %v3782, %v3792
        %v3807 = vadd.f32 %v3783, %v3792
        %v3808 = vadd.f32 %v3784, %v3792
        %v3809 = vadd.f32 %v3785, %v3792
        %v3810 = vmax.f32 %v3794, 0.0
        %v3811 = vmax.f32 %v3795, 0.0
        %v3812 = vmax.f32 %v3796, 0.0
        %v3813 = vmax.f32 %v3797, 0.0
        %v3814 = vmax.f32 %v3798, 0.0
        %v3815 = vmax.f32 %v3799, 0.0
        %v3816 = vmax.f32 %v3800, 0.0
        %v3817 = vmax.f32 %v3801, 0.0
        %v3818 = vmax.f32 %v3802, 0.0
        %v3819 = vmax.f32 %v3803, 0.0
        %v3820 = vmax.f32 %v3804, 0.0
        %v3821 = vmax.f32 %v3805, 0.0
        %v3822 = vmax.f32 %v3806, 0.0
        %v3823 = vmax.f32 %v3807, 0.0
        %v3824 = vmax.f32 %v3808, 0.0
        %v3825 = vmax.f32 %v3809, 0.0
        %v3826 = vadd.f32 %v2900, %v3810
        %v3827 = vadd.f32 %v2901, %v3811
        %v3828 = vadd.f32 %v2902, %v3812
        %v3829 = vadd.f32 %v2903, %v3813
        %v3830 = vadd.f32 %v2904, %v3814
        %v3831 = vadd.f32 %v2905, %v3815
        %v3832 = vadd.f32 %v2906, %v3816
        %v3833 = vadd.f32 %v2907, %v3817
        %v3834 = vadd.f32 %v2908, %v3818
        %v3835 = vadd.f32 %v2909, %v3819
        %v3836 = vadd.f32 %v2910, %v3820
        %v3837 = vadd.f32 %v2911, %v3821
        %v3838 = vadd.f32 %v2912, %v3822
        %v3839 = vadd.f32 %v2913, %v3823
        %v3840 = vadd.f32 %v2914, %v3824
        %v3841 = vadd.f32 %v2915, %v3825
        %3842 = vst [vmem:[%s566 + $0x10] sm:$0xff] %v3826
        %3843 = vst [vmem:[%s566 + $0x30] sm:$0xff] %v3827
        %3844 = vst [vmem:[%s566 + $0x50] sm:$0xff] %v3828
        %3845 = vst [vmem:[%s566 + $0x70] sm:$0xff] %v3829
        %3846 = vst [vmem:[%s566 + $0x90] sm:$0xff] %v3830
        %3847 = vst [vmem:[%s566 + $0xb0] sm:$0xff] %v3831
        %3848 = vst [vmem:[%s566 + $0xd0] sm:$0xff] %v3832
        %3849 = vst [vmem:[%s566 + $0xf0] sm:$0xff] %v3833
        %3850 = vst [vmem:[%s566 + $0x110] sm:$0xff] %v3834
        %3851 = vst [vmem:[%s566 + $0x130] sm:$0xff] %v3835
        %3852 = vst [vmem:[%s566 + $0x150] sm:$0xff] %v3836
        %3853 = vst [vmem:[%s566 + $0x170] sm:$0xff] %v3837
        %3854 = vst [vmem:[%s566 + $0x190] sm:$0xff] %v3838
        %3855 = vst [vmem:[%s566 + $0x1b0] sm:$0xff] %v3839
        %3856 = vst [vmem:[%s566 + $0x1d0] sm:$0xff] %v3840
        %3857 = vst [vmem:[%s566 + $0x1f0] sm:$0xff] %v3841
        %v3858 = vpack.c.bf16 %v3827, %v3826
        %v3859 = vpack.c.bf16 %v3829, %v3828
        %v3860 = vpack.c.bf16 %v3831, %v3830
        %v3861 = vpack.c.bf16 %v3833, %v3832
        %v3862 = vpack.c.bf16 %v3835, %v3834
        %v3863 = vpack.c.bf16 %v3837, %v3836
        %v3864 = vpack.c.bf16 %v3839, %v3838
        %v3865 = vpack.c.bf16 %v3841, %v3840
        %s3866 = scalar_lea.vmem [#allocation14], 384
        %v3867 = vld [vmem:[%s3866] sm:$0xff]
        %v3868 = vld [vmem:[%s3866 + $0x8] sm:$0xff]
        %v3869 = vld [vmem:[%s3866 + $0x10] sm:$0xff]
        %v3870 = vld [vmem:[%s3866 + $0x18] sm:$0xff]
        %v3871 = vld [vmem:[%s3866 + $0x20] sm:$0xff]
        %v3872 = vld [vmem:[%s3866 + $0x28] sm:$0xff]
        %v3873 = vld [vmem:[%s3866 + $0x30] sm:$0xff]
        %v3874 = vld [vmem:[%s3866 + $0x38] sm:$0xff]
        %v3875 = vld [vmem:[%s3866 + $0x40] sm:$0xff]
        %v3876 = vld [vmem:[%s3866 + $0x48] sm:$0xff]
        %v3877 = vld [vmem:[%s3866 + $0x50] sm:$0xff]
        %v3878 = vld [vmem:[%s3866 + $0x58] sm:$0xff]
        %v3879 = vld [vmem:[%s3866 + $0x60] sm:$0xff]
        %v3880 = vld [vmem:[%s3866 + $0x68] sm:$0xff]
        %v3881 = vld [vmem:[%s3866 + $0x70] sm:$0xff]
        %v3882 = vld [vmem:[%s3866 + $0x78] sm:$0xff]
        %s3883 = scalar_lea.vmem %s8, 6
        %v3884 = vld [vmem:[%s3883] sm:$0x3]
        %v3886 = vlaneseq
        %v3887 = vshrl.u32 %v3886, 7
        %v3888 = vsub.s32 0, %v3887
        %v3889 = vrot.slane %v3884, %v3888
        %v3890 = vlaneseq
        %v3891 = vshrl.u32 %v3890, 7
        %v3892 = vsub.s32 1, %v3891
        %v3893 = vrot.slane %v3884, %v3892
        %v3912 = vunpack.c.l.b16 %v3867
        %v3913 = vunpack.c.h.b16 %v3867
        %v3914 = vunpack.c.l.b16 %v3868
        %v3915 = vunpack.c.h.b16 %v3868
        %v3916 = vunpack.c.l.b16 %v3869
        %v3917 = vunpack.c.h.b16 %v3869
        %v3918 = vunpack.c.l.b16 %v3870
        %v3919 = vunpack.c.h.b16 %v3870
        %v3920 = vunpack.c.l.b16 %v3871
        %v3921 = vunpack.c.h.b16 %v3871
        %v3922 = vunpack.c.l.b16 %v3872
        %v3923 = vunpack.c.h.b16 %v3872
        %v3924 = vunpack.c.l.b16 %v3873
        %v3925 = vunpack.c.h.b16 %v3873
        %v3926 = vunpack.c.l.b16 %v3874
        %v3927 = vunpack.c.h.b16 %v3874
        %v3928 = vunpack.c.l.b16 %v3875
        %v3929 = vunpack.c.h.b16 %v3875
        %v3930 = vunpack.c.l.b16 %v3876
        %v3931 = vunpack.c.h.b16 %v3876
        %v3932 = vunpack.c.l.b16 %v3877
        %v3933 = vunpack.c.h.b16 %v3877
        %v3934 = vunpack.c.l.b16 %v3878
        %v3935 = vunpack.c.h.b16 %v3878
        %v3936 = vunpack.c.l.b16 %v3879
        %v3937 = vunpack.c.h.b16 %v3879
        %v3938 = vunpack.c.l.b16 %v3880
        %v3939 = vunpack.c.h.b16 %v3880
        %v3940 = vunpack.c.l.b16 %v3881
        %v3941 = vunpack.c.h.b16 %v3881
        %v3942 = vunpack.c.l.b16 %v3882
        %v3943 = vunpack.c.h.b16 %v3882
        %v3944 = vpack.c.b16 %v3914, %v3912
        %v3945 = vpack.c.b16 %v3915, %v3913
        %v3946 = vpack.c.b16 %v3918, %v3916
        %v3947 = vpack.c.b16 %v3919, %v3917
        %v3948 = vpack.c.b16 %v3922, %v3920
        %v3949 = vpack.c.b16 %v3923, %v3921
        %v3950 = vpack.c.b16 %v3926, %v3924
        %v3951 = vpack.c.b16 %v3927, %v3925
        %v3952 = vpack.c.b16 %v3930, %v3928
        %v3953 = vpack.c.b16 %v3931, %v3929
        %v3954 = vpack.c.b16 %v3934, %v3932
        %v3955 = vpack.c.b16 %v3935, %v3933
        %v3956 = vpack.c.b16 %v3938, %v3936
        %v3957 = vpack.c.b16 %v3939, %v3937
        %v3958 = vpack.c.b16 %v3942, %v3940
        %v3959 = vpack.c.b16 %v3943, %v3941
        %3976 = vmatprep.subr.bf16.mxu0 %v3959
        %3977 = vmatpush1.bf16.msra.mxu0 %v3958
        %3978 = vmatprep.subr.bf16.mxu0 %v3957
        %3979 = vmatpush1.bf16.msra.mxu0 %v3956
        %3980 = vmatprep.subr.bf16.mxu0 %v3955
        %3981 = vmatpush1.bf16.msra.mxu0 %v3954
        %3982 = vmatprep.subr.bf16.mxu0 %v3953
        %3983 = vmatpush1.bf16.msra.mxu0 %v3952
        %3984 = vmatprep.subr.bf16.mxu0 %v3951
        %3985 = vmatpush1.bf16.msra.mxu0 %v3950
        %3986 = vmatprep.subr.bf16.mxu0 %v3949
        %3987 = vmatpush1.bf16.msra.mxu0 %v3948
        %3988 = vmatprep.subr.bf16.mxu0 %v3947
        %3989 = vmatpush1.bf16.msra.mxu0 %v3946
        %3990 = vmatprep.subr.bf16.mxu0 %v3945
        %3991 = vmatpush1.bf16.msra.mxu0 %v3944
        %3992 = vmatprep.subr.bf16.mxu0 0
        %3993 = vmatpush2.bf16.msra.mxu0 0
        %3994 = vmatprep.subr.bf16.mxu0 0
        %3995 = vmatpush2.bf16.msra.mxu0 0
        %3996 = vmatprep.subr.bf16.mxu0 0
        %3997 = vmatpush2.bf16.msra.mxu0 0
        %3998 = vmatprep.subr.bf16.mxu0 0
        %3999 = vmatpush2.bf16.msra.mxu0 0
        %4000 = vmatprep.subr.bf16.mxu0 0
        %4001 = vmatpush2.bf16.msra.mxu0 0
        %4002 = vmatprep.subr.bf16.mxu0 0
        %4003 = vmatpush2.bf16.msra.mxu0 0
        %4004 = vmatprep.subr.bf16.mxu0 0
        %4005 = vmatpush2.bf16.msra.mxu0 0
        %4006 = vmatprep.subr.bf16.mxu0 0
        %4007 = vmatpush2.bf16.msra.mxu0 0
        %4008 = vmatprep.mubr.bf16.mxu0 0
        %4009 = vmatmul.mubr.bf16.gmra.mxu0 %v3858
        %v4010 = vpop.f32.mrf.mxu0
        %v4011 = vadd.f32 %v3889, %v4010
        %v4012 = vpop.f32.mrf.mxu0
        %v4013 = vadd.f32 %v3893, %v4012
        %v4014 = vpop.f32.mrf.mxu0
        %v4015 = vadd.f32 %v3889, %v4014
        %v4016 = vpop.f32.mrf.mxu0
        %v4017 = vadd.f32 %v3893, %v4016
        %4018 = vmatprep.mubr.bf16.mxu0 0
        %4019 = vmatmul.mubr.bf16.gmra.mxu0 %v3859
        %v4020 = vpop.f32.mrf.mxu0
        %v4021 = vadd.f32 %v3889, %v4020
        %v4022 = vpop.f32.mrf.mxu0
        %v4023 = vadd.f32 %v3893, %v4022
        %v4024 = vpop.f32.mrf.mxu0
        %v4025 = vadd.f32 %v3889, %v4024
        %v4026 = vpop.f32.mrf.mxu0
        %v4027 = vadd.f32 %v3893, %v4026
        %4028 = vmatprep.mubr.bf16.mxu0 0
        %4029 = vmatmul.mubr.bf16.gmra.mxu0 %v3860
        %v4030 = vpop.f32.mrf.mxu0
        %v4031 = vadd.f32 %v3889, %v4030
        %v4032 = vpop.f32.mrf.mxu0
        %v4033 = vadd.f32 %v3893, %v4032
        %v4034 = vpop.f32.mrf.mxu0
        %v4035 = vadd.f32 %v3889, %v4034
        %v4036 = vpop.f32.mrf.mxu0
        %v4037 = vadd.f32 %v3893, %v4036
        %4038 = vmatprep.mubr.bf16.mxu0 0
        %4039 = vmatmul.mubr.bf16.gmra.mxu0 %v3861
        %v4040 = vpop.f32.mrf.mxu0
        %v4041 = vadd.f32 %v3889, %v4040
        %v4042 = vpop.f32.mrf.mxu0
        %v4043 = vadd.f32 %v3893, %v4042
        %v4044 = vpop.f32.mrf.mxu0
        %v4045 = vadd.f32 %v3889, %v4044
        %v4046 = vpop.f32.mrf.mxu0
        %v4047 = vadd.f32 %v3893, %v4046
        %4048 = vmatprep.mubr.bf16.mxu0 0
        %4049 = vmatmul.mubr.bf16.gmra.mxu0 %v3862
        %v4050 = vpop.f32.mrf.mxu0
        %v4051 = vadd.f32 %v3889, %v4050
        %v4052 = vpop.f32.mrf.mxu0
        %v4053 = vadd.f32 %v3893, %v4052
        %v4054 = vpop.f32.mrf.mxu0
        %v4055 = vadd.f32 %v3889, %v4054
        %v4056 = vpop.f32.mrf.mxu0
        %v4057 = vadd.f32 %v3893, %v4056
        %4058 = vmatprep.mubr.bf16.mxu0 0
        %4059 = vmatmul.mubr.bf16.gmra.mxu0 %v3863
        %v4060 = vpop.f32.mrf.mxu0
        %v4061 = vadd.f32 %v3889, %v4060
        %v4062 = vpop.f32.mrf.mxu0
        %v4063 = vadd.f32 %v3893, %v4062
        %v4064 = vpop.f32.mrf.mxu0
        %v4065 = vadd.f32 %v3889, %v4064
        %v4066 = vpop.f32.mrf.mxu0
        %v4067 = vadd.f32 %v3893, %v4066
        %4068 = vmatprep.mubr.bf16.mxu0 0
        %4069 = vmatmul.mubr.bf16.gmra.mxu0 %v3864
        %v4070 = vpop.f32.mrf.mxu0
        %v4071 = vadd.f32 %v3889, %v4070
        %v4072 = vpop.f32.mrf.mxu0
        %v4073 = vadd.f32 %v3893, %v4072
        %v4074 = vpop.f32.mrf.mxu0
        %v4075 = vadd.f32 %v3889, %v4074
        %v4076 = vpop.f32.mrf.mxu0
        %v4077 = vadd.f32 %v3893, %v4076
        %4078 = vmatprep.mubr.bf16.mxu0 0
        %4079 = vmatmul.mubr.bf16.gmra.mxu0 %v3865
        %v4080 = vpop.f32.mrf.mxu0
        %v4081 = vadd.f32 %v3889, %v4080
        %v4082 = vpop.f32.mrf.mxu0
        %v4083 = vadd.f32 %v3893, %v4082
        %v4084 = vpop.f32.mrf.mxu0
        %v4085 = vadd.f32 %v3889, %v4084
        %v4086 = vpop.f32.mrf.mxu0
        %v4087 = vadd.f32 %v3893, %v4086
        %4088 = vdwg.mxu0
        %v4089 = vpack.c.bf16 %v4015, %v4011
        %v4090 = vpack.c.bf16 %v4025, %v4021
        %v4091 = vpack.c.bf16 %v4035, %v4031
        %v4092 = vpack.c.bf16 %v4045, %v4041
        %v4093 = vpack.c.bf16 %v4055, %v4051
        %v4094 = vpack.c.bf16 %v4065, %v4061
        %v4095 = vpack.c.bf16 %v4075, %v4071
        %v4096 = vpack.c.bf16 %v4085, %v4081
        %v4097 = vpack.c.bf16 %v4017, %v4013
        %v4098 = vpack.c.bf16 %v4027, %v4023
        %v4099 = vpack.c.bf16 %v4037, %v4033
        %v4100 = vpack.c.bf16 %v4047, %v4043
        %v4101 = vpack.c.bf16 %v4057, %v4053
        %v4102 = vpack.c.bf16 %v4067, %v4063
        %v4103 = vpack.c.bf16 %v4077, %v4073
        %v4104 = vpack.c.bf16 %v4087, %v4083
        %4105 = vmatprep.subr.bf16.mxu0 0
        %4106 = vmatpush1.bf16.xpose.msra.mxu0 %v4096
        %4107 = vmatprep.subr.bf16.mxu0 0
        %4108 = vmatpush1.bf16.xpose.msra.mxu0 %v4095
        %4109 = vmatprep.subr.bf16.mxu0 0
        %4110 = vmatpush1.bf16.xpose.msra.mxu0 %v4094
        %4111 = vmatprep.subr.bf16.mxu0 0
        %4112 = vmatpush1.bf16.xpose.msra.mxu0 %v4093
        %4113 = vmatprep.subr.bf16.mxu0 0
        %4114 = vmatpush1.bf16.xpose.msra.mxu0 %v4092
        %4115 = vmatprep.subr.bf16.mxu0 0
        %4116 = vmatpush1.bf16.xpose.msra.mxu0 %v4091
        %4117 = vmatprep.subr.bf16.mxu0 0
        %4118 = vmatpush1.bf16.xpose.msra.mxu0 %v4090
        %4119 = vmatprep.subr.bf16.mxu0 0
        %4120 = vmatpush1.bf16.xpose.msra.mxu0 %v4089
        %4121 = vmatprep.subr.bf16.mxu0 0
        %4122 = vmatpush2.bf16.xpose.msra.mxu0 0
        %4123 = vmatprep.subr.bf16.mxu0 0
        %4124 = vmatpush2.bf16.xpose.msra.mxu0 0
        %4125 = vmatprep.subr.bf16.mxu0 0
        %4126 = vmatpush2.bf16.xpose.msra.mxu0 0
        %4127 = vmatprep.subr.bf16.mxu0 0
        %4128 = vmatpush2.bf16.xpose.msra.mxu0 0
        %4129 = vmatprep.subr.bf16.mxu0 0
        %4130 = vmatpush2.bf16.xpose.msra.mxu0 0
        %4131 = vmatprep.subr.bf16.mxu0 0
        %4132 = vmatpush2.bf16.xpose.msra.mxu0 0
        %4133 = vmatprep.subr.bf16.mxu0 0
        %4134 = vmatpush2.bf16.xpose.msra.mxu0 0
        %4135 = vmatprep.subr.bf16.mxu0 0
        %4136 = vmatpush2.bf16.xpose.msra.mxu0 0
        %4137 = vmatprep.mubr.bf16.mxu0 0
        %4138 = vmatmul.mubr.bf16.gmra.mxu0 %v4089
        %v4139 = vpop.f32.mrf.mxu0
        %v4140 = vadd.f32 0.0, %v4139
        %v4141 = vpop.f32.mrf.mxu0
        %v4142 = vpop.f32.mrf.mxu0
        %v4143 = vadd.f32 0.0, %v4142
        %v4144 = vpop.f32.mrf.mxu0
        %4145 = vmatprep.mubr.bf16.mxu0 0
        %4146 = vmatmul.mubr.bf16.gmra.mxu0 %v4090
        %v4147 = vpop.f32.mrf.mxu0
        %v4148 = vadd.f32 0.0, %v4147
        %v4149 = vpop.f32.mrf.mxu0
        %v4150 = vpop.f32.mrf.mxu0
        %v4151 = vadd.f32 0.0, %v4150
        %v4152 = vpop.f32.mrf.mxu0
        %4153 = vmatprep.mubr.bf16.mxu0 0
        %4154 = vmatmul.mubr.bf16.gmra.mxu0 %v4091
        %v4155 = vpop.f32.mrf.mxu0
        %v4156 = vadd.f32 0.0, %v4155
        %v4157 = vpop.f32.mrf.mxu0
        %v4158 = vpop.f32.mrf.mxu0
        %v4159 = vadd.f32 0.0, %v4158
        %v4160 = vpop.f32.mrf.mxu0
        %4161 = vmatprep.mubr.bf16.mxu0 0
        %4162 = vmatmul.mubr.bf16.gmra.mxu0 %v4092
        %v4163 = vpop.f32.mrf.mxu0
        %v4164 = vadd.f32 0.0, %v4163
        %v4165 = vpop.f32.mrf.mxu0
        %v4166 = vpop.f32.mrf.mxu0
        %v4167 = vadd.f32 0.0, %v4166
        %v4168 = vpop.f32.mrf.mxu0
        %4169 = vmatprep.mubr.bf16.mxu0 0
        %4170 = vmatmul.mubr.bf16.gmra.mxu0 %v4093
        %v4171 = vpop.f32.mrf.mxu0
        %v4172 = vadd.f32 0.0, %v4171
        %v4173 = vpop.f32.mrf.mxu0
        %v4174 = vpop.f32.mrf.mxu0
        %v4175 = vadd.f32 0.0, %v4174
        %v4176 = vpop.f32.mrf.mxu0
        %4177 = vmatprep.mubr.bf16.mxu0 0
        %4178 = vmatmul.mubr.bf16.gmra.mxu0 %v4094
        %v4179 = vpop.f32.mrf.mxu0
        %v4180 = vadd.f32 0.0, %v4179
        %v4181 = vpop.f32.mrf.mxu0
        %v4182 = vpop.f32.mrf.mxu0
        %v4183 = vadd.f32 0.0, %v4182
        %v4184 = vpop.f32.mrf.mxu0
        %4185 = vmatprep.mubr.bf16.mxu0 0
        %4186 = vmatmul.mubr.bf16.gmra.mxu0 %v4095
        %v4187 = vpop.f32.mrf.mxu0
        %v4188 = vadd.f32 0.0, %v4187
        %v4189 = vpop.f32.mrf.mxu0
        %v4190 = vpop.f32.mrf.mxu0
        %v4191 = vadd.f32 0.0, %v4190
        %v4192 = vpop.f32.mrf.mxu0
        %4193 = vmatprep.mubr.bf16.mxu0 0
        %4194 = vmatmul.mubr.bf16.gmra.mxu0 %v4096
        %v4195 = vpop.f32.mrf.mxu0
        %v4196 = vadd.f32 0.0, %v4195
        %v4197 = vpop.f32.mrf.mxu0
        %v4198 = vpop.f32.mrf.mxu0
        %v4199 = vadd.f32 0.0, %v4198
        %v4200 = vpop.f32.mrf.mxu0
        %4201 = vdwg.mxu0
        %v4202 = vmax.f32 %v4140, %v4156
        %v4203 = vmax.f32 %v4143, %v4159
        %v4204 = vmax.f32 %v4148, %v4164
        %v4205 = vmax.f32 %v4151, %v4167
        %v4206 = vmax.f32 %v4202, %v4172
        %v4207 = vmax.f32 %v4203, %v4175
        %v4208 = vmax.f32 %v4204, %v4180
        %v4209 = vmax.f32 %v4205, %v4183
        %v4210 = vmax.f32 %v4206, %v4188
        %v4211 = vmax.f32 %v4207, %v4191
        %v4212 = vmax.f32 %v4208, %v4196
        %v4213 = vmax.f32 %v4209, %v4199
        %v4214 = vmax.f32 %v4210, %v4211
        %v4215 = vmax.f32 %v4212, %v4213
        %v4216 = vmax.f32 %v4214, %v4215
        %v4217 = vrot.slane %v4216, 4
        %v4218 = vmax.f32 %v4216, %v4217
        %v4219 = vrot.slane %v4218, 2
        %v4220 = vmax.f32 %v4218, %v4219
        %v4221 = vrot.slane %v4220, 1
        %v4222 = vmax.f32 %v4220, %v4221
        %v4223 = vsub.f32 %v4140, %v4222
        %v4224 = vsub.f32 %v4143, %v4222
        %v4225 = vsub.f32 %v4148, %v4222
        %v4226 = vsub.f32 %v4151, %v4222
        %v4227 = vsub.f32 %v4156, %v4222
        %v4228 = vsub.f32 %v4159, %v4222
        %v4229 = vsub.f32 %v4164, %v4222
        %v4230 = vsub.f32 %v4167, %v4222
        %v4231 = vsub.f32 %v4172, %v4222
        %v4232 = vsub.f32 %v4175, %v4222
        %v4233 = vsub.f32 %v4180, %v4222
        %v4234 = vsub.f32 %v4183, %v4222
        %v4235 = vsub.f32 %v4188, %v4222
        %v4236 = vsub.f32 %v4191, %v4222
        %v4237 = vsub.f32 %v4196, %v4222
        %v4238 = vsub.f32 %v4199, %v4222
        %v4239 = vmul.f32 %v4223, 1.442695
        %v4240 = vpow.pop %v4239
        %v4241 = vmul.f32 %v4224, 1.442695
        %v4242 = vpow.pop %v4241
        %v4243 = vmul.f32 %v4225, 1.442695
        %v4244 = vpow.pop %v4243
        %v4245 = vmul.f32 %v4226, 1.442695
        %v4246 = vpow.pop %v4245
        %v4247 = vmul.f32 %v4227, 1.442695
        %v4248 = vpow.pop %v4247
        %v4249 = vmul.f32 %v4228, 1.442695
        %v4250 = vpow.pop %v4249
        %v4251 = vmul.f32 %v4229, 1.442695
        %v4252 = vpow.pop %v4251
        %v4253 = vmul.f32 %v4230, 1.442695
        %v4254 = vpow.pop %v4253
        %v4255 = vmul.f32 %v4231, 1.442695
        %v4256 = vpow.pop %v4255
        %v4257 = vmul.f32 %v4232, 1.442695
        %v4258 = vpow.pop %v4257
        %v4259 = vmul.f32 %v4233, 1.442695
        %v4260 = vpow.pop %v4259
        %v4261 = vmul.f32 %v4234, 1.442695
        %v4262 = vpow.pop %v4261
        %v4263 = vmul.f32 %v4235, 1.442695
        %v4264 = vpow.pop %v4263
        %v4265 = vmul.f32 %v4236, 1.442695
        %v4266 = vpow.pop %v4265
        %v4267 = vmul.f32 %v4237, 1.442695
        %v4268 = vpow.pop %v4267
        %v4269 = vmul.f32 %v4238, 1.442695
        %v4270 = vpow.pop %v4269
        %v4271 = vadd.f32 %v4240, %v4242
        %v4272 = vadd.f32 %v4271, %v4244
        %v4273 = vadd.f32 %v4272, %v4246
        %v4274 = vadd.f32 %v4273, %v4248
        %v4275 = vadd.f32 %v4274, %v4250
        %v4276 = vadd.f32 %v4275, %v4252
        %v4277 = vadd.f32 %v4276, %v4254
        %v4278 = vadd.f32 %v4277, %v4256
        %v4279 = vadd.f32 %v4278, %v4258
        %v4280 = vadd.f32 %v4279, %v4260
        %v4281 = vadd.f32 %v4280, %v4262
        %v4282 = vadd.f32 %v4281, %v4264
        %v4283 = vadd.f32 %v4282, %v4266
        %v4284 = vadd.f32 %v4283, %v4268
        %v4285 = vadd.f32 %v4284, %v4270
        %v4286 = vrot.slane %v4285, 4
        %v4287 = vadd.f32 %v4285, %v4286
        %v4288 = vrot.slane %v4287, 2
        %v4289 = vadd.f32 %v4287, %v4288
        %v4290 = vrot.slane %v4289, 1
        %v4291 = vadd.f32 %v4289, %v4290
        %v4292 = vrcp.pop %v4291
        %v4293 = vmul.f32 %v4240, %v4292
        %v4294 = vmul.f32 %v4242, %v4292
        %v4295 = vmul.f32 %v4244, %v4292
        %v4296 = vmul.f32 %v4246, %v4292
        %v4297 = vmul.f32 %v4248, %v4292
        %v4298 = vmul.f32 %v4250, %v4292
        %v4299 = vmul.f32 %v4252, %v4292
        %v4300 = vmul.f32 %v4254, %v4292
        %v4301 = vmul.f32 %v4256, %v4292
        %v4302 = vmul.f32 %v4258, %v4292
        %v4303 = vmul.f32 %v4260, %v4292
        %v4304 = vmul.f32 %v4262, %v4292
        %v4305 = vmul.f32 %v4264, %v4292
        %v4306 = vmul.f32 %v4266, %v4292
        %v4307 = vmul.f32 %v4268, %v4292
        %v4308 = vmul.f32 %v4270, %v4292
        %4309 = vadd.xlane.f32.xlu0 %v4293
        %v4310 = vpop.xlane.xlu0 %4309
        %4311 = vadd.xlane.f32.xlu0 %v4294
        %v4312 = vpop.xlane.xlu0 %4311
        %4313 = vadd.xlane.f32.xlu0 %v4295
        %v4314 = vpop.xlane.xlu0 %4313
        %4315 = vadd.xlane.f32.xlu0 %v4296
        %v4316 = vpop.xlane.xlu0 %4315
        %4317 = vadd.xlane.f32.xlu0 %v4297
        %v4318 = vpop.xlane.xlu0 %4317
        %4319 = vadd.xlane.f32.xlu0 %v4298
        %v4320 = vpop.xlane.xlu0 %4319
        %4321 = vadd.xlane.f32.xlu0 %v4299
        %v4322 = vpop.xlane.xlu0 %4321
        %4323 = vadd.xlane.f32.xlu0 %v4300
        %v4324 = vpop.xlane.xlu0 %4323
        %4325 = vadd.xlane.f32.xlu0 %v4301
        %v4326 = vpop.xlane.xlu0 %4325
        %4327 = vadd.xlane.f32.xlu0 %v4302
        %v4328 = vpop.xlane.xlu0 %4327
        %4329 = vadd.xlane.f32.xlu0 %v4303
        %v4330 = vpop.xlane.xlu0 %4329
        %4331 = vadd.xlane.f32.xlu0 %v4304
        %v4332 = vpop.xlane.xlu0 %4331
        %4333 = vadd.xlane.f32.xlu0 %v4305
        %v4334 = vpop.xlane.xlu0 %4333
        %4335 = vadd.xlane.f32.xlu0 %v4306
        %v4336 = vpop.xlane.xlu0 %4335
        %4337 = vadd.xlane.f32.xlu0 %v4307
        %v4338 = vpop.xlane.xlu0 %4337
        %4339 = vadd.xlane.f32.xlu0 %v4308
        %v4340 = vpop.xlane.xlu0 %4339
        %v4341 = vadd.f32 %v4310, 1e-09
        %v4342 = vadd.f32 %v4312, 1e-09
        %v4343 = vadd.f32 %v4314, 1e-09
        %v4344 = vadd.f32 %v4316, 1e-09
        %v4345 = vadd.f32 %v4318, 1e-09
        %v4346 = vadd.f32 %v4320, 1e-09
        %v4347 = vadd.f32 %v4322, 1e-09
        %v4348 = vadd.f32 %v4324, 1e-09
        %v4349 = vadd.f32 %v4326, 1e-09
        %v4350 = vadd.f32 %v4328, 1e-09
        %v4351 = vadd.f32 %v4330, 1e-09
        %v4352 = vadd.f32 %v4332, 1e-09
        %v4353 = vadd.f32 %v4334, 1e-09
        %v4354 = vadd.f32 %v4336, 1e-09
        %v4355 = vadd.f32 %v4338, 1e-09
        %v4356 = vadd.f32 %v4340, 1e-09
        %v4357 = vrcp.pop %v4341
        %v4358 = vrcp.pop %v4342
        %v4359 = vrcp.pop %v4343
        %v4360 = vrcp.pop %v4344
        %v4361 = vrcp.pop %v4345
        %v4362 = vrcp.pop %v4346
        %v4363 = vrcp.pop %v4347
        %v4364 = vrcp.pop %v4348
        %v4365 = vrcp.pop %v4349
        %v4366 = vrcp.pop %v4350
        %v4367 = vrcp.pop %v4351
        %v4368 = vrcp.pop %v4352
        %v4369 = vrcp.pop %v4353
        %v4370 = vrcp.pop %v4354
        %v4371 = vrcp.pop %v4355
        %v4372 = vrcp.pop %v4356
        %v4373 = vpack.c.bf16 %v4294, %v4293
        %v4374 = vpack.c.bf16 %v4296, %v4295
        %v4375 = vpack.c.bf16 %v4298, %v4297
        %v4376 = vpack.c.bf16 %v4300, %v4299
        %v4377 = vpack.c.bf16 %v4302, %v4301
        %v4378 = vpack.c.bf16 %v4304, %v4303
        %v4379 = vpack.c.bf16 %v4306, %v4305
        %v4380 = vpack.c.bf16 %v4308, %v4307
        %4381 = vmatprep.subr.bf16.mxu0 0
        %4382 = vmatpush1.bf16.msra.mxu0 %v4104
        %4383 = vmatprep.subr.bf16.mxu0 0
        %4384 = vmatpush1.bf16.msra.mxu0 %v4103
        %4385 = vmatprep.subr.bf16.mxu0 0
        %4386 = vmatpush1.bf16.msra.mxu0 %v4102
        %4387 = vmatprep.subr.bf16.mxu0 0
        %4388 = vmatpush1.bf16.msra.mxu0 %v4101
        %4389 = vmatprep.subr.bf16.mxu0 0
        %4390 = vmatpush1.bf16.msra.mxu0 %v4100
        %4391 = vmatprep.subr.bf16.mxu0 0
        %4392 = vmatpush1.bf16.msra.mxu0 %v4099
        %4393 = vmatprep.subr.bf16.mxu0 0
        %4394 = vmatpush1.bf16.msra.mxu0 %v4098
        %4395 = vmatprep.subr.bf16.mxu0 0
        %4396 = vmatpush1.bf16.msra.mxu0 %v4097
        %4397 = vmatprep.subr.bf16.mxu0 0
        %4398 = vmatpush2.bf16.msra.mxu0 0
        %4399 = vmatprep.subr.bf16.mxu0 0
        %4400 = vmatpush2.bf16.msra.mxu0 0
        %4401 = vmatprep.subr.bf16.mxu0 0
        %4402 = vmatpush2.bf16.msra.mxu0 0
        %4403 = vmatprep.subr.bf16.mxu0 0
        %4404 = vmatpush2.bf16.msra.mxu0 0
        %4405 = vmatprep.subr.bf16.mxu0 0
        %4406 = vmatpush2.bf16.msra.mxu0 0
        %4407 = vmatprep.subr.bf16.mxu0 0
        %4408 = vmatpush2.bf16.msra.mxu0 0
        %4409 = vmatprep.subr.bf16.mxu0 0
        %4410 = vmatpush2.bf16.msra.mxu0 0
        %4411 = vmatprep.subr.bf16.mxu0 0
        %4412 = vmatpush2.bf16.msra.mxu0 0
        %4413 = vmatprep.mubr.bf16.mxu0 0
        %4414 = vmatmul.mubr.bf16.gmra.mxu0 %v4373
        %v4415 = vpop.f32.mrf.mxu0
        %v4416 = vadd.f32 0.0, %v4415
        %v4417 = vpop.f32.mrf.mxu0
        %v4418 = vpop.f32.mrf.mxu0
        %v4419 = vadd.f32 0.0, %v4418
        %v4420 = vpop.f32.mrf.mxu0
        %4421 = vmatprep.mubr.bf16.mxu0 0
        %4422 = vmatmul.mubr.bf16.gmra.mxu0 %v4374
        %v4423 = vpop.f32.mrf.mxu0
        %v4424 = vadd.f32 0.0, %v4423
        %v4425 = vpop.f32.mrf.mxu0
        %v4426 = vpop.f32.mrf.mxu0
        %v4427 = vadd.f32 0.0, %v4426
        %v4428 = vpop.f32.mrf.mxu0
        %4429 = vmatprep.mubr.bf16.mxu0 0
        %4430 = vmatmul.mubr.bf16.gmra.mxu0 %v4375
        %v4431 = vpop.f32.mrf.mxu0
        %v4432 = vadd.f32 0.0, %v4431
        %v4433 = vpop.f32.mrf.mxu0
        %v4434 = vpop.f32.mrf.mxu0
        %v4435 = vadd.f32 0.0, %v4434
        %v4436 = vpop.f32.mrf.mxu0
        %4437 = vmatprep.mubr.bf16.mxu0 0
        %4438 = vmatmul.mubr.bf16.gmra.mxu0 %v4376
        %v4439 = vpop.f32.mrf.mxu0
        %v4440 = vadd.f32 0.0, %v4439
        %v4441 = vpop.f32.mrf.mxu0
        %v4442 = vpop.f32.mrf.mxu0
        %v4443 = vadd.f32 0.0, %v4442
        %v4444 = vpop.f32.mrf.mxu0
        %4445 = vmatprep.mubr.bf16.mxu0 0
        %4446 = vmatmul.mubr.bf16.gmra.mxu0 %v4377
        %v4447 = vpop.f32.mrf.mxu0
        %v4448 = vadd.f32 0.0, %v4447
        %v4449 = vpop.f32.mrf.mxu0
        %v4450 = vpop.f32.mrf.mxu0
        %v4451 = vadd.f32 0.0, %v4450
        %v4452 = vpop.f32.mrf.mxu0
        %4453 = vmatprep.mubr.bf16.mxu0 0
        %4454 = vmatmul.mubr.bf16.gmra.mxu0 %v4378
        %v4455 = vpop.f32.mrf.mxu0
        %v4456 = vadd.f32 0.0, %v4455
        %v4457 = vpop.f32.mrf.mxu0
        %v4458 = vpop.f32.mrf.mxu0
        %v4459 = vadd.f32 0.0, %v4458
        %v4460 = vpop.f32.mrf.mxu0
        %4461 = vmatprep.mubr.bf16.mxu0 0
        %4462 = vmatmul.mubr.bf16.gmra.mxu0 %v4379
        %v4463 = vpop.f32.mrf.mxu0
        %v4464 = vadd.f32 0.0, %v4463
        %v4465 = vpop.f32.mrf.mxu0
        %v4466 = vpop.f32.mrf.mxu0
        %v4467 = vadd.f32 0.0, %v4466
        %v4468 = vpop.f32.mrf.mxu0
        %4469 = vmatprep.mubr.bf16.mxu0 0
        %4470 = vmatmul.mubr.bf16.gmra.mxu0 %v4380
        %v4471 = vpop.f32.mrf.mxu0
        %v4472 = vadd.f32 0.0, %v4471
        %v4473 = vpop.f32.mrf.mxu0
        %v4474 = vpop.f32.mrf.mxu0
        %v4475 = vadd.f32 0.0, %v4474
        %v4476 = vpop.f32.mrf.mxu0
        %4477 = vdwg.mxu0
        %v4478 = vmul.f32 %v4357, %v4416
        %v4479 = vmul.f32 %v4358, %v4419
        %v4480 = vmul.f32 %v4359, %v4424
        %v4481 = vmul.f32 %v4360, %v4427
        %v4482 = vmul.f32 %v4361, %v4432
        %v4483 = vmul.f32 %v4362, %v4435
        %v4484 = vmul.f32 %v4363, %v4440
        %v4485 = vmul.f32 %v4364, %v4443
        %v4486 = vmul.f32 %v4365, %v4448
        %v4487 = vmul.f32 %v4366, %v4451
        %v4488 = vmul.f32 %v4367, %v4456
        %v4489 = vmul.f32 %v4368, %v4459
        %v4490 = vmul.f32 %v4369, %v4464
        %v4491 = vmul.f32 %v4370, %v4467
        %v4492 = vmul.f32 %v4371, %v4472
        %v4493 = vmul.f32 %v4372, %v4475
        %v4494 = vsub.f32 %v3826, %v4478
        %v4495 = vsub.f32 %v3827, %v4479
        %v4496 = vsub.f32 %v3828, %v4480
        %v4497 = vsub.f32 %v3829, %v4481
        %v4498 = vsub.f32 %v3830, %v4482
        %v4499 = vsub.f32 %v3831, %v4483
        %v4500 = vsub.f32 %v3832, %v4484
        %v4501 = vsub.f32 %v3833, %v4485
        %v4502 = vsub.f32 %v3834, %v4486
        %v4503 = vsub.f32 %v3835, %v4487
        %v4504 = vsub.f32 %v3836, %v4488
        %v4505 = vsub.f32 %v3837, %v4489
        %v4506 = vsub.f32 %v3838, %v4490
        %v4507 = vsub.f32 %v3839, %v4491
        %v4508 = vsub.f32 %v3840, %v4492
        %v4509 = vsub.f32 %v3841, %v4493
        %v4510 = vpack.c.bf16 %v4495, %v4494
        %v4511 = vpack.c.bf16 %v4497, %v4496
        %v4512 = vpack.c.bf16 %v4499, %v4498
        %v4513 = vpack.c.bf16 %v4501, %v4500
        %v4514 = vpack.c.bf16 %v4503, %v4502
        %v4515 = vpack.c.bf16 %v4505, %v4504
        %v4516 = vpack.c.bf16 %v4507, %v4506
        %v4517 = vpack.c.bf16 %v4509, %v4508
        %s4518 = scalar_lea.vmem [#allocation16], 192
        %v4519 = vld [vmem:[%s4518] sm:$0xf]
        %v4520 = vld [vmem:[%s4518 + $0x4] sm:$0xf]
        %v4521 = vld [vmem:[%s4518 + $0x8] sm:$0xf]
        %v4522 = vld [vmem:[%s4518 + $0xc] sm:$0xf]
        %v4523 = vld [vmem:[%s4518 + $0x10] sm:$0xf]
        %v4524 = vld [vmem:[%s4518 + $0x14] sm:$0xf]
        %v4525 = vld [vmem:[%s4518 + $0x18] sm:$0xf]
        %v4526 = vld [vmem:[%s4518 + $0x1c] sm:$0xf]
        %v4527 = vld [vmem:[%s4518 + $0x20] sm:$0xf]
        %v4528 = vld [vmem:[%s4518 + $0x24] sm:$0xf]
        %v4529 = vld [vmem:[%s4518 + $0x28] sm:$0xf]
        %v4530 = vld [vmem:[%s4518 + $0x2c] sm:$0xf]
        %v4531 = vld [vmem:[%s4518 + $0x30] sm:$0xf]
        %v4532 = vld [vmem:[%s4518 + $0x34] sm:$0xf]
        %v4533 = vld [vmem:[%s4518 + $0x38] sm:$0xf]
        %v4534 = vld [vmem:[%s4518 + $0x3c] sm:$0xf]
        %s4535 = scalar_lea.vmem %s10, 3
        %v4536 = vld [vmem:[%s4535] sm:$0x1]
        %v4538 = vlaneseq
        %v4539 = vshrl.u32 %v4538, 7
        %v4540 = vsub.s32 0, %v4539
        %v4541 = vrot.slane %v4536, %v4540
        %v4559 = vunpack.c.l.b16 %v4519
        %v4560 = vunpack.c.l.b16 %v4520
        %v4561 = vunpack.c.l.b16 %v4521
        %v4562 = vunpack.c.l.b16 %v4522
        %v4563 = vunpack.c.l.b16 %v4523
        %v4564 = vunpack.c.l.b16 %v4524
        %v4565 = vunpack.c.l.b16 %v4525
        %v4566 = vunpack.c.l.b16 %v4526
        %v4567 = vunpack.c.l.b16 %v4527
        %v4568 = vunpack.c.l.b16 %v4528
        %v4569 = vunpack.c.l.b16 %v4529
        %v4570 = vunpack.c.l.b16 %v4530
        %v4571 = vunpack.c.l.b16 %v4531
        %v4572 = vunpack.c.l.b16 %v4532
        %v4573 = vunpack.c.l.b16 %v4533
        %v4574 = vunpack.c.l.b16 %v4534
        %v4575 = vpack.c.b16 %v4560, %v4559
        %v4576 = vpack.c.b16 %v4562, %v4561
        %v4577 = vpack.c.b16 %v4564, %v4563
        %v4578 = vpack.c.b16 %v4566, %v4565
        %v4579 = vpack.c.b16 %v4568, %v4567
        %v4580 = vpack.c.b16 %v4570, %v4569
        %v4581 = vpack.c.b16 %v4572, %v4571
        %v4582 = vpack.c.b16 %v4574, %v4573
        %4591 = vmatprep.subr.bf16.mxu0 0
        %4592 = vmatpush1.bf16.msra.mxu0 %v4582
        %4593 = vmatprep.subr.bf16.mxu0 0
        %4594 = vmatpush1.bf16.msra.mxu0 %v4581
        %4595 = vmatprep.subr.bf16.mxu0 0
        %4596 = vmatpush1.bf16.msra.mxu0 %v4580
        %4597 = vmatprep.subr.bf16.mxu0 0
        %4598 = vmatpush1.bf16.msra.mxu0 %v4579
        %4599 = vmatprep.subr.bf16.mxu0 0
        %4600 = vmatpush1.bf16.msra.mxu0 %v4578
        %4601 = vmatprep.subr.bf16.mxu0 0
        %4602 = vmatpush1.bf16.msra.mxu0 %v4577
        %4603 = vmatprep.subr.bf16.mxu0 0
        %4604 = vmatpush1.bf16.msra.mxu0 %v4576
        %4605 = vmatprep.subr.bf16.mxu0 0
        %4606 = vmatpush1.bf16.msra.mxu0 %v4575
        %4607 = vmatprep.subr.bf16.mxu0 0
        %4608 = vmatpush2.bf16.msra.mxu0 0
        %4609 = vmatprep.subr.bf16.mxu0 0
        %4610 = vmatpush2.bf16.msra.mxu0 0
        %4611 = vmatprep.subr.bf16.mxu0 0
        %4612 = vmatpush2.bf16.msra.mxu0 0
        %4613 = vmatprep.subr.bf16.mxu0 0
        %4614 = vmatpush2.bf16.msra.mxu0 0
        %4615 = vmatprep.subr.bf16.mxu0 0
        %4616 = vmatpush2.bf16.msra.mxu0 0
        %4617 = vmatprep.subr.bf16.mxu0 0
        %4618 = vmatpush2.bf16.msra.mxu0 0
        %4619 = vmatprep.subr.bf16.mxu0 0
        %4620 = vmatpush2.bf16.msra.mxu0 0
        %4621 = vmatprep.subr.bf16.mxu0 0
        %4622 = vmatpush2.bf16.msra.mxu0 0
        %4623 = vmatprep.mubr.bf16.mxu0 0
        %4624 = vmatmul.mubr.bf16.gmra.mxu0 %v4510
        %v4625 = vpop.f32.mrf.mxu0
        %v4626 = vadd.f32 %v4541, %v4625
        %v4627 = vpop.f32.mrf.mxu0
        %v4628 = vpop.f32.mrf.mxu0
        %v4629 = vadd.f32 %v4541, %v4628
        %v4630 = vpop.f32.mrf.mxu0
        %4631 = vmatprep.mubr.bf16.mxu0 0
        %4632 = vmatmul.mubr.bf16.gmra.mxu0 %v4511
        %v4633 = vpop.f32.mrf.mxu0
        %v4634 = vadd.f32 %v4541, %v4633
        %v4635 = vpop.f32.mrf.mxu0
        %v4636 = vpop.f32.mrf.mxu0
        %v4637 = vadd.f32 %v4541, %v4636
        %v4638 = vpop.f32.mrf.mxu0
        %4639 = vmatprep.mubr.bf16.mxu0 0
        %4640 = vmatmul.mubr.bf16.gmra.mxu0 %v4512
        %v4641 = vpop.f32.mrf.mxu0
        %v4642 = vadd.f32 %v4541, %v4641
        %v4643 = vpop.f32.mrf.mxu0
        %v4644 = vpop.f32.mrf.mxu0
        %v4645 = vadd.f32 %v4541, %v4644
        %v4646 = vpop.f32.mrf.mxu0
        %4647 = vmatprep.mubr.bf16.mxu0 0
        %4648 = vmatmul.mubr.bf16.gmra.mxu0 %v4513
        %v4649 = vpop.f32.mrf.mxu0
        %v4650 = vadd.f32 %v4541, %v4649
        %v4651 = vpop.f32.mrf.mxu0
        %v4652 = vpop.f32.mrf.mxu0
        %v4653 = vadd.f32 %v4541, %v4652
        %v4654 = vpop.f32.mrf.mxu0
        %4655 = vmatprep.mubr.bf16.mxu0 0
        %4656 = vmatmul.mubr.bf16.gmra.mxu0 %v4514
        %v4657 = vpop.f32.mrf.mxu0
        %v4658 = vadd.f32 %v4541, %v4657
        %v4659 = vpop.f32.mrf.mxu0
        %v4660 = vpop.f32.mrf.mxu0
        %v4661 = vadd.f32 %v4541, %v4660
        %v4662 = vpop.f32.mrf.mxu0
        %4663 = vmatprep.mubr.bf16.mxu0 0
        %4664 = vmatmul.mubr.bf16.gmra.mxu0 %v4515
        %v4665 = vpop.f32.mrf.mxu0
        %v4666 = vadd.f32 %v4541, %v4665
        %v4667 = vpop.f32.mrf.mxu0
        %v4668 = vpop.f32.mrf.mxu0
        %v4669 = vadd.f32 %v4541, %v4668
        %v4670 = vpop.f32.mrf.mxu0
        %4671 = vmatprep.mubr.bf16.mxu0 0
        %4672 = vmatmul.mubr.bf16.gmra.mxu0 %v4516
        %v4673 = vpop.f32.mrf.mxu0
        %v4674 = vadd.f32 %v4541, %v4673
        %v4675 = vpop.f32.mrf.mxu0
        %v4676 = vpop.f32.mrf.mxu0
        %v4677 = vadd.f32 %v4541, %v4676
        %v4678 = vpop.f32.mrf.mxu0
        %4679 = vmatprep.mubr.bf16.mxu0 0
        %4680 = vmatmul.mubr.bf16.gmra.mxu0 %v4517
        %v4681 = vpop.f32.mrf.mxu0
        %v4682 = vadd.f32 %v4541, %v4681
        %v4683 = vpop.f32.mrf.mxu0
        %v4684 = vpop.f32.mrf.mxu0
        %v4685 = vadd.f32 %v4541, %v4684
        %v4686 = vpop.f32.mrf.mxu0
        %4687 = vdwg.mxu0
        %s4688 = scalar_lea.vmem %s11, 3
        %v4689 = vld [vmem:[%s4688] sm:$0x1]
        %v4691 = vlaneseq
        %v4692 = vshrl.u32 %v4691, 7
        %v4693 = vsub.s32 0, %v4692
        %v4694 = vrot.slane %v4689, %v4693
        %v4696 = vmul.f32 %v4626, %v4694
        %v4697 = vmul.f32 %v4629, %v4694
        %v4698 = vmul.f32 %v4634, %v4694
        %v4699 = vmul.f32 %v4637, %v4694
        %v4700 = vmul.f32 %v4642, %v4694
        %v4701 = vmul.f32 %v4645, %v4694
        %v4702 = vmul.f32 %v4650, %v4694
        %v4703 = vmul.f32 %v4653, %v4694
        %v4704 = vmul.f32 %v4658, %v4694
        %v4705 = vmul.f32 %v4661, %v4694
        %v4706 = vmul.f32 %v4666, %v4694
        %v4707 = vmul.f32 %v4669, %v4694
        %v4708 = vmul.f32 %v4674, %v4694
        %v4709 = vmul.f32 %v4677, %v4694
        %v4710 = vmul.f32 %v4682, %v4694
        %v4711 = vmul.f32 %v4685, %v4694
        %s4712 = scalar_lea.vmem %s12, 3
        %v4713 = vld [vmem:[%s4712] sm:$0x1]
        %v4715 = vlaneseq
        %v4716 = vshrl.u32 %v4715, 7
        %v4717 = vsub.s32 0, %v4716
        %v4718 = vrot.slane %v4713, %v4717
        %v4720 = vadd.f32 %v4696, %v4718
        %v4721 = vadd.f32 %v4697, %v4718
        %v4722 = vadd.f32 %v4698, %v4718
        %v4723 = vadd.f32 %v4699, %v4718
        %v4724 = vadd.f32 %v4700, %v4718
        %v4725 = vadd.f32 %v4701, %v4718
        %v4726 = vadd.f32 %v4702, %v4718
        %v4727 = vadd.f32 %v4703, %v4718
        %v4728 = vadd.f32 %v4704, %v4718
        %v4729 = vadd.f32 %v4705, %v4718
        %v4730 = vadd.f32 %v4706, %v4718
        %v4731 = vadd.f32 %v4707, %v4718
        %v4732 = vadd.f32 %v4708, %v4718
        %v4733 = vadd.f32 %v4709, %v4718
        %v4734 = vadd.f32 %v4710, %v4718
        %v4735 = vadd.f32 %v4711, %v4718
        %v4736 = vmax.f32 %v4720, 0.0
        %v4737 = vmax.f32 %v4721, 0.0
        %v4738 = vmax.f32 %v4722, 0.0
        %v4739 = vmax.f32 %v4723, 0.0
        %v4740 = vmax.f32 %v4724, 0.0
        %v4741 = vmax.f32 %v4725, 0.0
        %v4742 = vmax.f32 %v4726, 0.0
        %v4743 = vmax.f32 %v4727, 0.0
        %v4744 = vmax.f32 %v4728, 0.0
        %v4745 = vmax.f32 %v4729, 0.0
        %v4746 = vmax.f32 %v4730, 0.0
        %v4747 = vmax.f32 %v4731, 0.0
        %v4748 = vmax.f32 %v4732, 0.0
        %v4749 = vmax.f32 %v4733, 0.0
        %v4750 = vmax.f32 %v4734, 0.0
        %v4751 = vmax.f32 %v4735, 0.0
        %v4752 = vadd.f32 %v3826, %v4736
        %v4753 = vadd.f32 %v3827, %v4737
        %v4754 = vadd.f32 %v3828, %v4738
        %v4755 = vadd.f32 %v3829, %v4739
        %v4756 = vadd.f32 %v3830, %v4740
        %v4757 = vadd.f32 %v3831, %v4741
        %v4758 = vadd.f32 %v3832, %v4742
        %v4759 = vadd.f32 %v3833, %v4743
        %v4760 = vadd.f32 %v3834, %v4744
        %v4761 = vadd.f32 %v3835, %v4745
        %v4762 = vadd.f32 %v3836, %v4746
        %v4763 = vadd.f32 %v3837, %v4747
        %v4764 = vadd.f32 %v3838, %v4748
        %v4765 = vadd.f32 %v3839, %v4749
        %v4766 = vadd.f32 %v3840, %v4750
        %v4767 = vadd.f32 %v3841, %v4751
        %4768 = vst [vmem:[%s566 + $0x18] sm:$0xff] %v4752
        %4769 = vst [vmem:[%s566 + $0x38] sm:$0xff] %v4753
        %4770 = vst [vmem:[%s566 + $0x58] sm:$0xff] %v4754
        %4771 = vst [vmem:[%s566 + $0x78] sm:$0xff] %v4755
        %4772 = vst [vmem:[%s566 + $0x98] sm:$0xff] %v4756
        %4773 = vst [vmem:[%s566 + $0xb8] sm:$0xff] %v4757
        %4774 = vst [vmem:[%s566 + $0xd8] sm:$0xff] %v4758
        %4775 = vst [vmem:[%s566 + $0xf8] sm:$0xff] %v4759
        %4776 = vst [vmem:[%s566 + $0x118] sm:$0xff] %v4760
        %4777 = vst [vmem:[%s566 + $0x138] sm:$0xff] %v4761
        %4778 = vst [vmem:[%s566 + $0x158] sm:$0xff] %v4762
        %4779 = vst [vmem:[%s566 + $0x178] sm:$0xff] %v4763
        %4780 = vst [vmem:[%s566 + $0x198] sm:$0xff] %v4764
        %4781 = vst [vmem:[%s566 + $0x1b8] sm:$0xff] %v4765
        %4782 = vst [vmem:[%s566 + $0x1d8] sm:$0xff] %v4766
        %4783 = vst [vmem:[%s566 + $0x1f8] sm:$0xff] %v4767
        %s4784 = sand.u32 %s320, 1
        %s4785 = scalar_lea.sflag [#allocation4], %s4784
        %s4786 = sand.u32 %s320, 1
        %s4787 = smul.addr %s4786, 512
        %s4788 = scalar_lea.vmem [#allocation17], %s4787
        // Predicated region
        $region109: #{tpu_custom_call.1} parent=71 // pred_check
          %p4789 = pneg %p330
        $region110: #{tpu_custom_call.1} parent=71 // pred_check_branch
          %4791 = sbr.rel (%p4789) target = $region112
        $region111: #{tpu_custom_call.1} parent=71 // pred_region
          %s4793 = ssub.s32 8192, 8192
          %4794 = vsyncadd %s4785, %s4793
          %s4795 = smul.addr %s34, 64
          %s4796 = smul.addr %s4795, 128
          %s4797 = scalar_lea.hbm %s13, %s4796
          %s4798 = sshll.u32 %s4788, 4
          %s4799 = int_to_ptr.vmem [resolvable:$true] %s4798
          %4804 = dma.vmem_to_hbm [thread:$0]  %s4799, 8192, %s4797, %s4785, 512, 512, 32
        $region112: #{tpu_custom_call.1} parent=71 // pred_fallthru
          _
      $region72: #{tpu_custom_call.1} parent=5 // pred_fallthru
        _
      %p4805 = scmp.le.s32.totalorder 2, %s29
      // Predicated region
      $region113: #{tpu_custom_call.1} parent=5 // pred_check
        %p4806 = pneg %p4805
      $region114: #{tpu_custom_call.1} parent=5 // pred_check_branch
        %4808 = sbr.rel (%p4806) target = $region116
      $region115: #{tpu_custom_call.1} parent=5 // pred_region
        %s4809 = ssub.s32 %s29, 2
        // Predicated region
        $region117: #{tpu_custom_call.1} parent=115 // pred_check
          %p4810 = pneg %p336
        $region118: #{tpu_custom_call.1} parent=115 // pred_check_branch
          %4812 = sbr.rel (%p4810) target = $region120
        $region119: #{tpu_custom_call.1} parent=115 // pred_region
          %s4813 = sand.u32 %s321, 1
          %s4814 = scalar_lea.sflag [#allocation4], %s4813
          %s4815 = sand.u32 %s321, 1
          %s4816 = smul.addr %s4815, 512
          %s4817 = scalar_lea.vmem [#allocation17], %s4816
          %4818 = dma.done %s4814, 8192
        $region120: #{tpu_custom_call.1} parent=115 // pred_fallthru
          _
      $region116: #{tpu_custom_call.1} parent=5 // pred_fallthru
        _
    $region6: #{tpu_custom_call.1} parent=1 // loop_footer
      %s33 = sadd.s32 1, %s29
    $region7: #{tpu_custom_call.1} parent=1 // loop_footer_branch
      %28 = sbr.rel target = $region3
    $region8: #{tpu_custom_call.1} parent=1 // loop_exit
      _
    %4819 = vsyncpa [#allocation3], 1
    %s4820 = scalar_lea.sflag [#allocation3], 1
    %4821 = vsyncpa %s4820, 1
    %4822 = vsyncpa [#allocation6], 1
    %4823 = vsyncpa [#allocation9], 1
    %4824 = vsyncpa [#allocation12], 1
    %4825 = vsyncpa [#allocation15], 1
    %4826 = vsyncpa [#allocation4], 1
    %s4827 = scalar_lea.sflag [#allocation4], 1
    %4828 = vsyncpa %s4827, 1

</llo_original>
